<compile_context>
chip_gen: v7x
topology: tpu7x:2x2x1
jax: 0.10.0
libtpu: 0.0.40
codegen_flags: <defaults>
</compile_context>

<pallas_src>
import functools

import jax
import jax.numpy as jnp
from jax.experimental import pallas as pl
from jax.experimental.pallas import tpu as pltpu


def autopad(k, p=None, d=1):
    """Same as the PyTorch helper: 'same' padding for odd kernels."""
    if d > 1:
        k = d * (k - 1) + 1
    if p is None:
        p = k // 2
    return p


def _pick_th(Ho, Wo, N):
    """Output-row tile TH (divisor of Ho): prefer MXU-friendly M-tiles (TH*Wo multiple of
    256, never < 128 when avoidable) and a grid that splits evenly across 2 TensorCores."""
    best = None
    for t in range(1, Ho + 1):
        if Ho % t:
            continue
        m = t * Wo
        if m > 4096 and t > 1:          # keep the im2col / accumulator VMEM footprint bounded
            continue
        ht = Ho // t
        score = 0
        if m % 256 == 0:
            score += 4
        elif m % 128 == 0:
            score += 2
        if m >= 256:
            score += 2
        elif m >= 128:
            score += 1
        if N * ht >= 2:                 # at least two grid slices (pipelining / megacore)
            score += 1
        if (N * ht) % 2 == 0:           # even split across v7x's two TensorCores
            score += 1
        key = (score, min(m, 2048))     # tie-break: bigger tile (fewer per-step overheads)
        if best is None or key > best[0]:
            best = (key, t)
    return 1 if best is None else best[1]


def _conv_bn_silu_kernel(x_ref, w_ref, bias_ref, o_ref, *, K, S, D, TH, Wo, Cin, TCN):
    # x_ref:    (1, Hp, Wp, Cin)     whole padded image (bf16), resident across inner grid axes
    # w_ref:    (K*K*Cin, TCN)       flat conv weight with BN scale folded in (bf16)
    # bias_ref: (1, TCN)             folded BN bias = beta - mean * scale   (f32)
    # o_ref:    (1, TH, Wo, TCN)     output tile (bf16), lane-dense (TCN % 128 == 0)
    h = pl.program_id(2)
    row_span = (TH - 1) * S + (K - 1) * D + 1
    row0 = pl.multiple_of(h * (TH * S), TH * S)
    xt = x_ref[0, pl.ds(row0, row_span), :, :]                 # (row_span, Wp, Cin)

    # In-kernel im2col: gather the K*K taps along the contraction axis.
    taps = []
    for kh in range(K):
        for kw in range(K):
            taps.append(jax.lax.slice(
                xt,
                (kh * D, kw * D, 0),
                (kh * D + (TH - 1) * S + 1, kw * D + (Wo - 1) * S + 1, Cin),
                (S, S, 1)))                                    # (TH, Wo, Cin)
    im2col = jnp.concatenate(taps, axis=2).reshape(TH * Wo, K * K * Cin)

    # Single MXU matmul per tile (bf16 inputs, f32 accumulation).
    acc = jnp.dot(im2col, w_ref[...], preferred_element_type=jnp.float32)   # (TH*Wo, TCN)

    # Epilogue: bias add + SiLU. exp / approx-reciprocal occupy the EUP slot (VALU stays free
    # for the add and the bf16 cast).
    y = acc + bias_ref[0]
    e = jnp.exp(-y)
    y = y * pl.reciprocal(1.0 + e, approx=True)
    o_ref[0] = y.reshape(TH, Wo, TCN).astype(o_ref.dtype)


def conv_bn_silu(x_nchw, w_oihw, gamma, beta, running_mean, running_var,
                 *, stride=1, dilation=1, eps=1e-5):
    """Forward of `Conv` (conv -> bn -> SiLU), BN in inference mode (scale folded into weights).

    Returns NCHW bf16 activations (channel padding stripped)."""
    N, Cin, H, W = x_nchw.shape
    Cout, Cin_w, K, K2 = w_oihw.shape
    assert Cin_w == Cin and K == K2, "groups=1 only"
    p = autopad(K, None, dilation)
    S, Dd = stride, dilation
    Ho = (H + 2 * p - Dd * (K - 1) - 1) // S + 1
    Wo = (W + 2 * p - Dd * (K - 1) - 1) // S + 1

    Cpad = ((Cout + 127) // 128) * 128                      # lane-dense matmul-N dimension
    TCN = 256 if (Cpad > 256 and Cpad % 256 == 0) else Cpad  # Cout tile (256 matches v6e/v7x MXU)
    CT = Cpad // TCN
    TH = _pick_th(Ho, Wo, N)
    HT = Ho // TH
    Hp, Wp = H + 2 * p, W + 2 * p

    # ---- wrapper glue (plain JAX) ------------------------------------------------------------
    x_nhwc = jnp.transpose(x_nchw, (0, 2, 3, 1)).astype(jnp.bfloat16)
    x_pad = jnp.pad(x_nhwc, ((0, 0), (p, p), (p, p), (0, 0)))

    # Fold BN scale into the conv weight; only the bias survives into the kernel.
    scale = (gamma / jnp.sqrt(running_var + eps)).astype(jnp.float32)
    bias = (beta.astype(jnp.float32) - running_mean.astype(jnp.float32) * scale)
    # (O,I,Kh,Kw) -> (Kh,Kw,I,O) -> flat (Kh*Kw*I, O) -> scale -> pad O to Cpad -> bf16.
    w2d = jnp.transpose(w_oihw, (2, 3, 1, 0)).reshape(K * K * Cin, Cout)
    w2d = (w2d * scale[None, :])
    w2d = jnp.pad(w2d, ((0, 0), (0, Cpad - Cout))).astype(jnp.bfloat16)
    bias_p = jnp.pad(bias, (0, Cpad - Cout)).reshape(1, Cpad)

    # ---- VMEM budget (explicit limit, headroom included) --------------------------------------
    m_pad = ((TH * Wo + 7) // 8) * 8
    k_pad = ((K * K * Cin + 127) // 128) * 128
    img_bytes = 2 * Hp * Wp * Cin * 2                       # worst case double-buffered
    w_bytes = 2 * (K * K * Cin) * TCN * 2
    out_bytes = 2 * TH * Wo * TCN * 2
    tmp_bytes = 2 * m_pad * k_pad * 2 + 4 * m_pad * TCN * 4  # im2col + f32 acc/epilogue temps
    vmem_limit = int(min(max(img_bytes + w_bytes + out_bytes + tmp_bytes + (4 << 20),
                             16 << 20), 100 << 20))

    flops = 2 * N * Ho * Wo * K * K * Cin * Cpad
    cost = pl.CostEstimate(
        flops=flops,
        transcendentals=N * Ho * Wo * Cpad,
        bytes_accessed=int(x_pad.size * 2 + w2d.size * 2 + N * Ho * Wo * Cpad * 2))

    kernel = functools.partial(
        _conv_bn_silu_kernel, K=K, S=S, D=Dd, TH=TH, Wo=Wo, Cin=Cin, TCN=TCN)

    def _spec(shape, imap, single_buffer):
        if single_buffer:
            return pl.BlockSpec(shape, imap, pipeline_mode=pl.Buffered(1))
        return pl.BlockSpec(shape, imap)

    def _run(single_buffer):
        in_specs = [
            # Padded image: index constant along (c, h) -> one buffer is enough.
            _spec((1, Hp, Wp, Cin), lambda n, c, h: (n, 0, 0, 0), single_buffer),
            # Weight slab tile: constant index when CT == 1, streamed otherwise.
            _spec((K * K * Cin, TCN), lambda n, c, h: (0, c), single_buffer and CT == 1),
            _spec((1, TCN), lambda n, c, h: (0, c), single_buffer and CT == 1),
        ]
        return pl.pallas_call(
            kernel,
            out_shape=jax.ShapeDtypeStruct((N, Ho, Wo, Cpad), jnp.bfloat16),
            grid_spec=pltpu.PrefetchScalarGridSpec(
                num_scalar_prefetch=0,
                grid=(N, CT, HT),
                in_specs=in_specs,
                out_specs=pl.BlockSpec((1, TH, Wo, TCN), lambda n, c, h: (n, h, 0, c)),
            ),
            compiler_params=pltpu.CompilerParams(
                dimension_semantics=("parallel", "parallel", "parallel"),
                vmem_limit_bytes=vmem_limit),
            cost_estimate=cost,
        )(x_pad, w2d, bias_p)

    try:
        out = _run(True)
    except Exception:
        # Fallback: default double-buffering if Buffered(1) is rejected by this JAX build.
        out = _run(False)

    # Drop channel padding, back to PyTorch's NCHW convention.
    # TODO(synk): for Cout << 128 a Cout-wide (masked-store) output block avoids the 16x
    #             write amplification; crossover should be measured per layer.
    return jnp.transpose(out[..., :Cout], (0, 3, 1, 2))


if __name__ == "__main__":
    key = jax.random.PRNGKey(0)
    k_x, k_w, k_g, k_b, k_m, k_v = jax.random.split(key, 6)

    # Module config: Conv(c1=4, c2=8, k=3, s=1) -> autopad p=1, g=1, d=1, act=SiLU
    N, C1, H, W = 2, 4, 16, 16
    C2, K, S, D = 8, 3, 1, 1
    eps = 1e-5

    x = jax.random.normal(k_x, (N, C1, H, W), dtype=jnp.float32)          # NCHW input
    w = jax.random.normal(k_w, (C2, C1, K, K), dtype=jnp.float32) * 0.1   # Conv2d weight (OIHW)
    gamma = jax.random.uniform(k_g, (C2,), minval=0.5, maxval=1.5)        # BN weight
    beta = jax.random.normal(k_b, (C2,)) * 0.1                            # BN bias
    r_mean = jax.random.normal(k_m, (C2,)) * 0.1                          # BN running_mean
    r_var = jax.random.uniform(k_v, (C2,), minval=0.5, maxval=1.5)        # BN running_var

    out = conv_bn_silu(x, w, gamma, beta, r_mean, r_var, stride=S, dilation=D, eps=eps)
    out = jax.block_until_ready(out)

    # Reference (plain JAX) with the same folded-BN / bf16-weight math path as the kernel.
    p = autopad(K, None, D)
    scale = gamma / jnp.sqrt(r_var + eps)
    bias = beta - r_mean * scale
    w_folded = (w * scale[:, None, None, None]).astype(jnp.bfloat16)
    conv_ref = jax.lax.conv_general_dilated(
        x.astype(jnp.bfloat16), w_folded, (S, S), [(p, p), (p, p)],
        rhs_dilation=(D, D), dimension_numbers=("NCHW", "OIHW", "NCHW"),
        preferred_element_type=jnp.float32)
    ref = conv_ref + bias[None, :, None, None]
    ref = ref * jax.nn.sigmoid(ref)

    assert out.shape == (N, C2, H, W)
    out_f32 = out.astype(jnp.float32)
    err = float(jnp.max(jnp.abs(out_f32 - ref)))
    assert jnp.allclose(out_f32, ref, atol=3e-2, rtol=3e-2), err
    print("KERNEL_OK")
</pallas_src>

<mosaic_0001>
module attributes {stable_mosaic.version = 11 : i64} {
  func.func @_conv_bn_silu_kernel(%arg0: i32, %arg1: i32, %arg2: i32, %arg3: memref<1x18x18x4xbf16, #tpu.memory_space<vmem>>, %arg4: memref<36x128xbf16, #tpu.memory_space<vmem>>, %arg5: memref<1x128xf32, #tpu.memory_space<vmem>>, %arg6: memref<1x16x16x128xbf16, #tpu.memory_space<vmem>>) attributes {dimension_semantics = [#tpu.dimension_semantics<parallel>, #tpu.dimension_semantics<parallel>, #tpu.dimension_semantics<parallel>], iteration_bounds = array<i64: 2, 1, 1>, scalar_prefetch = 0 : i64, scratch_operands = 0 : i64, tpu.core_type = #tpu.core_type<tc>, window_params = [{pipeline_mode = #tpu.pipeline_mode<synchronous>, transform_indices = @transform_0, window_bounds = array<i64: 1, 18, 18, 4>}, {pipeline_mode = #tpu.pipeline_mode<synchronous>, transform_indices = @transform_1, window_bounds = array<i64: 36, 128>}, {pipeline_mode = #tpu.pipeline_mode<synchronous>, transform_indices = @transform_2, window_bounds = array<i64: 1, 128>}, {transform_indices = @transform_3, window_bounds = array<i64: 1, 16, 16, 128>}]} {
    %c16_i32 = arith.constant 16 : i32
    %0 = arith.muli %arg2, %c16_i32 : i32
    %1 = tpu.assume_multiple %0, 16 : i32
    %c0 = arith.constant 0 : index
    %2 = arith.index_cast %1 : i32 to index
    %c0_0 = arith.constant 0 : index
    %c0_1 = arith.constant 0 : index
    %3 = vector.load %arg3[%c0, %2, %c0_0, %c0_1] : memref<1x18x18x4xbf16, #tpu.memory_space<vmem>>, vector<1x18x18x4xbf16>
    %4 = vector.shape_cast %3 : vector<1x18x18x4xbf16> to vector<18x18x4xbf16>
    %5 = vector.extract_strided_slice %4 {offsets = [0, 0, 0], sizes = [16, 16, 4], strides = [1, 1, 1]} : vector<18x18x4xbf16> to vector<16x16x4xbf16>
    %6 = vector.extract_strided_slice %4 {offsets = [0, 1, 0], sizes = [16, 16, 4], strides = [1, 1, 1]} : vector<18x18x4xbf16> to vector<16x16x4xbf16>
    %7 = vector.extract_strided_slice %4 {offsets = [0, 2, 0], sizes = [16, 16, 4], strides = [1, 1, 1]} : vector<18x18x4xbf16> to vector<16x16x4xbf16>
    %8 = vector.extract_strided_slice %4 {offsets = [1, 0, 0], sizes = [16, 16, 4], strides = [1, 1, 1]} : vector<18x18x4xbf16> to vector<16x16x4xbf16>
    %9 = vector.extract_strided_slice %4 {offsets = [1, 1, 0], sizes = [16, 16, 4], strides = [1, 1, 1]} : vector<18x18x4xbf16> to vector<16x16x4xbf16>
    %10 = vector.extract_strided_slice %4 {offsets = [1, 2, 0], sizes = [16, 16, 4], strides = [1, 1, 1]} : vector<18x18x4xbf16> to vector<16x16x4xbf16>
    %11 = vector.extract_strided_slice %4 {offsets = [2, 0, 0], sizes = [16, 16, 4], strides = [1, 1, 1]} : vector<18x18x4xbf16> to vector<16x16x4xbf16>
    %12 = vector.extract_strided_slice %4 {offsets = [2, 1, 0], sizes = [16, 16, 4], strides = [1, 1, 1]} : vector<18x18x4xbf16> to vector<16x16x4xbf16>
    %13 = vector.extract_strided_slice %4 {offsets = [2, 2, 0], sizes = [16, 16, 4], strides = [1, 1, 1]} : vector<18x18x4xbf16> to vector<16x16x4xbf16>
    %14 = tpu.concatenate %5, %6, %7, %8, %9, %10, %11, %12, %13 in 2 : vector<16x16x4xbf16>, vector<16x16x4xbf16>, vector<16x16x4xbf16>, vector<16x16x4xbf16>, vector<16x16x4xbf16>, vector<16x16x4xbf16>, vector<16x16x4xbf16>, vector<16x16x4xbf16>, vector<16x16x4xbf16> -> vector<16x16x36xbf16>
    %15 = vector.shape_cast %14 : vector<16x16x36xbf16> to vector<256x36xbf16>
    %c0_2 = arith.constant 0 : index
    %c0_3 = arith.constant 0 : index
    %16 = vector.load %arg4[%c0_2, %c0_3] : memref<36x128xbf16, #tpu.memory_space<vmem>>, vector<36x128xbf16>
    %cst = arith.constant dense<0.000000e+00> : vector<256x128xf32>
    %17 = tpu.matmul %15, %16, %cst {dimension_numbers = #tpu.dot_dimension_numbers<[1], [0], [0], [1], [0, 0, 1, 1], [], []>} : vector<256x36xbf16>, vector<36x128xbf16>, vector<256x128xf32> -> vector<256x128xf32>
    %c0_4 = arith.constant 0 : index
    %c0_5 = arith.constant 0 : index
    %18 = vector.load %arg5[%c0_4, %c0_5] : memref<1x128xf32, #tpu.memory_space<vmem>>, vector<1x128xf32>
    %19 = vector.shape_cast %18 : vector<1x128xf32> to vector<128xf32>
    %20 = vector.shape_cast %19 : vector<128xf32> to vector<1x128xf32>
    %21 = vector.broadcast %20 : vector<1x128xf32> to vector<256x128xf32>
    %22 = arith.addf %17, %21 : vector<256x128xf32>
    %cst_6 = arith.constant 0.000000e+00 : f32
    %23 = vector.broadcast %cst_6 : f32 to vector<256x128xf32>
    %24 = arith.subf %23, %22 : vector<256x128xf32>
    %25 = math.exp %24 : vector<256x128xf32>
    %cst_7 = arith.constant 1.000000e+00 : f32
    %26 = vector.broadcast %cst_7 : f32 to vector<256x128xf32>
    %27 = arith.addf %26, %25 : vector<256x128xf32>
    %28 = tpu.reciprocal %27 {approx = true} : vector<256x128xf32> -> vector<256x128xf32>
    %29 = arith.mulf %22, %28 : vector<256x128xf32>
    %30 = vector.shape_cast %29 : vector<256x128xf32> to vector<16x16x128xf32>
    %31 = arith.truncf %30 : vector<16x16x128xf32> to vector<16x16x128xbf16>
    %c0_8 = arith.constant 0 : index
    %c0_9 = arith.constant 0 : index
    %c0_10 = arith.constant 0 : index
    %c0_11 = arith.constant 0 : index
    %32 = vector.load %arg6[%c0_8, %c0_9, %c0_10, %c0_11] : memref<1x16x16x128xbf16, #tpu.memory_space<vmem>>, vector<1x16x16x128xbf16>
    %33 = vector.shape_cast %32 : vector<1x16x16x128xbf16> to vector<16x16x128xbf16>
    %34 = vector.shape_cast %31 : vector<16x16x128xbf16> to vector<1x16x16x128xbf16>
    tpu.vector_store %arg6[%c0_8, %c0_9, %c0_10, %c0_11], %34 {strides = array<i32>} : memref<1x16x16x128xbf16, #tpu.memory_space<vmem>>, vector<1x16x16x128xbf16>,
    return
  }
  func.func @transform_0(%arg0: i32, %arg1: i32, %arg2: i32) -> (i32, i32, i32, i32) {
    %c0_i32 = arith.constant 0 : i32
    %c0_i32_0 = arith.constant 0 : i32
    %c0_i32_1 = arith.constant 0 : i32
    %c0_i32_2 = arith.constant 0 : i32
    return %arg0, %c0_i32, %c0_i32_0, %c0_i32_1 : i32, i32, i32, i32
  }
  func.func @transform_1(%arg0: i32, %arg1: i32, %arg2: i32) -> (i32, i32) {
    %c0_i32 = arith.constant 0 : i32
    %c0_i32_0 = arith.constant 0 : i32
    return %c0_i32, %arg1 : i32, i32
  }
  func.func @transform_2(%arg0: i32, %arg1: i32, %arg2: i32) -> (i32, i32) {
    %c0_i32 = arith.constant 0 : i32
    %c0_i32_0 = arith.constant 0 : i32
    return %c0_i32, %arg1 : i32, i32
  }
  func.func @transform_3(%arg0: i32, %arg1: i32, %arg2: i32) -> (i32, i32, i32, i32) {
    %c0_i32 = arith.constant 0 : i32
    %c0_i32_0 = arith.constant 0 : i32
    return %arg0, %arg2, %c0_i32, %arg1 : i32, i32, i32, i32
  }
}

module attributes {stable_mosaic.version = 11 : i64} {
  func.func @_conv_bn_silu_kernel(%arg0: i32, %arg1: i32, %arg2: i32, %arg3: memref<1x18x18x4xbf16, #tpu.memory_space<vmem>>, %arg4: memref<36x128xbf16, #tpu.memory_space<vmem>>, %arg5: memref<1x128xf32, #tpu.memory_space<vmem>>, %arg6: memref<1x16x16x128xbf16, #tpu.memory_space<vmem>>) attributes {dimension_semantics = [#tpu.dimension_semantics<parallel>, #tpu.dimension_semantics<parallel>, #tpu.dimension_semantics<parallel>], iteration_bounds = array<i64: 2, 1, 1>, scalar_prefetch = 0 : i64, scratch_operands = 0 : i64, tpu.core_type = #tpu.core_type<tc>, window_params = [{transform_indices = @transform_0, window_bounds = array<i64: 1, 18, 18, 4>}, {transform_indices = @transform_1, window_bounds = array<i64: 36, 128>}, {transform_indices = @transform_2, window_bounds = array<i64: 1, 128>}, {transform_indices = @transform_3, window_bounds = array<i64: 1, 16, 16, 128>}]} {
    %c16_i32 = arith.constant 16 : i32
    %0 = arith.muli %arg2, %c16_i32 : i32
    %1 = tpu.assume_multiple %0, 16 : i32
    %c0 = arith.constant 0 : index
    %2 = arith.index_cast %1 : i32 to index
    %c0_0 = arith.constant 0 : index
    %c0_1 = arith.constant 0 : index
    %3 = vector.load %arg3[%c0, %2, %c0_0, %c0_1] : memref<1x18x18x4xbf16, #tpu.memory_space<vmem>>, vector<1x18x18x4xbf16>
    %4 = vector.shape_cast %3 : vector<1x18x18x4xbf16> to vector<18x18x4xbf16>
    %5 = vector.extract_strided_slice %4 {offsets = [0, 0, 0], sizes = [16, 16, 4], strides = [1, 1, 1]} : vector<18x18x4xbf16> to vector<16x16x4xbf16>
    %6 = vector.extract_strided_slice %4 {offsets = [0, 1, 0], sizes = [16, 16, 4], strides = [1, 1, 1]} : vector<18x18x4xbf16> to vector<16x16x4xbf16>
    %7 = vector.extract_strided_slice %4 {offsets = [0, 2, 0], sizes = [16, 16, 4], strides = [1, 1, 1]} : vector<18x18x4xbf16> to vector<16x16x4xbf16>
    %8 = vector.extract_strided_slice %4 {offsets = [1, 0, 0], sizes = [16, 16, 4], strides = [1, 1, 1]} : vector<18x18x4xbf16> to vector<16x16x4xbf16>
    %9 = vector.extract_strided_slice %4 {offsets = [1, 1, 0], sizes = [16, 16, 4], strides = [1, 1, 1]} : vector<18x18x4xbf16> to vector<16x16x4xbf16>
    %10 = vector.extract_strided_slice %4 {offsets = [1, 2, 0], sizes = [16, 16, 4], strides = [1, 1, 1]} : vector<18x18x4xbf16> to vector<16x16x4xbf16>
    %11 = vector.extract_strided_slice %4 {offsets = [2, 0, 0], sizes = [16, 16, 4], strides = [1, 1, 1]} : vector<18x18x4xbf16> to vector<16x16x4xbf16>
    %12 = vector.extract_strided_slice %4 {offsets = [2, 1, 0], sizes = [16, 16, 4], strides = [1, 1, 1]} : vector<18x18x4xbf16> to vector<16x16x4xbf16>
    %13 = vector.extract_strided_slice %4 {offsets = [2, 2, 0], sizes = [16, 16, 4], strides = [1, 1, 1]} : vector<18x18x4xbf16> to vector<16x16x4xbf16>
    %14 = tpu.concatenate %5, %6, %7, %8, %9, %10, %11, %12, %13 in 2 : vector<16x16x4xbf16>, vector<16x16x4xbf16>, vector<16x16x4xbf16>, vector<16x16x4xbf16>, vector<16x16x4xbf16>, vector<16x16x4xbf16>, vector<16x16x4xbf16>, vector<16x16x4xbf16>, vector<16x16x4xbf16> -> vector<16x16x36xbf16>
    %15 = vector.shape_cast %14 : vector<16x16x36xbf16> to vector<256x36xbf16>
    %c0_2 = arith.constant 0 : index
    %c0_3 = arith.constant 0 : index
    %16 = vector.load %arg4[%c0_2, %c0_3] : memref<36x128xbf16, #tpu.memory_space<vmem>>, vector<36x128xbf16>
    %cst = arith.constant dense<0.000000e+00> : vector<256x128xf32>
    %17 = tpu.matmul %15, %16, %cst {dimension_numbers = #tpu.dot_dimension_numbers<[1], [0], [0], [1], [0, 0, 1, 1], [], []>} : vector<256x36xbf16>, vector<36x128xbf16>, vector<256x128xf32> -> vector<256x128xf32>
    %c0_4 = arith.constant 0 : index
    %c0_5 = arith.constant 0 : index
    %18 = vector.load %arg5[%c0_4, %c0_5] : memref<1x128xf32, #tpu.memory_space<vmem>>, vector<1x128xf32>
    %19 = vector.shape_cast %18 : vector<1x128xf32> to vector<128xf32>
    %20 = vector.shape_cast %19 : vector<128xf32> to vector<1x128xf32>
    %21 = vector.broadcast %20 : vector<1x128xf32> to vector<256x128xf32>
    %22 = arith.addf %17, %21 : vector<256x128xf32>
    %cst_6 = arith.constant 0.000000e+00 : f32
    %23 = vector.broadcast %cst_6 : f32 to vector<256x128xf32>
    %24 = arith.subf %23, %22 : vector<256x128xf32>
    %25 = math.exp %24 : vector<256x128xf32>
    %cst_7 = arith.constant 1.000000e+00 : f32
    %26 = vector.broadcast %cst_7 : f32 to vector<256x128xf32>
    %27 = arith.addf %26, %25 : vector<256x128xf32>
    %28 = tpu.reciprocal %27 {approx = true} : vector<256x128xf32> -> vector<256x128xf32>
    %29 = arith.mulf %22, %28 : vector<256x128xf32>
    %30 = vector.shape_cast %29 : vector<256x128xf32> to vector<16x16x128xf32>
    %31 = arith.truncf %30 : vector<16x16x128xf32> to vector<16x16x128xbf16>
    %c0_8 = arith.constant 0 : index
    %c0_9 = arith.constant 0 : index
    %c0_10 = arith.constant 0 : index
    %c0_11 = arith.constant 0 : index
    %32 = vector.load %arg6[%c0_8, %c0_9, %c0_10, %c0_11] : memref<1x16x16x128xbf16, #tpu.memory_space<vmem>>, vector<1x16x16x128xbf16>
    %33 = vector.shape_cast %32 : vector<1x16x16x128xbf16> to vector<16x16x128xbf16>
    %34 = vector.shape_cast %31 : vector<16x16x128xbf16> to vector<1x16x16x128xbf16>
    tpu.vector_store %arg6[%c0_8, %c0_9, %c0_10, %c0_11], %34 {strides = array<i32>} : memref<1x16x16x128xbf16, #tpu.memory_space<vmem>>, vector<1x16x16x128xbf16>,
    return
  }
  func.func @transform_0(%arg0: i32, %arg1: i32, %arg2: i32) -> (i32, i32, i32, i32) {
    %c0_i32 = arith.constant 0 : i32
    %c0_i32_0 = arith.constant 0 : i32
    %c0_i32_1 = arith.constant 0 : i32
    %c0_i32_2 = arith.constant 0 : i32
    return %arg0, %c0_i32, %c0_i32_0, %c0_i32_1 : i32, i32, i32, i32
  }
  func.func @transform_1(%arg0: i32, %arg1: i32, %arg2: i32) -> (i32, i32) {
    %c0_i32 = arith.constant 0 : i32
    %c0_i32_0 = arith.constant 0 : i32
    return %c0_i32, %arg1 : i32, i32
  }
  func.func @transform_2(%arg0: i32, %arg1: i32, %arg2: i32) -> (i32, i32) {
    %c0_i32 = arith.constant 0 : i32
    %c0_i32_0 = arith.constant 0 : i32
    return %c0_i32, %arg1 : i32, i32
  }
  func.func @transform_3(%arg0: i32, %arg1: i32, %arg2: i32) -> (i32, i32, i32, i32) {
    %c0_i32 = arith.constant 0 : i32
    %c0_i32_0 = arith.constant 0 : i32
    return %arg0, %arg2, %c0_i32, %arg1 : i32, i32, i32, i32
  }
}

</mosaic_0001>

<llo_original>
// kernel: tpu_custom_call.1
$region0: #{tpu_custom_call.1}
  #allocation0 [shape = 'u32[]', space=smem, size = 0x4, offset = 0x4, fixed_abs, tag = 'smem constant byte address 0x4 - core index']
  #allocation1 [shape = 'u32[144,128]{1,0:T(1,128)}', space=vmem, size = 0x12000, scoped, tag = 'internal scratch']
  %s0 = inlined_call_operand.vmem [shape: bf16[2,18,18,4], index: 0, kind: input, shape index: {}]
  %s1 = inlined_call_operand.vmem [shape: bf16[36,128], index: 1, kind: input, shape index: {}]
  %s2 = inlined_call_operand.vmem [shape: f32[1,128], index: 2, kind: input, shape index: {}]
  %s3 = inlined_call_operand.hbm [shape: bf16[2,16,16,128], index: 3, kind: output, shape index: {}]
  %s4 = sld [smem:[#allocation0]]
  $region45: #{tpu_custom_call.1} parent=0
    _
  %s6 = ssub.s32 1, %s4
  %s7 = scalar_select 0, %s6, %s4
  $region1: #{tpu_custom_call.1} parent=0
    #allocation2 [shape = 'u8[131072]{0}', space=vmem, size = 0x20000, scoped, tag = 'output window, operand 0']
    #allocation3 [shape = 's32[2]{0}', space=sflag, size = 0x8, scoped, tag = 'scoped memory for tpu_custom_call.1']
    %8 = vsyncpa [#allocation3], 0
    %s9 = scalar_lea.sflag [#allocation3], 1
    %10 = vsyncpa %s9, 0
    loop: start=0, step=1, limit=4
    $region2: #{tpu_custom_call.1} parent=1 // loop_pre_header
      _
    $region3: #{tpu_custom_call.1} parent=1 // loop_header
      %s12 = sphi 0, %s16
      %p13 = scmp.ge.s32.totalorder %s12, 4
      %s19 = sphi 0, %s38
      %s20 = sphi 0, %s34
      %s21 = sphi 0, %s30
      %s22 = sphi 0, %s19
      %s23 = sphi 0, %s20
      %s24 = sphi 0, %s21
      %s25 = sphi 0, %s22
      %s26 = sphi 0, %s23
      %s27 = sphi 0, %s24
      %s41 = sphi 0, %s43
      %s44 = sphi 0, %s41
      %s45 = sphi 0, %s44
      %s61 = sphi 0, %s45
      %s67 = sphi 0, %s69
      %s70 = sphi 0, %s67
      %s71 = sphi 0, %s70
      %s87 = sphi 0, %s71
      %s93 = sphi 0, %s95
      %s96 = sphi 0, %s93
      %s97 = sphi 0, %s96
      %s113 = sphi 0, %s97
      %s123 = sphi 0, %s125
      %s126 = sphi 0, %s123
      %s127 = sphi 0, %s126
      %s143 = sphi 0, %s127
    $region4: #{tpu_custom_call.1} parent=1 // loop_header_branch
      %15 = sbr.rel (%p13) target = $region8
    $region5: #{tpu_custom_call.1} parent=1 // loop_body
      %s17 = ssub.s32 %s12, 1
      %s18 = ssub.s32 %s12, 2
      %s28 = sadd.s32 1, %s21
      %p29 = scmp.ge.s32.totalorder %s28, 1
      %s30 = scalar_select %p29, 0, %s28
      %s31 = sadd.s32 1, %s20
      %s32 = scalar_select %p29, %s31, %s20
      %p33 = scmp.ge.s32.totalorder %s32, 1
      %s34 = scalar_select %p33, 0, %s32
      %s35 = sadd.s32 1, %s19
      %s36 = scalar_select %p33, %s35, %s19
      %p37 = scmp.ge.s32.totalorder %s36, 2
      %s38 = scalar_select %p37, 0, %s36
      %s39 = ssub.s32 %s19, %s38
      %p40 = scmp.eq.s32.totalorder %s39, 0
      %s42 = sadd.s32 %s41, 1
      %s43 = scalar_select %p40, %s41, %s42
      %p46 = pneg %p40
      %p47 = scmp.eq.s32.totalorder %s12, 1
      %p48 = por %p46, %p47
      %p49 = scmp.ne.s32.totalorder %s41, %s44
      %p50 = scmp.eq.s32.totalorder %s12, 0
      %p51 = por %p49, %p50
      %p52 = scmp.ne.s32.totalorder %s41, %s44
      %p53 = scmp.eq.s32.totalorder %s17, 1
      %p54 = por %p52, %p53
      %p55 = scmp.ne.s32.totalorder %s44, %s45
      %p56 = scmp.eq.s32.totalorder %s17, 0
      %p57 = por %p55, %p56
      %p58 = scmp.ne.s32.totalorder %s44, %s45
      %p59 = scmp.eq.s32.totalorder %s18, 1
      %p60 = por %p58, %p59
      %p62 = scmp.ne.s32.totalorder %s45, %s61
      %p63 = scmp.eq.s32.totalorder %s18, 0
      %p64 = por %p62, %p63
      %s65 = ssub.s32 %s20, %s34
      %p66 = scmp.eq.s32.totalorder %s65, 0
      %s68 = sadd.s32 %s67, 1
      %s69 = scalar_select %p66, %s67, %s68
      %p72 = pneg %p66
      %p73 = scmp.eq.s32.totalorder %s12, 1
      %p74 = por %p72, %p73
      %p75 = scmp.ne.s32.totalorder %s67, %s70
      %p76 = scmp.eq.s32.totalorder %s12, 0
      %p77 = por %p75, %p76
      %p78 = scmp.ne.s32.totalorder %s67, %s70
      %p79 = scmp.eq.s32.totalorder %s17, 1
      %p80 = por %p78, %p79
      %p81 = scmp.ne.s32.totalorder %s70, %s71
      %p82 = scmp.eq.s32.totalorder %s17, 0
      %p83 = por %p81, %p82
      %p84 = scmp.ne.s32.totalorder %s70, %s71
      %p85 = scmp.eq.s32.totalorder %s18, 1
      %p86 = por %p84, %p85
      %p88 = scmp.ne.s32.totalorder %s71, %s87
      %p89 = scmp.eq.s32.totalorder %s18, 0
      %p90 = por %p88, %p89
      %s91 = ssub.s32 %s20, %s34
      %p92 = scmp.eq.s32.totalorder %s91, 0
      %s94 = sadd.s32 %s93, 1
      %s95 = scalar_select %p92, %s93, %s94
      %p98 = pneg %p92
      %p99 = scmp.eq.s32.totalorder %s12, 1
      %p100 = por %p98, %p99
      %p101 = scmp.ne.s32.totalorder %s93, %s96
      %p102 = scmp.eq.s32.totalorder %s12, 0
      %p103 = por %p101, %p102
      %p104 = scmp.ne.s32.totalorder %s93, %s96
      %p105 = scmp.eq.s32.totalorder %s17, 1
      %p106 = por %p104, %p105
      %p107 = scmp.ne.s32.totalorder %s96, %s97
      %p108 = scmp.eq.s32.totalorder %s17, 0
      %p109 = por %p107, %p108
      %p110 = scmp.ne.s32.totalorder %s96, %s97
      %p111 = scmp.eq.s32.totalorder %s18, 1
      %p112 = por %p110, %p111
      %p114 = scmp.ne.s32.totalorder %s97, %s113
      %p115 = scmp.eq.s32.totalorder %s18, 0
      %p116 = por %p114, %p115
      %s117 = ssub.s32 %s19, %s38
      %s118 = ssub.s32 %s21, %s30
      %s119 = sor.u32 %s117, %s118
      %s120 = ssub.s32 %s20, %s34
      %s121 = sor.u32 %s119, %s120
      %p122 = scmp.eq.s32.totalorder %s121, 0
      %s124 = sadd.s32 %s123, 1
      %s125 = scalar_select %p122, %s123, %s124
      %p128 = pneg %p122
      %p129 = scmp.eq.s32.totalorder %s12, 1
      %p130 = por %p128, %p129
      %p131 = scmp.ne.s32.totalorder %s123, %s126
      %p132 = scmp.eq.s32.totalorder %s12, 0
      %p133 = por %p131, %p132
      %p134 = scmp.ne.s32.totalorder %s123, %s126
      %p135 = scmp.eq.s32.totalorder %s17, 1
      %p136 = por %p134, %p135
      %p137 = scmp.ne.s32.totalorder %s126, %s127
      %p138 = scmp.eq.s32.totalorder %s17, 0
      %p139 = por %p137, %p138
      %p140 = scmp.ne.s32.totalorder %s126, %s127
      %p141 = scmp.eq.s32.totalorder %s18, 1
      %p142 = por %p140, %p141
      %p144 = scmp.ne.s32.totalorder %s127, %s143
      %p145 = scmp.eq.s32.totalorder %s18, 0
      %p146 = por %p144, %p145
      %p147 = scmp.le.s32.totalorder 1, %s12
      %p148 = scmp.lt.s32.totalorder %s12, 3
      %p149 = pnand %p147, %p148
      %p150 = pneg %p149
      // Predicated region
      $region9: #{tpu_custom_call.1} parent=5 // pred_check
        _
      $region10: #{tpu_custom_call.1} parent=5 // pred_check_branch
        %152 = sbr.rel (%p149) target = $region12
      $region11: #{tpu_custom_call.1} parent=5 // pred_region
        %s153 = ssub.s32 %s12, 1
        // Predicated region
        $region13: #{tpu_custom_call.1} parent=11 // pred_check
          %p154 = pneg %p57
        $region14: #{tpu_custom_call.1} parent=11 // pred_check_branch
          %156 = sbr.rel (%p154) target = $region16
        $region15: #{tpu_custom_call.1} parent=11 // pred_region
          %p157 = scmp.lt.s32.totalorder %s22, 1
          %s158 = scalar_select %p157, %s22, 1
          %s159 = smul.addr %s158, 54
          %s160 = smul.addr %s159, 4
          %s161 = scalar_lea.vmem %s0, %s160
        $region16: #{tpu_custom_call.1} parent=11 // pred_fallthru
          _
        // Predicated region
        $region17: #{tpu_custom_call.1} parent=11 // pred_check
          %p162 = pneg %p83
        $region18: #{tpu_custom_call.1} parent=11 // pred_check_branch
          %164 = sbr.rel (%p162) target = $region20
        $region19: #{tpu_custom_call.1} parent=11 // pred_region
          %p165 = scmp.lt.s32.totalorder %s23, 0
          %s166 = scalar_select %p165, %s23, 0
          %s167 = smul.addr %s166, 4
          %s168 = scalar_lea.vmem %s1, %s167
        $region20: #{tpu_custom_call.1} parent=11 // pred_fallthru
          _
        // Predicated region
        $region21: #{tpu_custom_call.1} parent=11 // pred_check
          %p169 = pneg %p109
        $region22: #{tpu_custom_call.1} parent=11 // pred_check_branch
          %171 = sbr.rel (%p169) target = $region24
        $region23: #{tpu_custom_call.1} parent=11 // pred_region
          %p172 = scmp.lt.s32.totalorder %s23, 0
          %s173 = scalar_select %p172, %s23, 0
          %s174 = scalar_lea.vmem %s2, %s173
        $region24: #{tpu_custom_call.1} parent=11 // pred_fallthru
          _
      $region12: #{tpu_custom_call.1} parent=5 // pred_fallthru
        _
      %p175 = scmp.lt.s32.totalorder %s12, 2
      // Predicated region
      $region25: #{tpu_custom_call.1} parent=5 // pred_check
        %p176 = pneg %p175
      $region26: #{tpu_custom_call.1} parent=5 // pred_check_branch
        %178 = sbr.rel (%p176) target = $region28
      $region27: #{tpu_custom_call.1} parent=5 // pred_region
        _
      $region28: #{tpu_custom_call.1} parent=5 // pred_fallthru
        _
      %p179 = scmp.le.s32.totalorder 1, %s12
      %p180 = scmp.lt.s32.totalorder %s12, 3
      %p181 = pnand %p179, %p180
      %p182 = pneg %p181
      // Predicated region
      $region29: #{tpu_custom_call.1} parent=5 // pred_check
        _
      $region30: #{tpu_custom_call.1} parent=5 // pred_check_branch
        %184 = sbr.rel (%p181) target = $region32
      $region31: #{tpu_custom_call.1} parent=5 // pred_region
        %s185 = ssub.s32 %s12, 1
        %p186 = scmp.lt.s32.totalorder %s22, 1
        %s187 = scalar_select %p186, %s22, 1
        %s188 = smul.addr %s187, 54
        %s189 = smul.addr %s188, 4
        %s190 = scalar_lea.vmem %s0, %s189
        %p191 = pneg %p57
        %p192 = pneg %p54
        %p193 = scmp.lt.s32.totalorder %s23, 0
        %s194 = scalar_select %p193, %s23, 0
        %s195 = smul.addr %s194, 4
        %s196 = scalar_lea.vmem %s1, %s195
        %p197 = pneg %p83
        %p198 = pneg %p80
        %p199 = scmp.lt.s32.totalorder %s23, 0
        %s200 = scalar_select %p199, %s23, 0
        %s201 = scalar_lea.vmem %s2, %s200
        %p202 = pneg %p109
        %p203 = pneg %p106
        %p204 = pneg %p139
        %p205 = pneg %p136
        %s206 = sand.u32 %s126, 1
        %s207 = scalar_lea.sflag [#allocation3], %s206
        %s208 = sand.u32 %s126, 1
        %s209 = smul.addr %s208, 128
        %s210 = scalar_lea.vmem [#allocation2], %s209
        %p211 = scmp.lt.s32.totalorder %s22, 1
        %s212 = scalar_select %p211, %s22, 1
        %s213 = smul.addr %s212, 54
        %s214 = smul.addr %s213, 4
        %s215 = scalar_lea.vmem %s0, %s214
        %p216 = scmp.lt.s32.totalorder %s23, 0
        %s217 = scalar_select %p216, %s23, 0
        %s218 = smul.addr %s217, 4
        %s219 = scalar_lea.vmem %s1, %s218
        %p220 = scmp.lt.s32.totalorder %s23, 0
        %s221 = scalar_select %p220, %s23, 0
        %s222 = scalar_lea.vmem %s2, %s221
        %s223 = smul.u32 16, %s24
        %s225 = smul.u32 %s24, 16
        %s226 = smul.u32 %s225, 3
        %s227 = smul.addr %s226, 4
        %s228 = scalar_lea.vmem %s215, %s227
        %v229 = vld [vmem:[%s228] sm:$0xf]
        %v230 = vld [vmem:[%s228 + $0x4] sm:$0xf]
        %v231 = vld [vmem:[%s228 + $0x8] sm:$0x1]
        %v232 = vld [vmem:[%s228 + $0xc] sm:$0xf]
        %v233 = vld [vmem:[%s228 + $0x10] sm:$0xf]
        %v234 = vld [vmem:[%s228 + $0x14] sm:$0x1]
        %v235 = vld [vmem:[%s228 + $0x18] sm:$0xf]
        %v236 = vld [vmem:[%s228 + $0x1c] sm:$0xf]
        %v237 = vld [vmem:[%s228 + $0x20] sm:$0x1]
        %v238 = vld [vmem:[%s228 + $0x24] sm:$0xf]
        %v239 = vld [vmem:[%s228 + $0x28] sm:$0xf]
        %v240 = vld [vmem:[%s228 + $0x2c] sm:$0x1]
        %v241 = vld [vmem:[%s228 + $0x30] sm:$0xf]
        %v242 = vld [vmem:[%s228 + $0x34] sm:$0xf]
        %v243 = vld [vmem:[%s228 + $0x38] sm:$0x1]
        %v244 = vld [vmem:[%s228 + $0x3c] sm:$0xf]
        %v245 = vld [vmem:[%s228 + $0x40] sm:$0xf]
        %v246 = vld [vmem:[%s228 + $0x44] sm:$0x1]
        %v247 = vld [vmem:[%s228 + $0x48] sm:$0xf]
        %v248 = vld [vmem:[%s228 + $0x4c] sm:$0xf]
        %v249 = vld [vmem:[%s228 + $0x50] sm:$0x1]
        %v250 = vld [vmem:[%s228 + $0x54] sm:$0xf]
        %v251 = vld [vmem:[%s228 + $0x58] sm:$0xf]
        %v252 = vld [vmem:[%s228 + $0x5c] sm:$0x1]
        %v253 = vld [vmem:[%s228 + $0x60] sm:$0xf]
        %v254 = vld [vmem:[%s228 + $0x64] sm:$0xf]
        %v255 = vld [vmem:[%s228 + $0x68] sm:$0x1]
        %v256 = vld [vmem:[%s228 + $0x6c] sm:$0xf]
        %v257 = vld [vmem:[%s228 + $0x70] sm:$0xf]
        %v258 = vld [vmem:[%s228 + $0x74] sm:$0x1]
        %v259 = vld [vmem:[%s228 + $0x78] sm:$0xf]
        %v260 = vld [vmem:[%s228 + $0x7c] sm:$0xf]
        %v261 = vld [vmem:[%s228 + $0x80] sm:$0x1]
        %v262 = vld [vmem:[%s228 + $0x84] sm:$0xf]
        %v263 = vld [vmem:[%s228 + $0x88] sm:$0xf]
        %v264 = vld [vmem:[%s228 + $0x8c] sm:$0x1]
        %v265 = vld [vmem:[%s228 + $0x90] sm:$0xf]
        %v266 = vld [vmem:[%s228 + $0x94] sm:$0xf]
        %v267 = vld [vmem:[%s228 + $0x98] sm:$0x1]
        %v268 = vld [vmem:[%s228 + $0x9c] sm:$0xf]
        %v269 = vld [vmem:[%s228 + $0xa0] sm:$0xf]
        %v270 = vld [vmem:[%s228 + $0xa4] sm:$0x1]
        %v271 = vld [vmem:[%s228 + $0xa8] sm:$0xf]
        %v272 = vld [vmem:[%s228 + $0xac] sm:$0xf]
        %v273 = vld [vmem:[%s228 + $0xb0] sm:$0x1]
        %v274 = vld [vmem:[%s228 + $0xb4] sm:$0xf]
        %v275 = vld [vmem:[%s228 + $0xb8] sm:$0xf]
        %v276 = vld [vmem:[%s228 + $0xbc] sm:$0x1]
        %v277 = vld [vmem:[%s228 + $0xc0] sm:$0xf]
        %v278 = vld [vmem:[%s228 + $0xc4] sm:$0xf]
        %v279 = vld [vmem:[%s228 + $0xc8] sm:$0x1]
        %v280 = vld [vmem:[%s228 + $0xcc] sm:$0xf]
        %v281 = vld [vmem:[%s228 + $0xd0] sm:$0xf]
        %v282 = vld [vmem:[%s228 + $0xd4] sm:$0x1]
        %v315 = vunpack.c.l.b16 %v229
        %v316 = vunpack.c.l.b16 %v230
        %v317 = vunpack.c.l.b16 %v232
        %v318 = vunpack.c.l.b16 %v233
        %v319 = vunpack.c.l.b16 %v235
        %v320 = vunpack.c.l.b16 %v236
        %v321 = vunpack.c.l.b16 %v238
        %v322 = vunpack.c.l.b16 %v239
        %v323 = vunpack.c.l.b16 %v241
        %v324 = vunpack.c.l.b16 %v242
        %v325 = vunpack.c.l.b16 %v244
        %v326 = vunpack.c.l.b16 %v245
        %v327 = vunpack.c.l.b16 %v247
        %v328 = vunpack.c.l.b16 %v248
        %v329 = vunpack.c.l.b16 %v250
        %v330 = vunpack.c.l.b16 %v251
        %v331 = vunpack.c.l.b16 %v253
        %v332 = vunpack.c.l.b16 %v254
        %v333 = vunpack.c.l.b16 %v256
        %v334 = vunpack.c.l.b16 %v257
        %v335 = vunpack.c.l.b16 %v259
        %v336 = vunpack.c.l.b16 %v260
        %v337 = vunpack.c.l.b16 %v262
        %v338 = vunpack.c.l.b16 %v263
        %v339 = vunpack.c.l.b16 %v265
        %v340 = vunpack.c.l.b16 %v266
        %v341 = vunpack.c.l.b16 %v268
        %v342 = vunpack.c.l.b16 %v269
        %v343 = vunpack.c.l.b16 %v271
        %v344 = vunpack.c.l.b16 %v272
        %v345 = vunpack.c.l.b16 %v274
        %v346 = vunpack.c.l.b16 %v275
        %v347 = vpack.c.b16 %v316, %v315
        %v348 = vpack.c.b16 %v318, %v317
        %v349 = vpack.c.b16 %v320, %v319
        %v350 = vpack.c.b16 %v322, %v321
        %v351 = vpack.c.b16 %v324, %v323
        %v352 = vpack.c.b16 %v326, %v325
        %v353 = vpack.c.b16 %v328, %v327
        %v354 = vpack.c.b16 %v330, %v329
        %v355 = vpack.c.b16 %v332, %v331
        %v356 = vpack.c.b16 %v334, %v333
        %v357 = vpack.c.b16 %v336, %v335
        %v358 = vpack.c.b16 %v338, %v337
        %v359 = vpack.c.b16 %v340, %v339
        %v360 = vpack.c.b16 %v342, %v341
        %v361 = vpack.c.b16 %v344, %v343
        %v362 = vpack.c.b16 %v346, %v345
        %v379 = vunpack.c.l.b16 %v231
        %v380 = vunpack.c.l.b16 %v234
        %v381 = vunpack.c.l.b16 %v237
        %v382 = vunpack.c.l.b16 %v240
        %v383 = vunpack.c.l.b16 %v243
        %v384 = vunpack.c.l.b16 %v246
        %v385 = vunpack.c.l.b16 %v249
        %v386 = vunpack.c.l.b16 %v252
        %v387 = vunpack.c.l.b16 %v255
        %v388 = vunpack.c.l.b16 %v258
        %v389 = vunpack.c.l.b16 %v261
        %v390 = vunpack.c.l.b16 %v264
        %v391 = vunpack.c.l.b16 %v267
        %v392 = vunpack.c.l.b16 %v270
        %v393 = vunpack.c.l.b16 %v273
        %v394 = vunpack.c.l.b16 %v276
        %v395 = vpack.c.b16 %v379, %v379
        %v396 = vpack.c.b16 %v380, %v380
        %v397 = vpack.c.b16 %v381, %v381
        %v398 = vpack.c.b16 %v382, %v382
        %v399 = vpack.c.b16 %v383, %v383
        %v400 = vpack.c.b16 %v384, %v384
        %v401 = vpack.c.b16 %v385, %v385
        %v402 = vpack.c.b16 %v386, %v386
        %v403 = vpack.c.b16 %v387, %v387
        %v404 = vpack.c.b16 %v388, %v388
        %v405 = vpack.c.b16 %v389, %v389
        %v406 = vpack.c.b16 %v390, %v390
        %v407 = vpack.c.b16 %v391, %v391
        %v408 = vpack.c.b16 %v392, %v392
        %v409 = vpack.c.b16 %v393, %v393
        %v410 = vpack.c.b16 %v394, %v394
        %vm411 = vsmask.f32 7424
        %v413 = vshrl.u32 %v347, 16
        %v415 = vshll.u32 %v347, 16
        %v417 = vrot.slane %v415, 1
        %v418 = vor.u32 %v413, %v417
        %v420 = vshll.u32 %v395, 16
        %v422 = vrot.slane %v420, 1
        %v423 = vsel %vm411, %v418, %v422
        %v425 = vshrl.u32 %v348, 16
        %v427 = vshll.u32 %v348, 16
        %v429 = vrot.slane %v427, 1
        %v430 = vor.u32 %v425, %v429
        %v432 = vshll.u32 %v396, 16
        %v434 = vrot.slane %v432, 1
        %v435 = vsel %vm411, %v430, %v434
        %v437 = vshrl.u32 %v349, 16
        %v439 = vshll.u32 %v349, 16
        %v441 = vrot.slane %v439, 1
        %v442 = vor.u32 %v437, %v441
        %v444 = vshll.u32 %v397, 16
        %v446 = vrot.slane %v444, 1
        %v447 = vsel %vm411, %v442, %v446
        %v449 = vshrl.u32 %v350, 16
        %v451 = vshll.u32 %v350, 16
        %v453 = vrot.slane %v451, 1
        %v454 = vor.u32 %v449, %v453
        %v456 = vshll.u32 %v398, 16
        %v458 = vrot.slane %v456, 1
        %v459 = vsel %vm411, %v454, %v458
        %v461 = vshrl.u32 %v351, 16
        %v463 = vshll.u32 %v351, 16
        %v465 = vrot.slane %v463, 1
        %v466 = vor.u32 %v461, %v465
        %v468 = vshll.u32 %v399, 16
        %v470 = vrot.slane %v468, 1
        %v471 = vsel %vm411, %v466, %v470
        %v473 = vshrl.u32 %v352, 16
        %v475 = vshll.u32 %v352, 16
        %v477 = vrot.slane %v475, 1
        %v478 = vor.u32 %v473, %v477
        %v480 = vshll.u32 %v400, 16
        %v482 = vrot.slane %v480, 1
        %v483 = vsel %vm411, %v478, %v482
        %v485 = vshrl.u32 %v353, 16
        %v487 = vshll.u32 %v353, 16
        %v489 = vrot.slane %v487, 1
        %v490 = vor.u32 %v485, %v489
        %v492 = vshll.u32 %v401, 16
        %v494 = vrot.slane %v492, 1
        %v495 = vsel %vm411, %v490, %v494
        %v497 = vshrl.u32 %v354, 16
        %v499 = vshll.u32 %v354, 16
        %v501 = vrot.slane %v499, 1
        %v502 = vor.u32 %v497, %v501
        %v504 = vshll.u32 %v402, 16
        %v506 = vrot.slane %v504, 1
        %v507 = vsel %vm411, %v502, %v506
        %v509 = vshrl.u32 %v355, 16
        %v511 = vshll.u32 %v355, 16
        %v513 = vrot.slane %v511, 1
        %v514 = vor.u32 %v509, %v513
        %v516 = vshll.u32 %v403, 16
        %v518 = vrot.slane %v516, 1
        %v519 = vsel %vm411, %v514, %v518
        %v521 = vshrl.u32 %v356, 16
        %v523 = vshll.u32 %v356, 16
        %v525 = vrot.slane %v523, 1
        %v526 = vor.u32 %v521, %v525
        %v528 = vshll.u32 %v404, 16
        %v530 = vrot.slane %v528, 1
        %v531 = vsel %vm411, %v526, %v530
        %v533 = vshrl.u32 %v357, 16
        %v535 = vshll.u32 %v357, 16
        %v537 = vrot.slane %v535, 1
        %v538 = vor.u32 %v533, %v537
        %v540 = vshll.u32 %v405, 16
        %v542 = vrot.slane %v540, 1
        %v543 = vsel %vm411, %v538, %v542
        %v545 = vshrl.u32 %v358, 16
        %v547 = vshll.u32 %v358, 16
        %v549 = vrot.slane %v547, 1
        %v550 = vor.u32 %v545, %v549
        %v552 = vshll.u32 %v406, 16
        %v554 = vrot.slane %v552, 1
        %v555 = vsel %vm411, %v550, %v554
        %v557 = vshrl.u32 %v359, 16
        %v559 = vshll.u32 %v359, 16
        %v561 = vrot.slane %v559, 1
        %v562 = vor.u32 %v557, %v561
        %v564 = vshll.u32 %v407, 16
        %v566 = vrot.slane %v564, 1
        %v567 = vsel %vm411, %v562, %v566
        %v569 = vshrl.u32 %v360, 16
        %v571 = vshll.u32 %v360, 16
        %v573 = vrot.slane %v571, 1
        %v574 = vor.u32 %v569, %v573
        %v576 = vshll.u32 %v408, 16
        %v578 = vrot.slane %v576, 1
        %v579 = vsel %vm411, %v574, %v578
        %v581 = vshrl.u32 %v361, 16
        %v583 = vshll.u32 %v361, 16
        %v585 = vrot.slane %v583, 1
        %v586 = vor.u32 %v581, %v585
        %v588 = vshll.u32 %v409, 16
        %v590 = vrot.slane %v588, 1
        %v591 = vsel %vm411, %v586, %v590
        %v593 = vshrl.u32 %v362, 16
        %v595 = vshll.u32 %v362, 16
        %v597 = vrot.slane %v595, 1
        %v598 = vor.u32 %v593, %v597
        %v600 = vshll.u32 %v410, 16
        %v602 = vrot.slane %v600, 1
        %v603 = vsel %vm411, %v598, %v602
        %604 = vrot.lane.b32.xlu0 %v423, 4
        %v605 = vpop.permute.xlu0 %604
        %606 = vrot.lane.b32.xlu0 %v435, 4
        %v607 = vpop.permute.xlu0 %606
        %608 = vrot.lane.b32.xlu0 %v447, 4
        %v609 = vpop.permute.xlu0 %608
        %610 = vrot.lane.b32.xlu0 %v459, 4
        %v611 = vpop.permute.xlu0 %610
        %612 = vrot.lane.b32.xlu0 %v471, 4
        %v613 = vpop.permute.xlu0 %612
        %614 = vrot.lane.b32.xlu0 %v483, 4
        %v615 = vpop.permute.xlu0 %614
        %616 = vrot.lane.b32.xlu0 %v495, 4
        %v617 = vpop.permute.xlu0 %616
        %618 = vrot.lane.b32.xlu0 %v507, 4
        %v619 = vpop.permute.xlu0 %618
        %620 = vrot.lane.b32.xlu0 %v519, 4
        %v621 = vpop.permute.xlu0 %620
        %622 = vrot.lane.b32.xlu0 %v531, 4
        %v623 = vpop.permute.xlu0 %622
        %624 = vrot.lane.b32.xlu0 %v543, 4
        %v625 = vpop.permute.xlu0 %624
        %626 = vrot.lane.b32.xlu0 %v555, 4
        %v627 = vpop.permute.xlu0 %626
        %628 = vrot.lane.b32.xlu0 %v567, 4
        %v629 = vpop.permute.xlu0 %628
        %630 = vrot.lane.b32.xlu0 %v579, 4
        %v631 = vpop.permute.xlu0 %630
        %632 = vrot.lane.b32.xlu0 %v591, 4
        %v633 = vpop.permute.xlu0 %632
        %634 = vrot.lane.b32.xlu0 %v603, 4
        %v635 = vpop.permute.xlu0 %634
        %vm636 = vcmask 1046528
        %v637 = vrot.slane %v347, 1
        %v638 = vrot.slane %v395, 1
        %v639 = vsel %vm636, %v637, %v638
        %v640 = vrot.slane %v348, 1
        %v641 = vrot.slane %v396, 1
        %v642 = vsel %vm636, %v640, %v641
        %v643 = vrot.slane %v349, 1
        %v644 = vrot.slane %v397, 1
        %v645 = vsel %vm636, %v643, %v644
        %v646 = vrot.slane %v350, 1
        %v647 = vrot.slane %v398, 1
        %v648 = vsel %vm636, %v646, %v647
        %v649 = vrot.slane %v351, 1
        %v650 = vrot.slane %v399, 1
        %v651 = vsel %vm636, %v649, %v650
        %v652 = vrot.slane %v352, 1
        %v653 = vrot.slane %v400, 1
        %v654 = vsel %vm636, %v652, %v653
        %v655 = vrot.slane %v353, 1
        %v656 = vrot.slane %v401, 1
        %v657 = vsel %vm636, %v655, %v656
        %v658 = vrot.slane %v354, 1
        %v659 = vrot.slane %v402, 1
        %v660 = vsel %vm636, %v658, %v659
        %v661 = vrot.slane %v355, 1
        %v662 = vrot.slane %v403, 1
        %v663 = vsel %vm636, %v661, %v662
        %v664 = vrot.slane %v356, 1
        %v665 = vrot.slane %v404, 1
        %v666 = vsel %vm636, %v664, %v665
        %v667 = vrot.slane %v357, 1
        %v668 = vrot.slane %v405, 1
        %v669 = vsel %vm636, %v667, %v668
        %v670 = vrot.slane %v358, 1
        %v671 = vrot.slane %v406, 1
        %v672 = vsel %vm636, %v670, %v671
        %v673 = vrot.slane %v359, 1
        %v674 = vrot.slane %v407, 1
        %v675 = vsel %vm636, %v673, %v674
        %v676 = vrot.slane %v360, 1
        %v677 = vrot.slane %v408, 1
        %v678 = vsel %vm636, %v676, %v677
        %v679 = vrot.slane %v361, 1
        %v680 = vrot.slane %v409, 1
        %v681 = vsel %vm636, %v679, %v680
        %v682 = vrot.slane %v362, 1
        %v683 = vrot.slane %v410, 1
        %v684 = vsel %vm636, %v682, %v683
        %685 = vrot.lane.b32.xlu0 %v639, 8
        %v686 = vpop.permute.xlu0 %685
        %687 = vrot.lane.b32.xlu0 %v642, 8
        %v688 = vpop.permute.xlu0 %687
        %689 = vrot.lane.b32.xlu0 %v645, 8
        %v690 = vpop.permute.xlu0 %689
        %691 = vrot.lane.b32.xlu0 %v648, 8
        %v692 = vpop.permute.xlu0 %691
        %693 = vrot.lane.b32.xlu0 %v651, 8
        %v694 = vpop.permute.xlu0 %693
        %695 = vrot.lane.b32.xlu0 %v654, 8
        %v696 = vpop.permute.xlu0 %695
        %697 = vrot.lane.b32.xlu0 %v657, 8
        %v698 = vpop.permute.xlu0 %697
        %699 = vrot.lane.b32.xlu0 %v660, 8
        %v700 = vpop.permute.xlu0 %699
        %701 = vrot.lane.b32.xlu0 %v663, 8
        %v702 = vpop.permute.xlu0 %701
        %703 = vrot.lane.b32.xlu0 %v666, 8
        %v704 = vpop.permute.xlu0 %703
        %705 = vrot.lane.b32.xlu0 %v669, 8
        %v706 = vpop.permute.xlu0 %705
        %707 = vrot.lane.b32.xlu0 %v672, 8
        %v708 = vpop.permute.xlu0 %707
        %709 = vrot.lane.b32.xlu0 %v675, 8
        %v710 = vpop.permute.xlu0 %709
        %711 = vrot.lane.b32.xlu0 %v678, 8
        %v712 = vpop.permute.xlu0 %711
        %713 = vrot.lane.b32.xlu0 %v681, 8
        %v714 = vpop.permute.xlu0 %713
        %715 = vrot.lane.b32.xlu0 %v684, 8
        %v716 = vpop.permute.xlu0 %715
        %v719 = vunpack.c.l.b16 %v277
        %v720 = vunpack.c.l.b16 %v278
        %v721 = vpack.c.b16 %v720, %v719
        %722 = vrot.lane.b32.xlu0 %v348, 12
        %v723 = vpop.permute.xlu0 %722
        %724 = vrot.lane.b32.xlu0 %v349, 12
        %v725 = vpop.permute.xlu0 %724
        %726 = vrot.lane.b32.xlu0 %v350, 12
        %v727 = vpop.permute.xlu0 %726
        %728 = vrot.lane.b32.xlu0 %v351, 12
        %v729 = vpop.permute.xlu0 %728
        %730 = vrot.lane.b32.xlu0 %v352, 12
        %v731 = vpop.permute.xlu0 %730
        %732 = vrot.lane.b32.xlu0 %v353, 12
        %v733 = vpop.permute.xlu0 %732
        %734 = vrot.lane.b32.xlu0 %v354, 12
        %v735 = vpop.permute.xlu0 %734
        %736 = vrot.lane.b32.xlu0 %v355, 12
        %v737 = vpop.permute.xlu0 %736
        %738 = vrot.lane.b32.xlu0 %v356, 12
        %v739 = vpop.permute.xlu0 %738
        %740 = vrot.lane.b32.xlu0 %v357, 12
        %v741 = vpop.permute.xlu0 %740
        %742 = vrot.lane.b32.xlu0 %v358, 12
        %v743 = vpop.permute.xlu0 %742
        %744 = vrot.lane.b32.xlu0 %v359, 12
        %v745 = vpop.permute.xlu0 %744
        %746 = vrot.lane.b32.xlu0 %v360, 12
        %v747 = vpop.permute.xlu0 %746
        %748 = vrot.lane.b32.xlu0 %v361, 12
        %v749 = vpop.permute.xlu0 %748
        %750 = vrot.lane.b32.xlu0 %v362, 12
        %v751 = vpop.permute.xlu0 %750
        %752 = vrot.lane.b32.xlu0 %v721, 12
        %v753 = vpop.permute.xlu0 %752
        %v755 = vunpack.c.l.b16 %v279
        %v756 = vpack.c.b16 %v755, %v755
        %v758 = vshrl.u32 %v721, 16
        %v760 = vshll.u32 %v721, 16
        %v762 = vrot.slane %v760, 1
        %v763 = vor.u32 %v758, %v762
        %v765 = vshll.u32 %v756, 16
        %v767 = vrot.slane %v765, 1
        %v768 = vsel %vm411, %v763, %v767
        %769 = vrot.lane.b32.xlu0 %v435, 16
        %v770 = vpop.permute.xlu0 %769
        %771 = vrot.lane.b32.xlu0 %v447, 16
        %v772 = vpop.permute.xlu0 %771
        %773 = vrot.lane.b32.xlu0 %v459, 16
        %v774 = vpop.permute.xlu0 %773
        %775 = vrot.lane.b32.xlu0 %v471, 16
        %v776 = vpop.permute.xlu0 %775
        %777 = vrot.lane.b32.xlu0 %v483, 16
        %v778 = vpop.permute.xlu0 %777
        %779 = vrot.lane.b32.xlu0 %v495, 16
        %v780 = vpop.permute.xlu0 %779
        %781 = vrot.lane.b32.xlu0 %v507, 16
        %v782 = vpop.permute.xlu0 %781
        %783 = vrot.lane.b32.xlu0 %v519, 16
        %v784 = vpop.permute.xlu0 %783
        %785 = vrot.lane.b32.xlu0 %v531, 16
        %v786 = vpop.permute.xlu0 %785
        %787 = vrot.lane.b32.xlu0 %v543, 16
        %v788 = vpop.permute.xlu0 %787
        %789 = vrot.lane.b32.xlu0 %v555, 16
        %v790 = vpop.permute.xlu0 %789
        %791 = vrot.lane.b32.xlu0 %v567, 16
        %v792 = vpop.permute.xlu0 %791
        %793 = vrot.lane.b32.xlu0 %v579, 16
        %v794 = vpop.permute.xlu0 %793
        %795 = vrot.lane.b32.xlu0 %v591, 16
        %v796 = vpop.permute.xlu0 %795
        %797 = vrot.lane.b32.xlu0 %v603, 16
        %v798 = vpop.permute.xlu0 %797
        %799 = vrot.lane.b32.xlu0 %v768, 16
        %v800 = vpop.permute.xlu0 %799
        %v801 = vrot.slane %v721, 1
        %v802 = vrot.slane %v756, 1
        %v803 = vsel %vm636, %v801, %v802
        %804 = vrot.lane.b32.xlu0 %v642, 20
        %v805 = vpop.permute.xlu0 %804
        %806 = vrot.lane.b32.xlu0 %v645, 20
        %v807 = vpop.permute.xlu0 %806
        %808 = vrot.lane.b32.xlu0 %v648, 20
        %v809 = vpop.permute.xlu0 %808
        %810 = vrot.lane.b32.xlu0 %v651, 20
        %v811 = vpop.permute.xlu0 %810
        %812 = vrot.lane.b32.xlu0 %v654, 20
        %v813 = vpop.permute.xlu0 %812
        %814 = vrot.lane.b32.xlu0 %v657, 20
        %v815 = vpop.permute.xlu0 %814
        %816 = vrot.lane.b32.xlu0 %v660, 20
        %v817 = vpop.permute.xlu0 %816
        %818 = vrot.lane.b32.xlu0 %v663, 20
        %v819 = vpop.permute.xlu0 %818
        %820 = vrot.lane.b32.xlu0 %v666, 20
        %v821 = vpop.permute.xlu0 %820
        %822 = vrot.lane.b32.xlu0 %v669, 20
        %v823 = vpop.permute.xlu0 %822
        %824 = vrot.lane.b32.xlu0 %v672, 20
        %v825 = vpop.permute.xlu0 %824
        %826 = vrot.lane.b32.xlu0 %v675, 20
        %v827 = vpop.permute.xlu0 %826
        %828 = vrot.lane.b32.xlu0 %v678, 20
        %v829 = vpop.permute.xlu0 %828
        %830 = vrot.lane.b32.xlu0 %v681, 20
        %v831 = vpop.permute.xlu0 %830
        %832 = vrot.lane.b32.xlu0 %v684, 20
        %v833 = vpop.permute.xlu0 %832
        %834 = vrot.lane.b32.xlu0 %v803, 20
        %v835 = vpop.permute.xlu0 %834
        %v838 = vunpack.c.l.b16 %v280
        %v839 = vunpack.c.l.b16 %v281
        %v840 = vpack.c.b16 %v839, %v838
        %841 = vrot.lane.b32.xlu0 %v349, 24
        %v842 = vpop.permute.xlu0 %841
        %843 = vrot.lane.b32.xlu0 %v350, 24
        %v844 = vpop.permute.xlu0 %843
        %845 = vrot.lane.b32.xlu0 %v351, 24
        %v846 = vpop.permute.xlu0 %845
        %847 = vrot.lane.b32.xlu0 %v352, 24
        %v848 = vpop.permute.xlu0 %847
        %849 = vrot.lane.b32.xlu0 %v353, 24
        %v850 = vpop.permute.xlu0 %849
        %851 = vrot.lane.b32.xlu0 %v354, 24
        %v852 = vpop.permute.xlu0 %851
        %853 = vrot.lane.b32.xlu0 %v355, 24
        %v854 = vpop.permute.xlu0 %853
        %855 = vrot.lane.b32.xlu0 %v356, 24
        %v856 = vpop.permute.xlu0 %855
        %857 = vrot.lane.b32.xlu0 %v357, 24
        %v858 = vpop.permute.xlu0 %857
        %859 = vrot.lane.b32.xlu0 %v358, 24
        %v860 = vpop.permute.xlu0 %859
        %861 = vrot.lane.b32.xlu0 %v359, 24
        %v862 = vpop.permute.xlu0 %861
        %863 = vrot.lane.b32.xlu0 %v360, 24
        %v864 = vpop.permute.xlu0 %863
        %865 = vrot.lane.b32.xlu0 %v361, 24
        %v866 = vpop.permute.xlu0 %865
        %867 = vrot.lane.b32.xlu0 %v362, 24
        %v868 = vpop.permute.xlu0 %867
        %869 = vrot.lane.b32.xlu0 %v721, 24
        %v870 = vpop.permute.xlu0 %869
        %871 = vrot.lane.b32.xlu0 %v840, 24
        %v872 = vpop.permute.xlu0 %871
        %v874 = vunpack.c.l.b16 %v282
        %v875 = vpack.c.b16 %v874, %v874
        %v877 = vshrl.u32 %v840, 16
        %v879 = vshll.u32 %v840, 16
        %v881 = vrot.slane %v879, 1
        %v882 = vor.u32 %v877, %v881
        %v884 = vshll.u32 %v875, 16
        %v886 = vrot.slane %v884, 1
        %v887 = vsel %vm411, %v882, %v886
        %888 = vrot.lane.b32.xlu0 %v447, 28
        %v889 = vpop.permute.xlu0 %888
        %890 = vrot.lane.b32.xlu0 %v459, 28
        %v891 = vpop.permute.xlu0 %890
        %892 = vrot.lane.b32.xlu0 %v471, 28
        %v893 = vpop.permute.xlu0 %892
        %894 = vrot.lane.b32.xlu0 %v483, 28
        %v895 = vpop.permute.xlu0 %894
        %896 = vrot.lane.b32.xlu0 %v495, 28
        %v897 = vpop.permute.xlu0 %896
        %898 = vrot.lane.b32.xlu0 %v507, 28
        %v899 = vpop.permute.xlu0 %898
        %900 = vrot.lane.b32.xlu0 %v519, 28
        %v901 = vpop.permute.xlu0 %900
        %902 = vrot.lane.b32.xlu0 %v531, 28
        %v903 = vpop.permute.xlu0 %902
        %904 = vrot.lane.b32.xlu0 %v543, 28
        %v905 = vpop.permute.xlu0 %904
        %906 = vrot.lane.b32.xlu0 %v555, 28
        %v907 = vpop.permute.xlu0 %906
        %908 = vrot.lane.b32.xlu0 %v567, 28
        %v909 = vpop.permute.xlu0 %908
        %910 = vrot.lane.b32.xlu0 %v579, 28
        %v911 = vpop.permute.xlu0 %910
        %912 = vrot.lane.b32.xlu0 %v591, 28
        %v913 = vpop.permute.xlu0 %912
        %914 = vrot.lane.b32.xlu0 %v603, 28
        %v915 = vpop.permute.xlu0 %914
        %916 = vrot.lane.b32.xlu0 %v768, 28
        %v917 = vpop.permute.xlu0 %916
        %918 = vrot.lane.b32.xlu0 %v887, 28
        %v919 = vpop.permute.xlu0 %918
        %v920 = vrot.slane %v840, 1
        %v921 = vrot.slane %v875, 1
        %v922 = vsel %vm636, %v920, %v921
        %923 = vrot.lane.b32.xlu0 %v645, 32
        %v924 = vpop.permute.xlu0 %923
        %925 = vrot.lane.b32.xlu0 %v648, 32
        %v926 = vpop.permute.xlu0 %925
        %927 = vrot.lane.b32.xlu0 %v651, 32
        %v928 = vpop.permute.xlu0 %927
        %929 = vrot.lane.b32.xlu0 %v654, 32
        %v930 = vpop.permute.xlu0 %929
        %931 = vrot.lane.b32.xlu0 %v657, 32
        %v932 = vpop.permute.xlu0 %931
        %933 = vrot.lane.b32.xlu0 %v660, 32
        %v934 = vpop.permute.xlu0 %933
        %935 = vrot.lane.b32.xlu0 %v663, 32
        %v936 = vpop.permute.xlu0 %935
        %937 = vrot.lane.b32.xlu0 %v666, 32
        %v938 = vpop.permute.xlu0 %937
        %939 = vrot.lane.b32.xlu0 %v669, 32
        %v940 = vpop.permute.xlu0 %939
        %941 = vrot.lane.b32.xlu0 %v672, 32
        %v942 = vpop.permute.xlu0 %941
        %943 = vrot.lane.b32.xlu0 %v675, 32
        %v944 = vpop.permute.xlu0 %943
        %945 = vrot.lane.b32.xlu0 %v678, 32
        %v946 = vpop.permute.xlu0 %945
        %947 = vrot.lane.b32.xlu0 %v681, 32
        %v948 = vpop.permute.xlu0 %947
        %949 = vrot.lane.b32.xlu0 %v684, 32
        %v950 = vpop.permute.xlu0 %949
        %951 = vrot.lane.b32.xlu0 %v803, 32
        %v952 = vpop.permute.xlu0 %951
        %953 = vrot.lane.b32.xlu0 %v922, 32
        %v954 = vpop.permute.xlu0 %953
        %vm955 = vcmask 31744
        %v957 = vsel %vm955, %v347, %v605
        %v959 = vsel %vm955, %v348, %v607
        %v961 = vsel %vm955, %v349, %v609
        %v963 = vsel %vm955, %v350, %v611
        %v965 = vsel %vm955, %v351, %v613
        %v967 = vsel %vm955, %v352, %v615
        %v969 = vsel %vm955, %v353, %v617
        %v971 = vsel %vm955, %v354, %v619
        %v973 = vsel %vm955, %v355, %v621
        %v975 = vsel %vm955, %v356, %v623
        %v977 = vsel %vm955, %v357, %v625
        %v979 = vsel %vm955, %v358, %v627
        %v981 = vsel %vm955, %v359, %v629
        %v983 = vsel %vm955, %v360, %v631
        %v985 = vsel %vm955, %v361, %v633
        %v987 = vsel %vm955, %v362, %v635
        %vm988 = vcmask 64512
        %v990 = vsel %vm988, %v957, %v686
        %v992 = vsel %vm988, %v959, %v688
        %v994 = vsel %vm988, %v961, %v690
        %v996 = vsel %vm988, %v963, %v692
        %v998 = vsel %vm988, %v965, %v694
        %v1000 = vsel %vm988, %v967, %v696
        %v1002 = vsel %vm988, %v969, %v698
        %v1004 = vsel %vm988, %v971, %v700
        %v1006 = vsel %vm988, %v973, %v702
        %v1008 = vsel %vm988, %v975, %v704
        %v1010 = vsel %vm988, %v977, %v706
        %v1012 = vsel %vm988, %v979, %v708
        %v1014 = vsel %vm988, %v981, %v710
        %v1016 = vsel %vm988, %v983, %v712
        %v1018 = vsel %vm988, %v985, %v714
        %v1020 = vsel %vm988, %v987, %v716
        %vm1021 = vcmask 97280
        %v1023 = vsel %vm1021, %v990, %v723
        %v1025 = vsel %vm1021, %v992, %v725
        %v1027 = vsel %vm1021, %v994, %v727
        %v1029 = vsel %vm1021, %v996, %v729
        %v1031 = vsel %vm1021, %v998, %v731
        %v1033 = vsel %vm1021, %v1000, %v733
        %v1035 = vsel %vm1021, %v1002, %v735
        %v1037 = vsel %vm1021, %v1004, %v737
        %v1039 = vsel %vm1021, %v1006, %v739
        %v1041 = vsel %vm1021, %v1008, %v741
        %v1043 = vsel %vm1021, %v1010, %v743
        %v1045 = vsel %vm1021, %v1012, %v745
        %v1047 = vsel %vm1021, %v1014, %v747
        %v1049 = vsel %vm1021, %v1016, %v749
        %v1051 = vsel %vm1021, %v1018, %v751
        %v1053 = vsel %vm1021, %v1020, %v753
        %vm1054 = vcmask 130048
        %v1056 = vsel %vm1054, %v1023, %v770
        %v1058 = vsel %vm1054, %v1025, %v772
        %v1060 = vsel %vm1054, %v1027, %v774
        %v1062 = vsel %vm1054, %v1029, %v776
        %v1064 = vsel %vm1054, %v1031, %v778
        %v1066 = vsel %vm1054, %v1033, %v780
        %v1068 = vsel %vm1054, %v1035, %v782
        %v1070 = vsel %vm1054, %v1037, %v784
        %v1072 = vsel %vm1054, %v1039, %v786
        %v1074 = vsel %vm1054, %v1041, %v788
        %v1076 = vsel %vm1054, %v1043, %v790
        %v1078 = vsel %vm1054, %v1045, %v792
        %v1080 = vsel %vm1054, %v1047, %v794
        %v1082 = vsel %vm1054, %v1049, %v796
        %v1084 = vsel %vm1054, %v1051, %v798
        %v1086 = vsel %vm1054, %v1053, %v800
        %vm1087 = vcmask 162816
        %v1089 = vsel %vm1087, %v1056, %v805
        %v1091 = vsel %vm1087, %v1058, %v807
        %v1093 = vsel %vm1087, %v1060, %v809
        %v1095 = vsel %vm1087, %v1062, %v811
        %v1097 = vsel %vm1087, %v1064, %v813
        %v1099 = vsel %vm1087, %v1066, %v815
        %v1101 = vsel %vm1087, %v1068, %v817
        %v1103 = vsel %vm1087, %v1070, %v819
        %v1105 = vsel %vm1087, %v1072, %v821
        %v1107 = vsel %vm1087, %v1074, %v823
        %v1109 = vsel %vm1087, %v1076, %v825
        %v1111 = vsel %vm1087, %v1078, %v827
        %v1113 = vsel %vm1087, %v1080, %v829
        %v1115 = vsel %vm1087, %v1082, %v831
        %v1117 = vsel %vm1087, %v1084, %v833
        %v1119 = vsel %vm1087, %v1086, %v835
        %vm1120 = vcmask 195584
        %v1122 = vsel %vm1120, %v1089, %v842
        %v1124 = vsel %vm1120, %v1091, %v844
        %v1126 = vsel %vm1120, %v1093, %v846
        %v1128 = vsel %vm1120, %v1095, %v848
        %v1130 = vsel %vm1120, %v1097, %v850
        %v1132 = vsel %vm1120, %v1099, %v852
        %v1134 = vsel %vm1120, %v1101, %v854
        %v1136 = vsel %vm1120, %v1103, %v856
        %v1138 = vsel %vm1120, %v1105, %v858
        %v1140 = vsel %vm1120, %v1107, %v860
        %v1142 = vsel %vm1120, %v1109, %v862
        %v1144 = vsel %vm1120, %v1111, %v864
        %v1146 = vsel %vm1120, %v1113, %v866
        %v1148 = vsel %vm1120, %v1115, %v868
        %v1150 = vsel %vm1120, %v1117, %v870
        %v1152 = vsel %vm1120, %v1119, %v872
        %vm1153 = vcmask 228352
        %v1155 = vsel %vm1153, %v1122, %v889
        %v1157 = vsel %vm1153, %v1124, %v891
        %v1159 = vsel %vm1153, %v1126, %v893
        %v1161 = vsel %vm1153, %v1128, %v895
        %v1163 = vsel %vm1153, %v1130, %v897
        %v1165 = vsel %vm1153, %v1132, %v899
        %v1167 = vsel %vm1153, %v1134, %v901
        %v1169 = vsel %vm1153, %v1136, %v903
        %v1171 = vsel %vm1153, %v1138, %v905
        %v1173 = vsel %vm1153, %v1140, %v907
        %v1175 = vsel %vm1153, %v1142, %v909
        %v1177 = vsel %vm1153, %v1144, %v911
        %v1179 = vsel %vm1153, %v1146, %v913
        %v1181 = vsel %vm1153, %v1148, %v915
        %v1183 = vsel %vm1153, %v1150, %v917
        %v1185 = vsel %vm1153, %v1152, %v919
        %vm1186 = vcmask 261120
        %v1188 = vsel %vm1186, %v1155, %v924
        %v1190 = vsel %vm1186, %v1157, %v926
        %v1192 = vsel %vm1186, %v1159, %v928
        %v1194 = vsel %vm1186, %v1161, %v930
        %v1196 = vsel %vm1186, %v1163, %v932
        %v1198 = vsel %vm1186, %v1165, %v934
        %v1200 = vsel %vm1186, %v1167, %v936
        %v1202 = vsel %vm1186, %v1169, %v938
        %v1204 = vsel %vm1186, %v1171, %v940
        %v1206 = vsel %vm1186, %v1173, %v942
        %v1208 = vsel %vm1186, %v1175, %v944
        %v1210 = vsel %vm1186, %v1177, %v946
        %v1212 = vsel %vm1186, %v1179, %v948
        %v1214 = vsel %vm1186, %v1181, %v950
        %v1216 = vsel %vm1186, %v1183, %v952
        %v1218 = vsel %vm1186, %v1185, %v954
        %v1219 = vld [vmem:[%s219] sm:$0xf]
        %v1220 = vld [vmem:[%s219 + $0x4] sm:$0xf]
        %v1221 = vld [vmem:[%s219 + $0x8] sm:$0xf]
        %v1222 = vld [vmem:[%s219 + $0xc] sm:$0xf]
        %v1223 = vld [vmem:[%s219 + $0x10] sm:$0x3]
        %v1224 = vld [vmem:[%s222] sm:$0x1]
        %v1226 = vlaneseq
        %v1227 = vshrl.u32 %v1226, 7
        %v1228 = vsub.s32 0, %v1227
        %v1229 = vrot.slane %v1224, %v1228
        %v1236 = vunpack.c.l.b16 %v1219
        %v1237 = vunpack.c.l.b16 %v1220
        %v1238 = vunpack.c.l.b16 %v1221
        %v1239 = vunpack.c.l.b16 %v1222
        %v1240 = vunpack.c.l.b16 %v1223
        %v1241 = vpack.c.b16 %v1237, %v1236
        %v1242 = vpack.c.b16 %v1239, %v1238
        %v1243 = vpack.c.b16 %v1240, %v1240
        %vm1246 = vcmask 293888
        %v1247 = vsel %vm1246, %v1188, 0
        %v1249 = vsel %vm1246, %v1190, 0
        %v1251 = vsel %vm1246, %v1192, 0
        %v1253 = vsel %vm1246, %v1194, 0
        %v1255 = vsel %vm1246, %v1196, 0
        %v1257 = vsel %vm1246, %v1198, 0
        %v1259 = vsel %vm1246, %v1200, 0
        %v1261 = vsel %vm1246, %v1202, 0
        %v1263 = vsel %vm1246, %v1204, 0
        %v1265 = vsel %vm1246, %v1206, 0
        %v1267 = vsel %vm1246, %v1208, 0
        %v1269 = vsel %vm1246, %v1210, 0
        %v1271 = vsel %vm1246, %v1212, 0
        %v1273 = vsel %vm1246, %v1214, 0
        %v1275 = vsel %vm1246, %v1216, 0
        %v1277 = vsel %vm1246, %v1218, 0
        %vm1279 = vcmask 1041408
        %v1281 = vsel %vm1279, %v1243, 0
        %1283 = vmatprep.subr.bf16.mxu0 0
        %1284 = vmatpush1.bf16.msra.mxu0 %v1241
        %1285 = vmatprep.subr.bf16.mxu0 0
        %1286 = vmatpush1.bf16.msra.mxu0 %v1242
        %1287 = vmatprep.subr.bf16.mxu0 0
        %1288 = vmatpush1.bf16.msra.mxu0 %v1281
        %1289 = vmatprep.subr.bf16.mxu0 0
        %1290 = vmatpush1.bf16.msra.mxu0 0
        %1291 = vmatprep.subr.bf16.mxu0 0
        %1292 = vmatpush1.bf16.msra.mxu0 0
        %1293 = vmatprep.subr.bf16.mxu0 0
        %1294 = vmatpush1.bf16.msra.mxu0 0
        %1295 = vmatprep.subr.bf16.mxu0 0
        %1296 = vmatpush1.bf16.msra.mxu0 0
        %1297 = vmatprep.subr.bf16.mxu0 0
        %1298 = vmatpush1.bf16.msra.mxu0 0
        %1299 = vmatprep.subr.bf16.mxu0 0
        %1300 = vmatpush1.bf16.msra.mxu0 0
        %1301 = vmatprep.subr.bf16.mxu0 0
        %1302 = vmatpush1.bf16.msra.mxu0 0
        %1303 = vmatprep.subr.bf16.mxu0 0
        %1304 = vmatpush1.bf16.msra.mxu0 0
        %1305 = vmatprep.subr.bf16.mxu0 0
        %1306 = vmatpush1.bf16.msra.mxu0 0
        %1307 = vmatprep.subr.bf16.mxu0 0
        %1308 = vmatpush1.bf16.msra.mxu0 0
        %1309 = vmatprep.subr.bf16.mxu0 0
        %1310 = vmatpush1.bf16.msra.mxu0 0
        %1311 = vmatprep.subr.bf16.mxu0 0
        %1312 = vmatpush1.bf16.msra.mxu0 0
        %1313 = vmatprep.subr.bf16.mxu0 0
        %1314 = vmatpush1.bf16.msra.mxu0 0
        %1315 = vmatprep.mubr.bf16.mxu0 0
        %1316 = vmatmul.mubr.bf16.gmra.mrb[0].mxu0 %v1247
        %v1317 = vpop.f32.mrb[0].mxu0
        %v1318 = vadd.f32 %v1229, %v1317
        %v1319 = vpop.f32.mrb[0].mxu0
        %v1320 = vpop.f32.mrb[0].mxu0
        %v1321 = vadd.f32 %v1229, %v1320
        %v1322 = vpop.f32.mrb[0].mxu0
        %1323 = vmatprep.mubr.bf16.mxu0 0
        %1324 = vmatmul.mubr.bf16.gmra.mrb[0].mxu0 %v1249
        %v1325 = vpop.f32.mrb[0].mxu0
        %v1326 = vadd.f32 %v1229, %v1325
        %v1327 = vpop.f32.mrb[0].mxu0
        %v1328 = vpop.f32.mrb[0].mxu0
        %v1329 = vadd.f32 %v1229, %v1328
        %v1330 = vpop.f32.mrb[0].mxu0
        %1331 = vmatprep.mubr.bf16.mxu0 0
        %1332 = vmatmul.mubr.bf16.gmra.mrb[0].mxu0 %v1251
        %v1333 = vpop.f32.mrb[0].mxu0
        %v1334 = vadd.f32 %v1229, %v1333
        %v1335 = vpop.f32.mrb[0].mxu0
        %v1336 = vpop.f32.mrb[0].mxu0
        %v1337 = vadd.f32 %v1229, %v1336
        %v1338 = vpop.f32.mrb[0].mxu0
        %1339 = vmatprep.mubr.bf16.mxu0 0
        %1340 = vmatmul.mubr.bf16.gmra.mrb[0].mxu0 %v1253
        %v1341 = vpop.f32.mrb[0].mxu0
        %v1342 = vadd.f32 %v1229, %v1341
        %v1343 = vpop.f32.mrb[0].mxu0
        %v1344 = vpop.f32.mrb[0].mxu0
        %v1345 = vadd.f32 %v1229, %v1344
        %v1346 = vpop.f32.mrb[0].mxu0
        %1347 = vmatprep.mubr.bf16.mxu0 0
        %1348 = vmatmul.mubr.bf16.gmra.mrb[0].mxu0 %v1255
        %v1349 = vpop.f32.mrb[0].mxu0
        %v1350 = vadd.f32 %v1229, %v1349
        %v1351 = vpop.f32.mrb[0].mxu0
        %v1352 = vpop.f32.mrb[0].mxu0
        %v1353 = vadd.f32 %v1229, %v1352
        %v1354 = vpop.f32.mrb[0].mxu0
        %1355 = vmatprep.mubr.bf16.mxu0 0
        %1356 = vmatmul.mubr.bf16.gmra.mrb[0].mxu0 %v1257
        %v1357 = vpop.f32.mrb[0].mxu0
        %v1358 = vadd.f32 %v1229, %v1357
        %v1359 = vpop.f32.mrb[0].mxu0
        %v1360 = vpop.f32.mrb[0].mxu0
        %v1361 = vadd.f32 %v1229, %v1360
        %v1362 = vpop.f32.mrb[0].mxu0
        %1363 = vmatprep.mubr.bf16.mxu0 0
        %1364 = vmatmul.mubr.bf16.gmra.mrb[0].mxu0 %v1259
        %v1365 = vpop.f32.mrb[0].mxu0
        %v1366 = vadd.f32 %v1229, %v1365
        %v1367 = vpop.f32.mrb[0].mxu0
        %v1368 = vpop.f32.mrb[0].mxu0
        %v1369 = vadd.f32 %v1229, %v1368
        %v1370 = vpop.f32.mrb[0].mxu0
        %1371 = vmatprep.mubr.bf16.mxu0 0
        %1372 = vmatmul.mubr.bf16.gmra.mrb[0].mxu0 %v1261
        %v1373 = vpop.f32.mrb[0].mxu0
        %v1374 = vadd.f32 %v1229, %v1373
        %v1375 = vpop.f32.mrb[0].mxu0
        %v1376 = vpop.f32.mrb[0].mxu0
        %v1377 = vadd.f32 %v1229, %v1376
        %v1378 = vpop.f32.mrb[0].mxu0
        %1379 = vmatprep.mubr.bf16.mxu0 0
        %1380 = vmatmul.mubr.bf16.gmra.mrb[0].mxu0 %v1263
        %v1381 = vpop.f32.mrb[0].mxu0
        %v1382 = vadd.f32 %v1229, %v1381
        %v1383 = vpop.f32.mrb[0].mxu0
        %v1384 = vpop.f32.mrb[0].mxu0
        %v1385 = vadd.f32 %v1229, %v1384
        %v1386 = vpop.f32.mrb[0].mxu0
        %1387 = vmatprep.mubr.bf16.mxu0 0
        %1388 = vmatmul.mubr.bf16.gmra.mrb[0].mxu0 %v1265
        %v1389 = vpop.f32.mrb[0].mxu0
        %v1390 = vadd.f32 %v1229, %v1389
        %v1391 = vpop.f32.mrb[0].mxu0
        %v1392 = vpop.f32.mrb[0].mxu0
        %v1393 = vadd.f32 %v1229, %v1392
        %v1394 = vpop.f32.mrb[0].mxu0
        %1395 = vmatprep.mubr.bf16.mxu0 0
        %1396 = vmatmul.mubr.bf16.gmra.mrb[0].mxu0 %v1267
        %v1397 = vpop.f32.mrb[0].mxu0
        %v1398 = vadd.f32 %v1229, %v1397
        %v1399 = vpop.f32.mrb[0].mxu0
        %v1400 = vpop.f32.mrb[0].mxu0
        %v1401 = vadd.f32 %v1229, %v1400
        %v1402 = vpop.f32.mrb[0].mxu0
        %1403 = vmatprep.mubr.bf16.mxu0 0
        %1404 = vmatmul.mubr.bf16.gmra.mrb[0].mxu0 %v1269
        %v1405 = vpop.f32.mrb[0].mxu0
        %v1406 = vadd.f32 %v1229, %v1405
        %v1407 = vpop.f32.mrb[0].mxu0
        %v1408 = vpop.f32.mrb[0].mxu0
        %v1409 = vadd.f32 %v1229, %v1408
        %v1410 = vpop.f32.mrb[0].mxu0
        %1411 = vmatprep.mubr.bf16.mxu0 0
        %1412 = vmatmul.mubr.bf16.gmra.mrb[0].mxu0 %v1271
        %v1413 = vpop.f32.mrb[0].mxu0
        %v1414 = vadd.f32 %v1229, %v1413
        %v1415 = vpop.f32.mrb[0].mxu0
        %v1416 = vpop.f32.mrb[0].mxu0
        %v1417 = vadd.f32 %v1229, %v1416
        %v1418 = vpop.f32.mrb[0].mxu0
        %1419 = vmatprep.mubr.bf16.mxu0 0
        %1420 = vmatmul.mubr.bf16.gmra.mrb[0].mxu0 %v1273
        %v1421 = vpop.f32.mrb[0].mxu0
        %v1422 = vadd.f32 %v1229, %v1421
        %v1423 = vpop.f32.mrb[0].mxu0
        %v1424 = vpop.f32.mrb[0].mxu0
        %v1425 = vadd.f32 %v1229, %v1424
        %v1426 = vpop.f32.mrb[0].mxu0
        %1427 = vmatprep.mubr.bf16.mxu0 0
        %1428 = vmatmul.mubr.bf16.gmra.mrb[0].mxu0 %v1275
        %v1429 = vpop.f32.mrb[0].mxu0
        %v1430 = vadd.f32 %v1229, %v1429
        %v1431 = vpop.f32.mrb[0].mxu0
        %v1432 = vpop.f32.mrb[0].mxu0
        %v1433 = vadd.f32 %v1229, %v1432
        %v1434 = vpop.f32.mrb[0].mxu0
        %1435 = vmatprep.mubr.bf16.mxu0 0
        %1436 = vmatmul.mubr.bf16.gmra.mrb[0].mxu0 %v1277
        %v1437 = vpop.f32.mrb[0].mxu0
        %v1438 = vadd.f32 %v1229, %v1437
        %v1439 = vpop.f32.mrb[0].mxu0
        %v1440 = vpop.f32.mrb[0].mxu0
        %v1441 = vadd.f32 %v1229, %v1440
        %v1442 = vpop.f32.mrb[0].mxu0
        %1443 = vdwg.mxu0
        %v1444 = vsub.f32 0.0, %v1318
        %v1445 = vsub.f32 0.0, %v1321
        %v1446 = vsub.f32 0.0, %v1326
        %v1447 = vsub.f32 0.0, %v1329
        %v1448 = vsub.f32 0.0, %v1334
        %v1449 = vsub.f32 0.0, %v1337
        %v1450 = vsub.f32 0.0, %v1342
        %v1451 = vsub.f32 0.0, %v1345
        %v1452 = vsub.f32 0.0, %v1350
        %v1453 = vsub.f32 0.0, %v1353
        %v1454 = vsub.f32 0.0, %v1358
        %v1455 = vsub.f32 0.0, %v1361
        %v1456 = vsub.f32 0.0, %v1366
        %v1457 = vsub.f32 0.0, %v1369
        %v1458 = vsub.f32 0.0, %v1374
        %v1459 = vsub.f32 0.0, %v1377
        %v1460 = vsub.f32 0.0, %v1382
        %v1461 = vsub.f32 0.0, %v1385
        %v1462 = vsub.f32 0.0, %v1390
        %v1463 = vsub.f32 0.0, %v1393
        %v1464 = vsub.f32 0.0, %v1398
        %v1465 = vsub.f32 0.0, %v1401
        %v1466 = vsub.f32 0.0, %v1406
        %v1467 = vsub.f32 0.0, %v1409
        %v1468 = vsub.f32 0.0, %v1414
        %v1469 = vsub.f32 0.0, %v1417
        %v1470 = vsub.f32 0.0, %v1422
        %v1471 = vsub.f32 0.0, %v1425
        %v1472 = vsub.f32 0.0, %v1430
        %v1473 = vsub.f32 0.0, %v1433
        %v1474 = vsub.f32 0.0, %v1438
        %v1475 = vsub.f32 0.0, %v1441
        %v1476 = vmul.f32 %v1444, 1.442695
        %v1477 = vpow.pop %v1476
        %v1478 = vmul.f32 %v1445, 1.442695
        %v1479 = vpow.pop %v1478
        %v1480 = vmul.f32 %v1446, 1.442695
        %v1481 = vpow.pop %v1480
        %v1482 = vmul.f32 %v1447, 1.442695
        %v1483 = vpow.pop %v1482
        %v1484 = vmul.f32 %v1448, 1.442695
        %v1485 = vpow.pop %v1484
        %v1486 = vmul.f32 %v1449, 1.442695
        %v1487 = vpow.pop %v1486
        %v1488 = vmul.f32 %v1450, 1.442695
        %v1489 = vpow.pop %v1488
        %v1490 = vmul.f32 %v1451, 1.442695
        %v1491 = vpow.pop %v1490
        %v1492 = vmul.f32 %v1452, 1.442695
        %v1493 = vpow.pop %v1492
        %v1494 = vmul.f32 %v1453, 1.442695
        %v1495 = vpow.pop %v1494
        %v1496 = vmul.f32 %v1454, 1.442695
        %v1497 = vpow.pop %v1496
        %v1498 = vmul.f32 %v1455, 1.442695
        %v1499 = vpow.pop %v1498
        %v1500 = vmul.f32 %v1456, 1.442695
        %v1501 = vpow.pop %v1500
        %v1502 = vmul.f32 %v1457, 1.442695
        %v1503 = vpow.pop %v1502
        %v1504 = vmul.f32 %v1458, 1.442695
        %v1505 = vpow.pop %v1504
        %v1506 = vmul.f32 %v1459, 1.442695
        %v1507 = vpow.pop %v1506
        %v1508 = vmul.f32 %v1460, 1.442695
        %v1509 = vpow.pop %v1508
        %v1510 = vmul.f32 %v1461, 1.442695
        %v1511 = vpow.pop %v1510
        %v1512 = vmul.f32 %v1462, 1.442695
        %v1513 = vpow.pop %v1512
        %v1514 = vmul.f32 %v1463, 1.442695
        %v1515 = vpow.pop %v1514
        %v1516 = vmul.f32 %v1464, 1.442695
        %v1517 = vpow.pop %v1516
        %v1518 = vmul.f32 %v1465, 1.442695
        %v1519 = vpow.pop %v1518
        %v1520 = vmul.f32 %v1466, 1.442695
        %v1521 = vpow.pop %v1520
        %v1522 = vmul.f32 %v1467, 1.442695
        %v1523 = vpow.pop %v1522
        %v1524 = vmul.f32 %v1468, 1.442695
        %v1525 = vpow.pop %v1524
        %v1526 = vmul.f32 %v1469, 1.442695
        %v1527 = vpow.pop %v1526
        %v1528 = vmul.f32 %v1470, 1.442695
        %v1529 = vpow.pop %v1528
        %v1530 = vmul.f32 %v1471, 1.442695
        %v1531 = vpow.pop %v1530
        %v1532 = vmul.f32 %v1472, 1.442695
        %v1533 = vpow.pop %v1532
        %v1534 = vmul.f32 %v1473, 1.442695
        %v1535 = vpow.pop %v1534
        %v1536 = vmul.f32 %v1474, 1.442695
        %v1537 = vpow.pop %v1536
        %v1538 = vmul.f32 %v1475, 1.442695
        %v1539 = vpow.pop %v1538
        %v1540 = vadd.f32 %v1477, 1.0
        %v1541 = vadd.f32 %v1479, 1.0
        %v1542 = vadd.f32 %v1481, 1.0
        %v1543 = vadd.f32 %v1483, 1.0
        %v1544 = vadd.f32 %v1485, 1.0
        %v1545 = vadd.f32 %v1487, 1.0
        %v1546 = vadd.f32 %v1489, 1.0
        %v1547 = vadd.f32 %v1491, 1.0
        %v1548 = vadd.f32 %v1493, 1.0
        %v1549 = vadd.f32 %v1495, 1.0
        %v1550 = vadd.f32 %v1497, 1.0
        %v1551 = vadd.f32 %v1499, 1.0
        %v1552 = vadd.f32 %v1501, 1.0
        %v1553 = vadd.f32 %v1503, 1.0
        %v1554 = vadd.f32 %v1505, 1.0
        %v1555 = vadd.f32 %v1507, 1.0
        %v1556 = vadd.f32 %v1509, 1.0
        %v1557 = vadd.f32 %v1511, 1.0
        %v1558 = vadd.f32 %v1513, 1.0
        %v1559 = vadd.f32 %v1515, 1.0
        %v1560 = vadd.f32 %v1517, 1.0
        %v1561 = vadd.f32 %v1519, 1.0
        %v1562 = vadd.f32 %v1521, 1.0
        %v1563 = vadd.f32 %v1523, 1.0
        %v1564 = vadd.f32 %v1525, 1.0
        %v1565 = vadd.f32 %v1527, 1.0
        %v1566 = vadd.f32 %v1529, 1.0
        %v1567 = vadd.f32 %v1531, 1.0
        %v1568 = vadd.f32 %v1533, 1.0
        %v1569 = vadd.f32 %v1535, 1.0
        %v1570 = vadd.f32 %v1537, 1.0
        %v1571 = vadd.f32 %v1539, 1.0
        %v1572 = vrcp.pop %v1540
        %v1573 = vrcp.pop %v1541
        %v1574 = vrcp.pop %v1542
        %v1575 = vrcp.pop %v1543
        %v1576 = vrcp.pop %v1544
        %v1577 = vrcp.pop %v1545
        %v1578 = vrcp.pop %v1546
        %v1579 = vrcp.pop %v1547
        %v1580 = vrcp.pop %v1548
        %v1581 = vrcp.pop %v1549
        %v1582 = vrcp.pop %v1550
        %v1583 = vrcp.pop %v1551
        %v1584 = vrcp.pop %v1552
        %v1585 = vrcp.pop %v1553
        %v1586 = vrcp.pop %v1554
        %v1587 = vrcp.pop %v1555
        %v1588 = vrcp.pop %v1556
        %v1589 = vrcp.pop %v1557
        %v1590 = vrcp.pop %v1558
        %v1591 = vrcp.pop %v1559
        %v1592 = vrcp.pop %v1560
        %v1593 = vrcp.pop %v1561
        %v1594 = vrcp.pop %v1562
        %v1595 = vrcp.pop %v1563
        %v1596 = vrcp.pop %v1564
        %v1597 = vrcp.pop %v1565
        %v1598 = vrcp.pop %v1566
        %v1599 = vrcp.pop %v1567
        %v1600 = vrcp.pop %v1568
        %v1601 = vrcp.pop %v1569
        %v1602 = vrcp.pop %v1570
        %v1603 = vrcp.pop %v1571
        %v1604 = vmul.f32 %v1318, %v1572
        %v1605 = vmul.f32 %v1321, %v1573
        %v1606 = vmul.f32 %v1326, %v1574
        %v1607 = vmul.f32 %v1329, %v1575
        %v1608 = vmul.f32 %v1334, %v1576
        %v1609 = vmul.f32 %v1337, %v1577
        %v1610 = vmul.f32 %v1342, %v1578
        %v1611 = vmul.f32 %v1345, %v1579
        %v1612 = vmul.f32 %v1350, %v1580
        %v1613 = vmul.f32 %v1353, %v1581
        %v1614 = vmul.f32 %v1358, %v1582
        %v1615 = vmul.f32 %v1361, %v1583
        %v1616 = vmul.f32 %v1366, %v1584
        %v1617 = vmul.f32 %v1369, %v1585
        %v1618 = vmul.f32 %v1374, %v1586
        %v1619 = vmul.f32 %v1377, %v1587
        %v1620 = vmul.f32 %v1382, %v1588
        %v1621 = vmul.f32 %v1385, %v1589
        %v1622 = vmul.f32 %v1390, %v1590
        %v1623 = vmul.f32 %v1393, %v1591
        %v1624 = vmul.f32 %v1398, %v1592
        %v1625 = vmul.f32 %v1401, %v1593
        %v1626 = vmul.f32 %v1406, %v1594
        %v1627 = vmul.f32 %v1409, %v1595
        %v1628 = vmul.f32 %v1414, %v1596
        %v1629 = vmul.f32 %v1417, %v1597
        %v1630 = vmul.f32 %v1422, %v1598
        %v1631 = vmul.f32 %v1425, %v1599
        %v1632 = vmul.f32 %v1430, %v1600
        %v1633 = vmul.f32 %v1433, %v1601
        %v1634 = vmul.f32 %v1438, %v1602
        %v1635 = vmul.f32 %v1441, %v1603
        %v1636 = vpack.c.bf16 %v1605, %v1604
        %v1637 = vpack.c.bf16 %v1607, %v1606
        %v1638 = vpack.c.bf16 %v1609, %v1608
        %v1639 = vpack.c.bf16 %v1611, %v1610
        %v1640 = vpack.c.bf16 %v1613, %v1612
        %v1641 = vpack.c.bf16 %v1615, %v1614
        %v1642 = vpack.c.bf16 %v1617, %v1616
        %v1643 = vpack.c.bf16 %v1619, %v1618
        %v1644 = vpack.c.bf16 %v1621, %v1620
        %v1645 = vpack.c.bf16 %v1623, %v1622
        %v1646 = vpack.c.bf16 %v1625, %v1624
        %v1647 = vpack.c.bf16 %v1627, %v1626
        %v1648 = vpack.c.bf16 %v1629, %v1628
        %v1649 = vpack.c.bf16 %v1631, %v1630
        %v1650 = vpack.c.bf16 %v1633, %v1632
        %v1651 = vpack.c.bf16 %v1635, %v1634
        %v1668 = vunpack.c.l.b16 %v1636
        %v1669 = vunpack.c.h.b16 %v1636
        %v1670 = vunpack.c.l.b16 %v1637
        %v1671 = vunpack.c.h.b16 %v1637
        %v1672 = vunpack.c.l.b16 %v1638
        %v1673 = vunpack.c.h.b16 %v1638
        %v1674 = vunpack.c.l.b16 %v1639
        %v1675 = vunpack.c.h.b16 %v1639
        %v1676 = vunpack.c.l.b16 %v1640
        %v1677 = vunpack.c.h.b16 %v1640
        %v1678 = vunpack.c.l.b16 %v1641
        %v1679 = vunpack.c.h.b16 %v1641
        %v1680 = vunpack.c.l.b16 %v1642
        %v1681 = vunpack.c.h.b16 %v1642
        %v1682 = vunpack.c.l.b16 %v1643
        %v1683 = vunpack.c.h.b16 %v1643
        %v1684 = vunpack.c.l.b16 %v1644
        %v1685 = vunpack.c.h.b16 %v1644
        %v1686 = vunpack.c.l.b16 %v1645
        %v1687 = vunpack.c.h.b16 %v1645
        %v1688 = vunpack.c.l.b16 %v1646
        %v1689 = vunpack.c.h.b16 %v1646
        %v1690 = vunpack.c.l.b16 %v1647
        %v1691 = vunpack.c.h.b16 %v1647
        %v1692 = vunpack.c.l.b16 %v1648
        %v1693 = vunpack.c.h.b16 %v1648
        %v1694 = vunpack.c.l.b16 %v1649
        %v1695 = vunpack.c.h.b16 %v1649
        %v1696 = vunpack.c.l.b16 %v1650
        %v1697 = vunpack.c.h.b16 %v1650
        %v1698 = vunpack.c.l.b16 %v1651
        %v1699 = vunpack.c.h.b16 %v1651
        %v1700 = vpack.c.b16 %v1668, %v1668
        %v1701 = vpack.c.b16 %v1669, %v1669
        %v1702 = vpack.c.b16 %v1670, %v1670
        %v1703 = vpack.c.b16 %v1671, %v1671
        %v1704 = vpack.c.b16 %v1672, %v1672
        %v1705 = vpack.c.b16 %v1673, %v1673
        %v1706 = vpack.c.b16 %v1674, %v1674
        %v1707 = vpack.c.b16 %v1675, %v1675
        %v1708 = vpack.c.b16 %v1676, %v1676
        %v1709 = vpack.c.b16 %v1677, %v1677
        %v1710 = vpack.c.b16 %v1678, %v1678
        %v1711 = vpack.c.b16 %v1679, %v1679
        %v1712 = vpack.c.b16 %v1680, %v1680
        %v1713 = vpack.c.b16 %v1681, %v1681
        %v1714 = vpack.c.b16 %v1682, %v1682
        %v1715 = vpack.c.b16 %v1683, %v1683
        %v1716 = vpack.c.b16 %v1684, %v1684
        %v1717 = vpack.c.b16 %v1685, %v1685
        %v1718 = vpack.c.b16 %v1686, %v1686
        %v1719 = vpack.c.b16 %v1687, %v1687
        %v1720 = vpack.c.b16 %v1688, %v1688
        %v1721 = vpack.c.b16 %v1689, %v1689
        %v1722 = vpack.c.b16 %v1690, %v1690
        %v1723 = vpack.c.b16 %v1691, %v1691
        %v1724 = vpack.c.b16 %v1692, %v1692
        %v1725 = vpack.c.b16 %v1693, %v1693
        %v1726 = vpack.c.b16 %v1694, %v1694
        %v1727 = vpack.c.b16 %v1695, %v1695
        %v1728 = vpack.c.b16 %v1696, %v1696
        %v1729 = vpack.c.b16 %v1697, %v1697
        %v1730 = vpack.c.b16 %v1698, %v1698
        %v1731 = vpack.c.b16 %v1699, %v1699
        %1764 = vst [vmem:[%s210] sm:$0xf] %v1700
        %1765 = vst [vmem:[%s210 + $0x4] sm:$0xf] %v1701
        %1766 = vst [vmem:[%s210 + $0x8] sm:$0xf] %v1702
        %1767 = vst [vmem:[%s210 + $0xc] sm:$0xf] %v1703
        %1768 = vst [vmem:[%s210 + $0x10] sm:$0xf] %v1704
        %1769 = vst [vmem:[%s210 + $0x14] sm:$0xf] %v1705
        %1770 = vst [vmem:[%s210 + $0x18] sm:$0xf] %v1706
        %1771 = vst [vmem:[%s210 + $0x1c] sm:$0xf] %v1707
        %1772 = vst [vmem:[%s210 + $0x20] sm:$0xf] %v1708
        %1773 = vst [vmem:[%s210 + $0x24] sm:$0xf] %v1709
        %1774 = vst [vmem:[%s210 + $0x28] sm:$0xf] %v1710
        %1775 = vst [vmem:[%s210 + $0x2c] sm:$0xf] %v1711
        %1776 = vst [vmem:[%s210 + $0x30] sm:$0xf] %v1712
        %1777 = vst [vmem:[%s210 + $0x34] sm:$0xf] %v1713
        %1778 = vst [vmem:[%s210 + $0x38] sm:$0xf] %v1714
        %1779 = vst [vmem:[%s210 + $0x3c] sm:$0xf] %v1715
        %1780 = vst [vmem:[%s210 + $0x40] sm:$0xf] %v1716
        %1781 = vst [vmem:[%s210 + $0x44] sm:$0xf] %v1717
        %1782 = vst [vmem:[%s210 + $0x48] sm:$0xf] %v1718
        %1783 = vst [vmem:[%s210 + $0x4c] sm:$0xf] %v1719
        %1784 = vst [vmem:[%s210 + $0x50] sm:$0xf] %v1720
        %1785 = vst [vmem:[%s210 + $0x54] sm:$0xf] %v1721
        %1786 = vst [vmem:[%s210 + $0x58] sm:$0xf] %v1722
        %1787 = vst [vmem:[%s210 + $0x5c] sm:$0xf] %v1723
        %1788 = vst [vmem:[%s210 + $0x60] sm:$0xf] %v1724
        %1789 = vst [vmem:[%s210 + $0x64] sm:$0xf] %v1725
        %1790 = vst [vmem:[%s210 + $0x68] sm:$0xf] %v1726
        %1791 = vst [vmem:[%s210 + $0x6c] sm:$0xf] %v1727
        %1792 = vst [vmem:[%s210 + $0x70] sm:$0xf] %v1728
        %1793 = vst [vmem:[%s210 + $0x74] sm:$0xf] %v1729
        %1794 = vst [vmem:[%s210 + $0x78] sm:$0xf] %v1730
        %1795 = vst [vmem:[%s210 + $0x7c] sm:$0xf] %v1731
        %s1796 = sand.u32 %s126, 1
        %s1797 = scalar_lea.sflag [#allocation3], %s1796
        %s1798 = sand.u32 %s126, 1
        %s1799 = smul.addr %s1798, 128
        %s1800 = scalar_lea.vmem [#allocation2], %s1799
        // Predicated region
        $region33: #{tpu_custom_call.1} parent=31 // pred_check
          %p1801 = pneg %p136
        $region34: #{tpu_custom_call.1} parent=31 // pred_check_branch
          %1803 = sbr.rel (%p1801) target = $region36
        $region35: #{tpu_custom_call.1} parent=31 // pred_region
          %s1804 = smul.u32 16, %s24
          %s1806 = ssub.s32 2048, 2048
          %1807 = vsyncadd %s1797, %s1806
          %s1808 = smul.addr %s1804, 2
          %s1809 = sadd.s32 %s23, %s1808
          %s1810 = smul.addr %s22, 32
          %s1811 = sadd.s32 %s1809, %s1810
          %s1812 = smul.addr %s1811, 64
          %s1813 = scalar_lea.hbm %s3, %s1812
          %s1814 = sshll.u32 %s1800, 4
          %s1815 = int_to_ptr.vmem [resolvable:$true] %s1814
          %1820 = dma.vmem_to_hbm [thread:$0]  %s1815, 2048, %s1813, %s1797, 64, 64, 4
        $region36: #{tpu_custom_call.1} parent=31 // pred_fallthru
          _
      $region32: #{tpu_custom_call.1} parent=5 // pred_fallthru
        _
      %p1821 = scmp.le.s32.totalorder 2, %s12
      // Predicated region
      $region37: #{tpu_custom_call.1} parent=5 // pred_check
        %p1822 = pneg %p1821
      $region38: #{tpu_custom_call.1} parent=5 // pred_check_branch
        %1824 = sbr.rel (%p1822) target = $region40
      $region39: #{tpu_custom_call.1} parent=5 // pred_region
        %s1825 = ssub.s32 %s12, 2
        // Predicated region
        $region41: #{tpu_custom_call.1} parent=39 // pred_check
          %p1826 = pneg %p142
        $region42: #{tpu_custom_call.1} parent=39 // pred_check_branch
          %1828 = sbr.rel (%p1826) target = $region44
        $region43: #{tpu_custom_call.1} parent=39 // pred_region
          %s1829 = sand.u32 %s127, 1
          %s1830 = scalar_lea.sflag [#allocation3], %s1829
          %s1831 = sand.u32 %s127, 1
          %s1832 = smul.addr %s1831, 128
          %s1833 = scalar_lea.vmem [#allocation2], %s1832
          %1834 = dma.done %s1830, 2048
        $region44: #{tpu_custom_call.1} parent=39 // pred_fallthru
          _
      $region40: #{tpu_custom_call.1} parent=5 // pred_fallthru
        _
    $region6: #{tpu_custom_call.1} parent=1 // loop_footer
      %s16 = sadd.s32 1, %s12
    $region7: #{tpu_custom_call.1} parent=1 // loop_footer_branch
      %11 = sbr.rel target = $region3
    $region8: #{tpu_custom_call.1} parent=1 // loop_exit
      _
    %1835 = vsyncpa [#allocation3], 1
    %s1836 = scalar_lea.sflag [#allocation3], 1
    %1837 = vsyncpa %s1836, 1

// kernel: tpu_custom_call.1
$region0: #{tpu_custom_call.1}
  #allocation0 [shape = 'u32[]', space=smem, size = 0x4, offset = 0x4, fixed_abs, tag = 'smem constant byte address 0x4 - core index']
  #allocation1 [shape = 'u32[144,128]{1,0:T(1,128)}', space=vmem, size = 0x12000, scoped, tag = 'internal scratch']
  %s0 = inlined_call_operand.vmem [shape: bf16[2,18,18,4], index: 0, kind: input, shape index: {}]
  %s1 = inlined_call_operand.vmem [shape: bf16[36,128], index: 1, kind: input, shape index: {}]
  %s2 = inlined_call_operand.vmem [shape: f32[1,128], index: 2, kind: input, shape index: {}]
  %s3 = inlined_call_operand.hbm [shape: bf16[2,16,16,128], index: 3, kind: output, shape index: {}]
  %s4 = sld [smem:[#allocation0]]
  $region45: #{tpu_custom_call.1} parent=0
    _
  %s6 = ssub.s32 1, %s4
  %s7 = scalar_select 0, %s6, %s4
  $region1: #{tpu_custom_call.1} parent=0
    #allocation2 [shape = 'u8[131072]{0}', space=vmem, size = 0x20000, scoped, tag = 'output window, operand 0']
    #allocation3 [shape = 's32[2]{0}', space=sflag, size = 0x8, scoped, tag = 'scoped memory for tpu_custom_call.1']
    %8 = vsyncpa [#allocation3], 0
    %s9 = scalar_lea.sflag [#allocation3], 1
    %10 = vsyncpa %s9, 0
    loop: start=0, step=1, limit=4
    $region2: #{tpu_custom_call.1} parent=1 // loop_pre_header
      _
    $region3: #{tpu_custom_call.1} parent=1 // loop_header
      %s12 = sphi 0, %s16
      %p13 = scmp.ge.s32.totalorder %s12, 4
      %s19 = sphi 0, %s38
      %s20 = sphi 0, %s34
      %s21 = sphi 0, %s30
      %s22 = sphi 0, %s19
      %s23 = sphi 0, %s20
      %s24 = sphi 0, %s21
      %s25 = sphi 0, %s22
      %s26 = sphi 0, %s23
      %s27 = sphi 0, %s24
      %s41 = sphi 0, %s43
      %s44 = sphi 0, %s41
      %s45 = sphi 0, %s44
      %s61 = sphi 0, %s45
      %s67 = sphi 0, %s69
      %s70 = sphi 0, %s67
      %s71 = sphi 0, %s70
      %s87 = sphi 0, %s71
      %s93 = sphi 0, %s95
      %s96 = sphi 0, %s93
      %s97 = sphi 0, %s96
      %s113 = sphi 0, %s97
      %s123 = sphi 0, %s125
      %s126 = sphi 0, %s123
      %s127 = sphi 0, %s126
      %s143 = sphi 0, %s127
    $region4: #{tpu_custom_call.1} parent=1 // loop_header_branch
      %15 = sbr.rel (%p13) target = $region8
    $region5: #{tpu_custom_call.1} parent=1 // loop_body
      %s17 = ssub.s32 %s12, 1
      %s18 = ssub.s32 %s12, 2
      %s28 = sadd.s32 1, %s21
      %p29 = scmp.ge.s32.totalorder %s28, 1
      %s30 = scalar_select %p29, 0, %s28
      %s31 = sadd.s32 1, %s20
      %s32 = scalar_select %p29, %s31, %s20
      %p33 = scmp.ge.s32.totalorder %s32, 1
      %s34 = scalar_select %p33, 0, %s32
      %s35 = sadd.s32 1, %s19
      %s36 = scalar_select %p33, %s35, %s19
      %p37 = scmp.ge.s32.totalorder %s36, 2
      %s38 = scalar_select %p37, 0, %s36
      %s39 = ssub.s32 %s19, %s38
      %p40 = scmp.eq.s32.totalorder %s39, 0
      %s42 = sadd.s32 %s41, 1
      %s43 = scalar_select %p40, %s41, %s42
      %p46 = pneg %p40
      %p47 = scmp.eq.s32.totalorder %s12, 1
      %p48 = por %p46, %p47
      %p49 = scmp.ne.s32.totalorder %s41, %s44
      %p50 = scmp.eq.s32.totalorder %s12, 0
      %p51 = por %p49, %p50
      %p52 = scmp.ne.s32.totalorder %s41, %s44
      %p53 = scmp.eq.s32.totalorder %s17, 1
      %p54 = por %p52, %p53
      %p55 = scmp.ne.s32.totalorder %s44, %s45
      %p56 = scmp.eq.s32.totalorder %s17, 0
      %p57 = por %p55, %p56
      %p58 = scmp.ne.s32.totalorder %s44, %s45
      %p59 = scmp.eq.s32.totalorder %s18, 1
      %p60 = por %p58, %p59
      %p62 = scmp.ne.s32.totalorder %s45, %s61
      %p63 = scmp.eq.s32.totalorder %s18, 0
      %p64 = por %p62, %p63
      %s65 = ssub.s32 %s20, %s34
      %p66 = scmp.eq.s32.totalorder %s65, 0
      %s68 = sadd.s32 %s67, 1
      %s69 = scalar_select %p66, %s67, %s68
      %p72 = pneg %p66
      %p73 = scmp.eq.s32.totalorder %s12, 1
      %p74 = por %p72, %p73
      %p75 = scmp.ne.s32.totalorder %s67, %s70
      %p76 = scmp.eq.s32.totalorder %s12, 0
      %p77 = por %p75, %p76
      %p78 = scmp.ne.s32.totalorder %s67, %s70
      %p79 = scmp.eq.s32.totalorder %s17, 1
      %p80 = por %p78, %p79
      %p81 = scmp.ne.s32.totalorder %s70, %s71
      %p82 = scmp.eq.s32.totalorder %s17, 0
      %p83 = por %p81, %p82
      %p84 = scmp.ne.s32.totalorder %s70, %s71
      %p85 = scmp.eq.s32.totalorder %s18, 1
      %p86 = por %p84, %p85
      %p88 = scmp.ne.s32.totalorder %s71, %s87
      %p89 = scmp.eq.s32.totalorder %s18, 0
      %p90 = por %p88, %p89
      %s91 = ssub.s32 %s20, %s34
      %p92 = scmp.eq.s32.totalorder %s91, 0
      %s94 = sadd.s32 %s93, 1
      %s95 = scalar_select %p92, %s93, %s94
      %p98 = pneg %p92
      %p99 = scmp.eq.s32.totalorder %s12, 1
      %p100 = por %p98, %p99
      %p101 = scmp.ne.s32.totalorder %s93, %s96
      %p102 = scmp.eq.s32.totalorder %s12, 0
      %p103 = por %p101, %p102
      %p104 = scmp.ne.s32.totalorder %s93, %s96
      %p105 = scmp.eq.s32.totalorder %s17, 1
      %p106 = por %p104, %p105
      %p107 = scmp.ne.s32.totalorder %s96, %s97
      %p108 = scmp.eq.s32.totalorder %s17, 0
      %p109 = por %p107, %p108
      %p110 = scmp.ne.s32.totalorder %s96, %s97
      %p111 = scmp.eq.s32.totalorder %s18, 1
      %p112 = por %p110, %p111
      %p114 = scmp.ne.s32.totalorder %s97, %s113
      %p115 = scmp.eq.s32.totalorder %s18, 0
      %p116 = por %p114, %p115
      %s117 = ssub.s32 %s19, %s38
      %s118 = ssub.s32 %s21, %s30
      %s119 = sor.u32 %s117, %s118
      %s120 = ssub.s32 %s20, %s34
      %s121 = sor.u32 %s119, %s120
      %p122 = scmp.eq.s32.totalorder %s121, 0
      %s124 = sadd.s32 %s123, 1
      %s125 = scalar_select %p122, %s123, %s124
      %p128 = pneg %p122
      %p129 = scmp.eq.s32.totalorder %s12, 1
      %p130 = por %p128, %p129
      %p131 = scmp.ne.s32.totalorder %s123, %s126
      %p132 = scmp.eq.s32.totalorder %s12, 0
      %p133 = por %p131, %p132
      %p134 = scmp.ne.s32.totalorder %s123, %s126
      %p135 = scmp.eq.s32.totalorder %s17, 1
      %p136 = por %p134, %p135
      %p137 = scmp.ne.s32.totalorder %s126, %s127
      %p138 = scmp.eq.s32.totalorder %s17, 0
      %p139 = por %p137, %p138
      %p140 = scmp.ne.s32.totalorder %s126, %s127
      %p141 = scmp.eq.s32.totalorder %s18, 1
      %p142 = por %p140, %p141
      %p144 = scmp.ne.s32.totalorder %s127, %s143
      %p145 = scmp.eq.s32.totalorder %s18, 0
      %p146 = por %p144, %p145
      %p147 = scmp.le.s32.totalorder 1, %s12
      %p148 = scmp.lt.s32.totalorder %s12, 3
      %p149 = pnand %p147, %p148
      %p150 = pneg %p149
      // Predicated region
      $region9: #{tpu_custom_call.1} parent=5 // pred_check
        _
      $region10: #{tpu_custom_call.1} parent=5 // pred_check_branch
        %152 = sbr.rel (%p149) target = $region12
      $region11: #{tpu_custom_call.1} parent=5 // pred_region
        %s153 = ssub.s32 %s12, 1
        // Predicated region
        $region13: #{tpu_custom_call.1} parent=11 // pred_check
          %p154 = pneg %p83
        $region14: #{tpu_custom_call.1} parent=11 // pred_check_branch
          %156 = sbr.rel (%p154) target = $region16
        $region15: #{tpu_custom_call.1} parent=11 // pred_region
          %p157 = scmp.lt.s32.totalorder %s23, 0
          %s158 = scalar_select %p157, %s23, 0
          %s159 = smul.addr %s158, 4
          %s160 = scalar_lea.vmem %s1, %s159
        $region16: #{tpu_custom_call.1} parent=11 // pred_fallthru
          _
        // Predicated region
        $region17: #{tpu_custom_call.1} parent=11 // pred_check
          %p161 = pneg %p109
        $region18: #{tpu_custom_call.1} parent=11 // pred_check_branch
          %163 = sbr.rel (%p161) target = $region20
        $region19: #{tpu_custom_call.1} parent=11 // pred_region
          %p164 = scmp.lt.s32.totalorder %s23, 0
          %s165 = scalar_select %p164, %s23, 0
          %s166 = scalar_lea.vmem %s2, %s165
        $region20: #{tpu_custom_call.1} parent=11 // pred_fallthru
          _
      $region12: #{tpu_custom_call.1} parent=5 // pred_fallthru
        _
      %p167 = scmp.lt.s32.totalorder %s12, 2
      // Predicated region
      $region21: #{tpu_custom_call.1} parent=5 // pred_check
        %p168 = pneg %p167
      $region22: #{tpu_custom_call.1} parent=5 // pred_check_branch
        %170 = sbr.rel (%p168) target = $region24
      $region23: #{tpu_custom_call.1} parent=5 // pred_region
        // Predicated region
        $region25: #{tpu_custom_call.1} parent=23 // pred_check
          %p171 = pneg %p51
        $region26: #{tpu_custom_call.1} parent=23 // pred_check_branch
          %173 = sbr.rel (%p171) target = $region28
        $region27: #{tpu_custom_call.1} parent=23 // pred_region
          %p174 = scmp.lt.s32.totalorder %s19, 1
          %s175 = scalar_select %p174, %s19, 1
          %s176 = smul.addr %s175, 54
          %s177 = smul.addr %s176, 4
          %s178 = scalar_lea.vmem %s0, %s177
        $region28: #{tpu_custom_call.1} parent=23 // pred_fallthru
          _
      $region24: #{tpu_custom_call.1} parent=5 // pred_fallthru
        _
      %p179 = scmp.le.s32.totalorder 1, %s12
      %p180 = scmp.lt.s32.totalorder %s12, 3
      %p181 = pnand %p179, %p180
      %p182 = pneg %p181
      // Predicated region
      $region29: #{tpu_custom_call.1} parent=5 // pred_check
        _
      $region30: #{tpu_custom_call.1} parent=5 // pred_check_branch
        %184 = sbr.rel (%p181) target = $region32
      $region31: #{tpu_custom_call.1} parent=5 // pred_region
        %s185 = ssub.s32 %s12, 1
        %p186 = scmp.lt.s32.totalorder %s22, 1
        %s187 = scalar_select %p186, %s22, 1
        %s188 = smul.addr %s187, 54
        %s189 = smul.addr %s188, 4
        %s190 = scalar_lea.vmem %s0, %s189
        %p191 = pneg %p57
        %p192 = pneg %p54
        %p193 = scmp.lt.s32.totalorder %s23, 0
        %s194 = scalar_select %p193, %s23, 0
        %s195 = smul.addr %s194, 4
        %s196 = scalar_lea.vmem %s1, %s195
        %p197 = pneg %p83
        %p198 = pneg %p80
        %p199 = scmp.lt.s32.totalorder %s23, 0
        %s200 = scalar_select %p199, %s23, 0
        %s201 = scalar_lea.vmem %s2, %s200
        %p202 = pneg %p109
        %p203 = pneg %p106
        %p204 = pneg %p139
        %p205 = pneg %p136
        %s206 = sand.u32 %s126, 1
        %s207 = scalar_lea.sflag [#allocation3], %s206
        %s208 = sand.u32 %s126, 1
        %s209 = smul.addr %s208, 128
        %s210 = scalar_lea.vmem [#allocation2], %s209
        %p211 = scmp.lt.s32.totalorder %s22, 1
        %s212 = scalar_select %p211, %s22, 1
        %s213 = smul.addr %s212, 54
        %s214 = smul.addr %s213, 4
        %s215 = scalar_lea.vmem %s0, %s214
        %p216 = scmp.lt.s32.totalorder %s23, 0
        %s217 = scalar_select %p216, %s23, 0
        %s218 = smul.addr %s217, 4
        %s219 = scalar_lea.vmem %s1, %s218
        %p220 = scmp.lt.s32.totalorder %s23, 0
        %s221 = scalar_select %p220, %s23, 0
        %s222 = scalar_lea.vmem %s2, %s221
        %s223 = smul.u32 16, %s24
        %s225 = smul.u32 %s24, 16
        %s226 = smul.u32 %s225, 3
        %s227 = smul.addr %s226, 4
        %s228 = scalar_lea.vmem %s215, %s227
        %v229 = vld [vmem:[%s228] sm:$0xf]
        %v230 = vld [vmem:[%s228 + $0x4] sm:$0xf]
        %v231 = vld [vmem:[%s228 + $0x8] sm:$0x1]
        %v232 = vld [vmem:[%s228 + $0xc] sm:$0xf]
        %v233 = vld [vmem:[%s228 + $0x10] sm:$0xf]
        %v234 = vld [vmem:[%s228 + $0x14] sm:$0x1]
        %v235 = vld [vmem:[%s228 + $0x18] sm:$0xf]
        %v236 = vld [vmem:[%s228 + $0x1c] sm:$0xf]
        %v237 = vld [vmem:[%s228 + $0x20] sm:$0x1]
        %v238 = vld [vmem:[%s228 + $0x24] sm:$0xf]
        %v239 = vld [vmem:[%s228 + $0x28] sm:$0xf]
        %v240 = vld [vmem:[%s228 + $0x2c] sm:$0x1]
        %v241 = vld [vmem:[%s228 + $0x30] sm:$0xf]
        %v242 = vld [vmem:[%s228 + $0x34] sm:$0xf]
        %v243 = vld [vmem:[%s228 + $0x38] sm:$0x1]
        %v244 = vld [vmem:[%s228 + $0x3c] sm:$0xf]
        %v245 = vld [vmem:[%s228 + $0x40] sm:$0xf]
        %v246 = vld [vmem:[%s228 + $0x44] sm:$0x1]
        %v247 = vld [vmem:[%s228 + $0x48] sm:$0xf]
        %v248 = vld [vmem:[%s228 + $0x4c] sm:$0xf]
        %v249 = vld [vmem:[%s228 + $0x50] sm:$0x1]
        %v250 = vld [vmem:[%s228 + $0x54] sm:$0xf]
        %v251 = vld [vmem:[%s228 + $0x58] sm:$0xf]
        %v252 = vld [vmem:[%s228 + $0x5c] sm:$0x1]
        %v253 = vld [vmem:[%s228 + $0x60] sm:$0xf]
        %v254 = vld [vmem:[%s228 + $0x64] sm:$0xf]
        %v255 = vld [vmem:[%s228 + $0x68] sm:$0x1]
        %v256 = vld [vmem:[%s228 + $0x6c] sm:$0xf]
        %v257 = vld [vmem:[%s228 + $0x70] sm:$0xf]
        %v258 = vld [vmem:[%s228 + $0x74] sm:$0x1]
        %v259 = vld [vmem:[%s228 + $0x78] sm:$0xf]
        %v260 = vld [vmem:[%s228 + $0x7c] sm:$0xf]
        %v261 = vld [vmem:[%s228 + $0x80] sm:$0x1]
        %v262 = vld [vmem:[%s228 + $0x84] sm:$0xf]
        %v263 = vld [vmem:[%s228 + $0x88] sm:$0xf]
        %v264 = vld [vmem:[%s228 + $0x8c] sm:$0x1]
        %v265 = vld [vmem:[%s228 + $0x90] sm:$0xf]
        %v266 = vld [vmem:[%s228 + $0x94] sm:$0xf]
        %v267 = vld [vmem:[%s228 + $0x98] sm:$0x1]
        %v268 = vld [vmem:[%s228 + $0x9c] sm:$0xf]
        %v269 = vld [vmem:[%s228 + $0xa0] sm:$0xf]
        %v270 = vld [vmem:[%s228 + $0xa4] sm:$0x1]
        %v271 = vld [vmem:[%s228 + $0xa8] sm:$0xf]
        %v272 = vld [vmem:[%s228 + $0xac] sm:$0xf]
        %v273 = vld [vmem:[%s228 + $0xb0] sm:$0x1]
        %v274 = vld [vmem:[%s228 + $0xb4] sm:$0xf]
        %v275 = vld [vmem:[%s228 + $0xb8] sm:$0xf]
        %v276 = vld [vmem:[%s228 + $0xbc] sm:$0x1]
        %v277 = vld [vmem:[%s228 + $0xc0] sm:$0xf]
        %v278 = vld [vmem:[%s228 + $0xc4] sm:$0xf]
        %v279 = vld [vmem:[%s228 + $0xc8] sm:$0x1]
        %v280 = vld [vmem:[%s228 + $0xcc] sm:$0xf]
        %v281 = vld [vmem:[%s228 + $0xd0] sm:$0xf]
        %v282 = vld [vmem:[%s228 + $0xd4] sm:$0x1]
        %v315 = vunpack.c.l.b16 %v229
        %v316 = vunpack.c.l.b16 %v230
        %v317 = vunpack.c.l.b16 %v232
        %v318 = vunpack.c.l.b16 %v233
        %v319 = vunpack.c.l.b16 %v235
        %v320 = vunpack.c.l.b16 %v236
        %v321 = vunpack.c.l.b16 %v238
        %v322 = vunpack.c.l.b16 %v239
        %v323 = vunpack.c.l.b16 %v241
        %v324 = vunpack.c.l.b16 %v242
        %v325 = vunpack.c.l.b16 %v244
        %v326 = vunpack.c.l.b16 %v245
        %v327 = vunpack.c.l.b16 %v247
        %v328 = vunpack.c.l.b16 %v248
        %v329 = vunpack.c.l.b16 %v250
        %v330 = vunpack.c.l.b16 %v251
        %v331 = vunpack.c.l.b16 %v253
        %v332 = vunpack.c.l.b16 %v254
        %v333 = vunpack.c.l.b16 %v256
        %v334 = vunpack.c.l.b16 %v257
        %v335 = vunpack.c.l.b16 %v259
        %v336 = vunpack.c.l.b16 %v260
        %v337 = vunpack.c.l.b16 %v262
        %v338 = vunpack.c.l.b16 %v263
        %v339 = vunpack.c.l.b16 %v265
        %v340 = vunpack.c.l.b16 %v266
        %v341 = vunpack.c.l.b16 %v268
        %v342 = vunpack.c.l.b16 %v269
        %v343 = vunpack.c.l.b16 %v271
        %v344 = vunpack.c.l.b16 %v272
        %v345 = vunpack.c.l.b16 %v274
        %v346 = vunpack.c.l.b16 %v275
        %v347 = vpack.c.b16 %v316, %v315
        %v348 = vpack.c.b16 %v318, %v317
        %v349 = vpack.c.b16 %v320, %v319
        %v350 = vpack.c.b16 %v322, %v321
        %v351 = vpack.c.b16 %v324, %v323
        %v352 = vpack.c.b16 %v326, %v325
        %v353 = vpack.c.b16 %v328, %v327
        %v354 = vpack.c.b16 %v330, %v329
        %v355 = vpack.c.b16 %v332, %v331
        %v356 = vpack.c.b16 %v334, %v333
        %v357 = vpack.c.b16 %v336, %v335
        %v358 = vpack.c.b16 %v338, %v337
        %v359 = vpack.c.b16 %v340, %v339
        %v360 = vpack.c.b16 %v342, %v341
        %v361 = vpack.c.b16 %v344, %v343
        %v362 = vpack.c.b16 %v346, %v345
        %v379 = vunpack.c.l.b16 %v231
        %v380 = vunpack.c.l.b16 %v234
        %v381 = vunpack.c.l.b16 %v237
        %v382 = vunpack.c.l.b16 %v240
        %v383 = vunpack.c.l.b16 %v243
        %v384 = vunpack.c.l.b16 %v246
        %v385 = vunpack.c.l.b16 %v249
        %v386 = vunpack.c.l.b16 %v252
        %v387 = vunpack.c.l.b16 %v255
        %v388 = vunpack.c.l.b16 %v258
        %v389 = vunpack.c.l.b16 %v261
        %v390 = vunpack.c.l.b16 %v264
        %v391 = vunpack.c.l.b16 %v267
        %v392 = vunpack.c.l.b16 %v270
        %v393 = vunpack.c.l.b16 %v273
        %v394 = vunpack.c.l.b16 %v276
        %v395 = vpack.c.b16 %v379, %v379
        %v396 = vpack.c.b16 %v380, %v380
        %v397 = vpack.c.b16 %v381, %v381
        %v398 = vpack.c.b16 %v382, %v382
        %v399 = vpack.c.b16 %v383, %v383
        %v400 = vpack.c.b16 %v384, %v384
        %v401 = vpack.c.b16 %v385, %v385
        %v402 = vpack.c.b16 %v386, %v386
        %v403 = vpack.c.b16 %v387, %v387
        %v404 = vpack.c.b16 %v388, %v388
        %v405 = vpack.c.b16 %v389, %v389
        %v406 = vpack.c.b16 %v390, %v390
        %v407 = vpack.c.b16 %v391, %v391
        %v408 = vpack.c.b16 %v392, %v392
        %v409 = vpack.c.b16 %v393, %v393
        %v410 = vpack.c.b16 %v394, %v394
        %vm411 = vsmask.f32 7424
        %v413 = vshrl.u32 %v347, 16
        %v415 = vshll.u32 %v347, 16
        %v417 = vrot.slane %v415, 1
        %v418 = vor.u32 %v413, %v417
        %v420 = vshll.u32 %v395, 16
        %v422 = vrot.slane %v420, 1
        %v423 = vsel %vm411, %v418, %v422
        %v425 = vshrl.u32 %v348, 16
        %v427 = vshll.u32 %v348, 16
        %v429 = vrot.slane %v427, 1
        %v430 = vor.u32 %v425, %v429
        %v432 = vshll.u32 %v396, 16
        %v434 = vrot.slane %v432, 1
        %v435 = vsel %vm411, %v430, %v434
        %v437 = vshrl.u32 %v349, 16
        %v439 = vshll.u32 %v349, 16
        %v441 = vrot.slane %v439, 1
        %v442 = vor.u32 %v437, %v441
        %v444 = vshll.u32 %v397, 16
        %v446 = vrot.slane %v444, 1
        %v447 = vsel %vm411, %v442, %v446
        %v449 = vshrl.u32 %v350, 16
        %v451 = vshll.u32 %v350, 16
        %v453 = vrot.slane %v451, 1
        %v454 = vor.u32 %v449, %v453
        %v456 = vshll.u32 %v398, 16
        %v458 = vrot.slane %v456, 1
        %v459 = vsel %vm411, %v454, %v458
        %v461 = vshrl.u32 %v351, 16
        %v463 = vshll.u32 %v351, 16
        %v465 = vrot.slane %v463, 1
        %v466 = vor.u32 %v461, %v465
        %v468 = vshll.u32 %v399, 16
        %v470 = vrot.slane %v468, 1
        %v471 = vsel %vm411, %v466, %v470
        %v473 = vshrl.u32 %v352, 16
        %v475 = vshll.u32 %v352, 16
        %v477 = vrot.slane %v475, 1
        %v478 = vor.u32 %v473, %v477
        %v480 = vshll.u32 %v400, 16
        %v482 = vrot.slane %v480, 1
        %v483 = vsel %vm411, %v478, %v482
        %v485 = vshrl.u32 %v353, 16
        %v487 = vshll.u32 %v353, 16
        %v489 = vrot.slane %v487, 1
        %v490 = vor.u32 %v485, %v489
        %v492 = vshll.u32 %v401, 16
        %v494 = vrot.slane %v492, 1
        %v495 = vsel %vm411, %v490, %v494
        %v497 = vshrl.u32 %v354, 16
        %v499 = vshll.u32 %v354, 16
        %v501 = vrot.slane %v499, 1
        %v502 = vor.u32 %v497, %v501
        %v504 = vshll.u32 %v402, 16
        %v506 = vrot.slane %v504, 1
        %v507 = vsel %vm411, %v502, %v506
        %v509 = vshrl.u32 %v355, 16
        %v511 = vshll.u32 %v355, 16
        %v513 = vrot.slane %v511, 1
        %v514 = vor.u32 %v509, %v513
        %v516 = vshll.u32 %v403, 16
        %v518 = vrot.slane %v516, 1
        %v519 = vsel %vm411, %v514, %v518
        %v521 = vshrl.u32 %v356, 16
        %v523 = vshll.u32 %v356, 16
        %v525 = vrot.slane %v523, 1
        %v526 = vor.u32 %v521, %v525
        %v528 = vshll.u32 %v404, 16
        %v530 = vrot.slane %v528, 1
        %v531 = vsel %vm411, %v526, %v530
        %v533 = vshrl.u32 %v357, 16
        %v535 = vshll.u32 %v357, 16
        %v537 = vrot.slane %v535, 1
        %v538 = vor.u32 %v533, %v537
        %v540 = vshll.u32 %v405, 16
        %v542 = vrot.slane %v540, 1
        %v543 = vsel %vm411, %v538, %v542
        %v545 = vshrl.u32 %v358, 16
        %v547 = vshll.u32 %v358, 16
        %v549 = vrot.slane %v547, 1
        %v550 = vor.u32 %v545, %v549
        %v552 = vshll.u32 %v406, 16
        %v554 = vrot.slane %v552, 1
        %v555 = vsel %vm411, %v550, %v554
        %v557 = vshrl.u32 %v359, 16
        %v559 = vshll.u32 %v359, 16
        %v561 = vrot.slane %v559, 1
        %v562 = vor.u32 %v557, %v561
        %v564 = vshll.u32 %v407, 16
        %v566 = vrot.slane %v564, 1
        %v567 = vsel %vm411, %v562, %v566
        %v569 = vshrl.u32 %v360, 16
        %v571 = vshll.u32 %v360, 16
        %v573 = vrot.slane %v571, 1
        %v574 = vor.u32 %v569, %v573
        %v576 = vshll.u32 %v408, 16
        %v578 = vrot.slane %v576, 1
        %v579 = vsel %vm411, %v574, %v578
        %v581 = vshrl.u32 %v361, 16
        %v583 = vshll.u32 %v361, 16
        %v585 = vrot.slane %v583, 1
        %v586 = vor.u32 %v581, %v585
        %v588 = vshll.u32 %v409, 16
        %v590 = vrot.slane %v588, 1
        %v591 = vsel %vm411, %v586, %v590
        %v593 = vshrl.u32 %v362, 16
        %v595 = vshll.u32 %v362, 16
        %v597 = vrot.slane %v595, 1
        %v598 = vor.u32 %v593, %v597
        %v600 = vshll.u32 %v410, 16
        %v602 = vrot.slane %v600, 1
        %v603 = vsel %vm411, %v598, %v602
        %604 = vrot.lane.b32.xlu0 %v423, 4
        %v605 = vpop.permute.xlu0 %604
        %606 = vrot.lane.b32.xlu0 %v435, 4
        %v607 = vpop.permute.xlu0 %606
        %608 = vrot.lane.b32.xlu0 %v447, 4
        %v609 = vpop.permute.xlu0 %608
        %610 = vrot.lane.b32.xlu0 %v459, 4
        %v611 = vpop.permute.xlu0 %610
        %612 = vrot.lane.b32.xlu0 %v471, 4
        %v613 = vpop.permute.xlu0 %612
        %614 = vrot.lane.b32.xlu0 %v483, 4
        %v615 = vpop.permute.xlu0 %614
        %616 = vrot.lane.b32.xlu0 %v495, 4
        %v617 = vpop.permute.xlu0 %616
        %618 = vrot.lane.b32.xlu0 %v507, 4
        %v619 = vpop.permute.xlu0 %618
        %620 = vrot.lane.b32.xlu0 %v519, 4
        %v621 = vpop.permute.xlu0 %620
        %622 = vrot.lane.b32.xlu0 %v531, 4
        %v623 = vpop.permute.xlu0 %622
        %624 = vrot.lane.b32.xlu0 %v543, 4
        %v625 = vpop.permute.xlu0 %624
        %626 = vrot.lane.b32.xlu0 %v555, 4
        %v627 = vpop.permute.xlu0 %626
        %628 = vrot.lane.b32.xlu0 %v567, 4
        %v629 = vpop.permute.xlu0 %628
        %630 = vrot.lane.b32.xlu0 %v579, 4
        %v631 = vpop.permute.xlu0 %630
        %632 = vrot.lane.b32.xlu0 %v591, 4
        %v633 = vpop.permute.xlu0 %632
        %634 = vrot.lane.b32.xlu0 %v603, 4
        %v635 = vpop.permute.xlu0 %634
        %vm636 = vcmask 1046528
        %v637 = vrot.slane %v347, 1
        %v638 = vrot.slane %v395, 1
        %v639 = vsel %vm636, %v637, %v638
        %v640 = vrot.slane %v348, 1
        %v641 = vrot.slane %v396, 1
        %v642 = vsel %vm636, %v640, %v641
        %v643 = vrot.slane %v349, 1
        %v644 = vrot.slane %v397, 1
        %v645 = vsel %vm636, %v643, %v644
        %v646 = vrot.slane %v350, 1
        %v647 = vrot.slane %v398, 1
        %v648 = vsel %vm636, %v646, %v647
        %v649 = vrot.slane %v351, 1
        %v650 = vrot.slane %v399, 1
        %v651 = vsel %vm636, %v649, %v650
        %v652 = vrot.slane %v352, 1
        %v653 = vrot.slane %v400, 1
        %v654 = vsel %vm636, %v652, %v653
        %v655 = vrot.slane %v353, 1
        %v656 = vrot.slane %v401, 1
        %v657 = vsel %vm636, %v655, %v656
        %v658 = vrot.slane %v354, 1
        %v659 = vrot.slane %v402, 1
        %v660 = vsel %vm636, %v658, %v659
        %v661 = vrot.slane %v355, 1
        %v662 = vrot.slane %v403, 1
        %v663 = vsel %vm636, %v661, %v662
        %v664 = vrot.slane %v356, 1
        %v665 = vrot.slane %v404, 1
        %v666 = vsel %vm636, %v664, %v665
        %v667 = vrot.slane %v357, 1
        %v668 = vrot.slane %v405, 1
        %v669 = vsel %vm636, %v667, %v668
        %v670 = vrot.slane %v358, 1
        %v671 = vrot.slane %v406, 1
        %v672 = vsel %vm636, %v670, %v671
        %v673 = vrot.slane %v359, 1
        %v674 = vrot.slane %v407, 1
        %v675 = vsel %vm636, %v673, %v674
        %v676 = vrot.slane %v360, 1
        %v677 = vrot.slane %v408, 1
        %v678 = vsel %vm636, %v676, %v677
        %v679 = vrot.slane %v361, 1
        %v680 = vrot.slane %v409, 1
        %v681 = vsel %vm636, %v679, %v680
        %v682 = vrot.slane %v362, 1
        %v683 = vrot.slane %v410, 1
        %v684 = vsel %vm636, %v682, %v683
        %685 = vrot.lane.b32.xlu0 %v639, 8
        %v686 = vpop.permute.xlu0 %685
        %687 = vrot.lane.b32.xlu0 %v642, 8
        %v688 = vpop.permute.xlu0 %687
        %689 = vrot.lane.b32.xlu0 %v645, 8
        %v690 = vpop.permute.xlu0 %689
        %691 = vrot.lane.b32.xlu0 %v648, 8
        %v692 = vpop.permute.xlu0 %691
        %693 = vrot.lane.b32.xlu0 %v651, 8
        %v694 = vpop.permute.xlu0 %693
        %695 = vrot.lane.b32.xlu0 %v654, 8
        %v696 = vpop.permute.xlu0 %695
        %697 = vrot.lane.b32.xlu0 %v657, 8
        %v698 = vpop.permute.xlu0 %697
        %699 = vrot.lane.b32.xlu0 %v660, 8
        %v700 = vpop.permute.xlu0 %699
        %701 = vrot.lane.b32.xlu0 %v663, 8
        %v702 = vpop.permute.xlu0 %701
        %703 = vrot.lane.b32.xlu0 %v666, 8
        %v704 = vpop.permute.xlu0 %703
        %705 = vrot.lane.b32.xlu0 %v669, 8
        %v706 = vpop.permute.xlu0 %705
        %707 = vrot.lane.b32.xlu0 %v672, 8
        %v708 = vpop.permute.xlu0 %707
        %709 = vrot.lane.b32.xlu0 %v675, 8
        %v710 = vpop.permute.xlu0 %709
        %711 = vrot.lane.b32.xlu0 %v678, 8
        %v712 = vpop.permute.xlu0 %711
        %713 = vrot.lane.b32.xlu0 %v681, 8
        %v714 = vpop.permute.xlu0 %713
        %715 = vrot.lane.b32.xlu0 %v684, 8
        %v716 = vpop.permute.xlu0 %715
        %v719 = vunpack.c.l.b16 %v277
        %v720 = vunpack.c.l.b16 %v278
        %v721 = vpack.c.b16 %v720, %v719
        %722 = vrot.lane.b32.xlu0 %v348, 12
        %v723 = vpop.permute.xlu0 %722
        %724 = vrot.lane.b32.xlu0 %v349, 12
        %v725 = vpop.permute.xlu0 %724
        %726 = vrot.lane.b32.xlu0 %v350, 12
        %v727 = vpop.permute.xlu0 %726
        %728 = vrot.lane.b32.xlu0 %v351, 12
        %v729 = vpop.permute.xlu0 %728
        %730 = vrot.lane.b32.xlu0 %v352, 12
        %v731 = vpop.permute.xlu0 %730
        %732 = vrot.lane.b32.xlu0 %v353, 12
        %v733 = vpop.permute.xlu0 %732
        %734 = vrot.lane.b32.xlu0 %v354, 12
        %v735 = vpop.permute.xlu0 %734
        %736 = vrot.lane.b32.xlu0 %v355, 12
        %v737 = vpop.permute.xlu0 %736
        %738 = vrot.lane.b32.xlu0 %v356, 12
        %v739 = vpop.permute.xlu0 %738
        %740 = vrot.lane.b32.xlu0 %v357, 12
        %v741 = vpop.permute.xlu0 %740
        %742 = vrot.lane.b32.xlu0 %v358, 12
        %v743 = vpop.permute.xlu0 %742
        %744 = vrot.lane.b32.xlu0 %v359, 12
        %v745 = vpop.permute.xlu0 %744
        %746 = vrot.lane.b32.xlu0 %v360, 12
        %v747 = vpop.permute.xlu0 %746
        %748 = vrot.lane.b32.xlu0 %v361, 12
        %v749 = vpop.permute.xlu0 %748
        %750 = vrot.lane.b32.xlu0 %v362, 12
        %v751 = vpop.permute.xlu0 %750
        %752 = vrot.lane.b32.xlu0 %v721, 12
        %v753 = vpop.permute.xlu0 %752
        %v755 = vunpack.c.l.b16 %v279
        %v756 = vpack.c.b16 %v755, %v755
        %v758 = vshrl.u32 %v721, 16
        %v760 = vshll.u32 %v721, 16
        %v762 = vrot.slane %v760, 1
        %v763 = vor.u32 %v758, %v762
        %v765 = vshll.u32 %v756, 16
        %v767 = vrot.slane %v765, 1
        %v768 = vsel %vm411, %v763, %v767
        %769 = vrot.lane.b32.xlu0 %v435, 16
        %v770 = vpop.permute.xlu0 %769
        %771 = vrot.lane.b32.xlu0 %v447, 16
        %v772 = vpop.permute.xlu0 %771
        %773 = vrot.lane.b32.xlu0 %v459, 16
        %v774 = vpop.permute.xlu0 %773
        %775 = vrot.lane.b32.xlu0 %v471, 16
        %v776 = vpop.permute.xlu0 %775
        %777 = vrot.lane.b32.xlu0 %v483, 16
        %v778 = vpop.permute.xlu0 %777
        %779 = vrot.lane.b32.xlu0 %v495, 16
        %v780 = vpop.permute.xlu0 %779
        %781 = vrot.lane.b32.xlu0 %v507, 16
        %v782 = vpop.permute.xlu0 %781
        %783 = vrot.lane.b32.xlu0 %v519, 16
        %v784 = vpop.permute.xlu0 %783
        %785 = vrot.lane.b32.xlu0 %v531, 16
        %v786 = vpop.permute.xlu0 %785
        %787 = vrot.lane.b32.xlu0 %v543, 16
        %v788 = vpop.permute.xlu0 %787
        %789 = vrot.lane.b32.xlu0 %v555, 16
        %v790 = vpop.permute.xlu0 %789
        %791 = vrot.lane.b32.xlu0 %v567, 16
        %v792 = vpop.permute.xlu0 %791
        %793 = vrot.lane.b32.xlu0 %v579, 16
        %v794 = vpop.permute.xlu0 %793
        %795 = vrot.lane.b32.xlu0 %v591, 16
        %v796 = vpop.permute.xlu0 %795
        %797 = vrot.lane.b32.xlu0 %v603, 16
        %v798 = vpop.permute.xlu0 %797
        %799 = vrot.lane.b32.xlu0 %v768, 16
        %v800 = vpop.permute.xlu0 %799
        %v801 = vrot.slane %v721, 1
        %v802 = vrot.slane %v756, 1
        %v803 = vsel %vm636, %v801, %v802
        %804 = vrot.lane.b32.xlu0 %v642, 20
        %v805 = vpop.permute.xlu0 %804
        %806 = vrot.lane.b32.xlu0 %v645, 20
        %v807 = vpop.permute.xlu0 %806
        %808 = vrot.lane.b32.xlu0 %v648, 20
        %v809 = vpop.permute.xlu0 %808
        %810 = vrot.lane.b32.xlu0 %v651, 20
        %v811 = vpop.permute.xlu0 %810
        %812 = vrot.lane.b32.xlu0 %v654, 20
        %v813 = vpop.permute.xlu0 %812
        %814 = vrot.lane.b32.xlu0 %v657, 20
        %v815 = vpop.permute.xlu0 %814
        %816 = vrot.lane.b32.xlu0 %v660, 20
        %v817 = vpop.permute.xlu0 %816
        %818 = vrot.lane.b32.xlu0 %v663, 20
        %v819 = vpop.permute.xlu0 %818
        %820 = vrot.lane.b32.xlu0 %v666, 20
        %v821 = vpop.permute.xlu0 %820
        %822 = vrot.lane.b32.xlu0 %v669, 20
        %v823 = vpop.permute.xlu0 %822
        %824 = vrot.lane.b32.xlu0 %v672, 20
        %v825 = vpop.permute.xlu0 %824
        %826 = vrot.lane.b32.xlu0 %v675, 20
        %v827 = vpop.permute.xlu0 %826
        %828 = vrot.lane.b32.xlu0 %v678, 20
        %v829 = vpop.permute.xlu0 %828
        %830 = vrot.lane.b32.xlu0 %v681, 20
        %v831 = vpop.permute.xlu0 %830
        %832 = vrot.lane.b32.xlu0 %v684, 20
        %v833 = vpop.permute.xlu0 %832
        %834 = vrot.lane.b32.xlu0 %v803, 20
        %v835 = vpop.permute.xlu0 %834
        %v838 = vunpack.c.l.b16 %v280
        %v839 = vunpack.c.l.b16 %v281
        %v840 = vpack.c.b16 %v839, %v838
        %841 = vrot.lane.b32.xlu0 %v349, 24
        %v842 = vpop.permute.xlu0 %841
        %843 = vrot.lane.b32.xlu0 %v350, 24
        %v844 = vpop.permute.xlu0 %843
        %845 = vrot.lane.b32.xlu0 %v351, 24
        %v846 = vpop.permute.xlu0 %845
        %847 = vrot.lane.b32.xlu0 %v352, 24
        %v848 = vpop.permute.xlu0 %847
        %849 = vrot.lane.b32.xlu0 %v353, 24
        %v850 = vpop.permute.xlu0 %849
        %851 = vrot.lane.b32.xlu0 %v354, 24
        %v852 = vpop.permute.xlu0 %851
        %853 = vrot.lane.b32.xlu0 %v355, 24
        %v854 = vpop.permute.xlu0 %853
        %855 = vrot.lane.b32.xlu0 %v356, 24
        %v856 = vpop.permute.xlu0 %855
        %857 = vrot.lane.b32.xlu0 %v357, 24
        %v858 = vpop.permute.xlu0 %857
        %859 = vrot.lane.b32.xlu0 %v358, 24
        %v860 = vpop.permute.xlu0 %859
        %861 = vrot.lane.b32.xlu0 %v359, 24
        %v862 = vpop.permute.xlu0 %861
        %863 = vrot.lane.b32.xlu0 %v360, 24
        %v864 = vpop.permute.xlu0 %863
        %865 = vrot.lane.b32.xlu0 %v361, 24
        %v866 = vpop.permute.xlu0 %865
        %867 = vrot.lane.b32.xlu0 %v362, 24
        %v868 = vpop.permute.xlu0 %867
        %869 = vrot.lane.b32.xlu0 %v721, 24
        %v870 = vpop.permute.xlu0 %869
        %871 = vrot.lane.b32.xlu0 %v840, 24
        %v872 = vpop.permute.xlu0 %871
        %v874 = vunpack.c.l.b16 %v282
        %v875 = vpack.c.b16 %v874, %v874
        %v877 = vshrl.u32 %v840, 16
        %v879 = vshll.u32 %v840, 16
        %v881 = vrot.slane %v879, 1
        %v882 = vor.u32 %v877, %v881
        %v884 = vshll.u32 %v875, 16
        %v886 = vrot.slane %v884, 1
        %v887 = vsel %vm411, %v882, %v886
        %888 = vrot.lane.b32.xlu0 %v447, 28
        %v889 = vpop.permute.xlu0 %888
        %890 = vrot.lane.b32.xlu0 %v459, 28
        %v891 = vpop.permute.xlu0 %890
        %892 = vrot.lane.b32.xlu0 %v471, 28
        %v893 = vpop.permute.xlu0 %892
        %894 = vrot.lane.b32.xlu0 %v483, 28
        %v895 = vpop.permute.xlu0 %894
        %896 = vrot.lane.b32.xlu0 %v495, 28
        %v897 = vpop.permute.xlu0 %896
        %898 = vrot.lane.b32.xlu0 %v507, 28
        %v899 = vpop.permute.xlu0 %898
        %900 = vrot.lane.b32.xlu0 %v519, 28
        %v901 = vpop.permute.xlu0 %900
        %902 = vrot.lane.b32.xlu0 %v531, 28
        %v903 = vpop.permute.xlu0 %902
        %904 = vrot.lane.b32.xlu0 %v543, 28
        %v905 = vpop.permute.xlu0 %904
        %906 = vrot.lane.b32.xlu0 %v555, 28
        %v907 = vpop.permute.xlu0 %906
        %908 = vrot.lane.b32.xlu0 %v567, 28
        %v909 = vpop.permute.xlu0 %908
        %910 = vrot.lane.b32.xlu0 %v579, 28
        %v911 = vpop.permute.xlu0 %910
        %912 = vrot.lane.b32.xlu0 %v591, 28
        %v913 = vpop.permute.xlu0 %912
        %914 = vrot.lane.b32.xlu0 %v603, 28
        %v915 = vpop.permute.xlu0 %914
        %916 = vrot.lane.b32.xlu0 %v768, 28
        %v917 = vpop.permute.xlu0 %916
        %918 = vrot.lane.b32.xlu0 %v887, 28
        %v919 = vpop.permute.xlu0 %918
        %v920 = vrot.slane %v840, 1
        %v921 = vrot.slane %v875, 1
        %v922 = vsel %vm636, %v920, %v921
        %923 = vrot.lane.b32.xlu0 %v645, 32
        %v924 = vpop.permute.xlu0 %923
        %925 = vrot.lane.b32.xlu0 %v648, 32
        %v926 = vpop.permute.xlu0 %925
        %927 = vrot.lane.b32.xlu0 %v651, 32
        %v928 = vpop.permute.xlu0 %927
        %929 = vrot.lane.b32.xlu0 %v654, 32
        %v930 = vpop.permute.xlu0 %929
        %931 = vrot.lane.b32.xlu0 %v657, 32
        %v932 = vpop.permute.xlu0 %931
        %933 = vrot.lane.b32.xlu0 %v660, 32
        %v934 = vpop.permute.xlu0 %933
        %935 = vrot.lane.b32.xlu0 %v663, 32
        %v936 = vpop.permute.xlu0 %935
        %937 = vrot.lane.b32.xlu0 %v666, 32
        %v938 = vpop.permute.xlu0 %937
        %939 = vrot.lane.b32.xlu0 %v669, 32
        %v940 = vpop.permute.xlu0 %939
        %941 = vrot.lane.b32.xlu0 %v672, 32
        %v942 = vpop.permute.xlu0 %941
        %943 = vrot.lane.b32.xlu0 %v675, 32
        %v944 = vpop.permute.xlu0 %943
        %945 = vrot.lane.b32.xlu0 %v678, 32
        %v946 = vpop.permute.xlu0 %945
        %947 = vrot.lane.b32.xlu0 %v681, 32
        %v948 = vpop.permute.xlu0 %947
        %949 = vrot.lane.b32.xlu0 %v684, 32
        %v950 = vpop.permute.xlu0 %949
        %951 = vrot.lane.b32.xlu0 %v803, 32
        %v952 = vpop.permute.xlu0 %951
        %953 = vrot.lane.b32.xlu0 %v922, 32
        %v954 = vpop.permute.xlu0 %953
        %vm955 = vcmask 31744
        %v957 = vsel %vm955, %v347, %v605
        %v959 = vsel %vm955, %v348, %v607
        %v961 = vsel %vm955, %v349, %v609
        %v963 = vsel %vm955, %v350, %v611
        %v965 = vsel %vm955, %v351, %v613
        %v967 = vsel %vm955, %v352, %v615
        %v969 = vsel %vm955, %v353, %v617
        %v971 = vsel %vm955, %v354, %v619
        %v973 = vsel %vm955, %v355, %v621
        %v975 = vsel %vm955, %v356, %v623
        %v977 = vsel %vm955, %v357, %v625
        %v979 = vsel %vm955, %v358, %v627
        %v981 = vsel %vm955, %v359, %v629
        %v983 = vsel %vm955, %v360, %v631
        %v985 = vsel %vm955, %v361, %v633
        %v987 = vsel %vm955, %v362, %v635
        %vm988 = vcmask 64512
        %v990 = vsel %vm988, %v957, %v686
        %v992 = vsel %vm988, %v959, %v688
        %v994 = vsel %vm988, %v961, %v690
        %v996 = vsel %vm988, %v963, %v692
        %v998 = vsel %vm988, %v965, %v694
        %v1000 = vsel %vm988, %v967, %v696
        %v1002 = vsel %vm988, %v969, %v698
        %v1004 = vsel %vm988, %v971, %v700
        %v1006 = vsel %vm988, %v973, %v702
        %v1008 = vsel %vm988, %v975, %v704
        %v1010 = vsel %vm988, %v977, %v706
        %v1012 = vsel %vm988, %v979, %v708
        %v1014 = vsel %vm988, %v981, %v710
        %v1016 = vsel %vm988, %v983, %v712
        %v1018 = vsel %vm988, %v985, %v714
        %v1020 = vsel %vm988, %v987, %v716
        %vm1021 = vcmask 97280
        %v1023 = vsel %vm1021, %v990, %v723
        %v1025 = vsel %vm1021, %v992, %v725
        %v1027 = vsel %vm1021, %v994, %v727
        %v1029 = vsel %vm1021, %v996, %v729
        %v1031 = vsel %vm1021, %v998, %v731
        %v1033 = vsel %vm1021, %v1000, %v733
        %v1035 = vsel %vm1021, %v1002, %v735
        %v1037 = vsel %vm1021, %v1004, %v737
        %v1039 = vsel %vm1021, %v1006, %v739
        %v1041 = vsel %vm1021, %v1008, %v741
        %v1043 = vsel %vm1021, %v1010, %v743
        %v1045 = vsel %vm1021, %v1012, %v745
        %v1047 = vsel %vm1021, %v1014, %v747
        %v1049 = vsel %vm1021, %v1016, %v749
        %v1051 = vsel %vm1021, %v1018, %v751
        %v1053 = vsel %vm1021, %v1020, %v753
        %vm1054 = vcmask 130048
        %v1056 = vsel %vm1054, %v1023, %v770
        %v1058 = vsel %vm1054, %v1025, %v772
        %v1060 = vsel %vm1054, %v1027, %v774
        %v1062 = vsel %vm1054, %v1029, %v776
        %v1064 = vsel %vm1054, %v1031, %v778
        %v1066 = vsel %vm1054, %v1033, %v780
        %v1068 = vsel %vm1054, %v1035, %v782
        %v1070 = vsel %vm1054, %v1037, %v784
        %v1072 = vsel %vm1054, %v1039, %v786
        %v1074 = vsel %vm1054, %v1041, %v788
        %v1076 = vsel %vm1054, %v1043, %v790
        %v1078 = vsel %vm1054, %v1045, %v792
        %v1080 = vsel %vm1054, %v1047, %v794
        %v1082 = vsel %vm1054, %v1049, %v796
        %v1084 = vsel %vm1054, %v1051, %v798
        %v1086 = vsel %vm1054, %v1053, %v800
        %vm1087 = vcmask 162816
        %v1089 = vsel %vm1087, %v1056, %v805
        %v1091 = vsel %vm1087, %v1058, %v807
        %v1093 = vsel %vm1087, %v1060, %v809
        %v1095 = vsel %vm1087, %v1062, %v811
        %v1097 = vsel %vm1087, %v1064, %v813
        %v1099 = vsel %vm1087, %v1066, %v815
        %v1101 = vsel %vm1087, %v1068, %v817
        %v1103 = vsel %vm1087, %v1070, %v819
        %v1105 = vsel %vm1087, %v1072, %v821
        %v1107 = vsel %vm1087, %v1074, %v823
        %v1109 = vsel %vm1087, %v1076, %v825
        %v1111 = vsel %vm1087, %v1078, %v827
        %v1113 = vsel %vm1087, %v1080, %v829
        %v1115 = vsel %vm1087, %v1082, %v831
        %v1117 = vsel %vm1087, %v1084, %v833
        %v1119 = vsel %vm1087, %v1086, %v835
        %vm1120 = vcmask 195584
        %v1122 = vsel %vm1120, %v1089, %v842
        %v1124 = vsel %vm1120, %v1091, %v844
        %v1126 = vsel %vm1120, %v1093, %v846
        %v1128 = vsel %vm1120, %v1095, %v848
        %v1130 = vsel %vm1120, %v1097, %v850
        %v1132 = vsel %vm1120, %v1099, %v852
        %v1134 = vsel %vm1120, %v1101, %v854
        %v1136 = vsel %vm1120, %v1103, %v856
        %v1138 = vsel %vm1120, %v1105, %v858
        %v1140 = vsel %vm1120, %v1107, %v860
        %v1142 = vsel %vm1120, %v1109, %v862
        %v1144 = vsel %vm1120, %v1111, %v864
        %v1146 = vsel %vm1120, %v1113, %v866
        %v1148 = vsel %vm1120, %v1115, %v868
        %v1150 = vsel %vm1120, %v1117, %v870
        %v1152 = vsel %vm1120, %v1119, %v872
        %vm1153 = vcmask 228352
        %v1155 = vsel %vm1153, %v1122, %v889
        %v1157 = vsel %vm1153, %v1124, %v891
        %v1159 = vsel %vm1153, %v1126, %v893
        %v1161 = vsel %vm1153, %v1128, %v895
        %v1163 = vsel %vm1153, %v1130, %v897
        %v1165 = vsel %vm1153, %v1132, %v899
        %v1167 = vsel %vm1153, %v1134, %v901
        %v1169 = vsel %vm1153, %v1136, %v903
        %v1171 = vsel %vm1153, %v1138, %v905
        %v1173 = vsel %vm1153, %v1140, %v907
        %v1175 = vsel %vm1153, %v1142, %v909
        %v1177 = vsel %vm1153, %v1144, %v911
        %v1179 = vsel %vm1153, %v1146, %v913
        %v1181 = vsel %vm1153, %v1148, %v915
        %v1183 = vsel %vm1153, %v1150, %v917
        %v1185 = vsel %vm1153, %v1152, %v919
        %vm1186 = vcmask 261120
        %v1188 = vsel %vm1186, %v1155, %v924
        %v1190 = vsel %vm1186, %v1157, %v926
        %v1192 = vsel %vm1186, %v1159, %v928
        %v1194 = vsel %vm1186, %v1161, %v930
        %v1196 = vsel %vm1186, %v1163, %v932
        %v1198 = vsel %vm1186, %v1165, %v934
        %v1200 = vsel %vm1186, %v1167, %v936
        %v1202 = vsel %vm1186, %v1169, %v938
        %v1204 = vsel %vm1186, %v1171, %v940
        %v1206 = vsel %vm1186, %v1173, %v942
        %v1208 = vsel %vm1186, %v1175, %v944
        %v1210 = vsel %vm1186, %v1177, %v946
        %v1212 = vsel %vm1186, %v1179, %v948
        %v1214 = vsel %vm1186, %v1181, %v950
        %v1216 = vsel %vm1186, %v1183, %v952
        %v1218 = vsel %vm1186, %v1185, %v954
        %v1219 = vld [vmem:[%s219] sm:$0xf]
        %v1220 = vld [vmem:[%s219 + $0x4] sm:$0xf]
        %v1221 = vld [vmem:[%s219 + $0x8] sm:$0xf]
        %v1222 = vld [vmem:[%s219 + $0xc] sm:$0xf]
        %v1223 = vld [vmem:[%s219 + $0x10] sm:$0x3]
        %v1224 = vld [vmem:[%s222] sm:$0x1]
        %v1226 = vlaneseq
        %v1227 = vshrl.u32 %v1226, 7
        %v1228 = vsub.s32 0, %v1227
        %v1229 = vrot.slane %v1224, %v1228
        %v1236 = vunpack.c.l.b16 %v1219
        %v1237 = vunpack.c.l.b16 %v1220
        %v1238 = vunpack.c.l.b16 %v1221
        %v1239 = vunpack.c.l.b16 %v1222
        %v1240 = vunpack.c.l.b16 %v1223
        %v1241 = vpack.c.b16 %v1237, %v1236
        %v1242 = vpack.c.b16 %v1239, %v1238
        %v1243 = vpack.c.b16 %v1240, %v1240
        %vm1246 = vcmask 293888
        %v1247 = vsel %vm1246, %v1188, 0
        %v1249 = vsel %vm1246, %v1190, 0
        %v1251 = vsel %vm1246, %v1192, 0
        %v1253 = vsel %vm1246, %v1194, 0
        %v1255 = vsel %vm1246, %v1196, 0
        %v1257 = vsel %vm1246, %v1198, 0
        %v1259 = vsel %vm1246, %v1200, 0
        %v1261 = vsel %vm1246, %v1202, 0
        %v1263 = vsel %vm1246, %v1204, 0
        %v1265 = vsel %vm1246, %v1206, 0
        %v1267 = vsel %vm1246, %v1208, 0
        %v1269 = vsel %vm1246, %v1210, 0
        %v1271 = vsel %vm1246, %v1212, 0
        %v1273 = vsel %vm1246, %v1214, 0
        %v1275 = vsel %vm1246, %v1216, 0
        %v1277 = vsel %vm1246, %v1218, 0
        %vm1279 = vcmask 1041408
        %v1281 = vsel %vm1279, %v1243, 0
        %1283 = vmatprep.subr.bf16.mxu0 0
        %1284 = vmatpush1.bf16.msra.mxu0 %v1241
        %1285 = vmatprep.subr.bf16.mxu0 0
        %1286 = vmatpush1.bf16.msra.mxu0 %v1242
        %1287 = vmatprep.subr.bf16.mxu0 0
        %1288 = vmatpush1.bf16.msra.mxu0 %v1281
        %1289 = vmatprep.subr.bf16.mxu0 0
        %1290 = vmatpush1.bf16.msra.mxu0 0
        %1291 = vmatprep.subr.bf16.mxu0 0
        %1292 = vmatpush1.bf16.msra.mxu0 0
        %1293 = vmatprep.subr.bf16.mxu0 0
        %1294 = vmatpush1.bf16.msra.mxu0 0
        %1295 = vmatprep.subr.bf16.mxu0 0
        %1296 = vmatpush1.bf16.msra.mxu0 0
        %1297 = vmatprep.subr.bf16.mxu0 0
        %1298 = vmatpush1.bf16.msra.mxu0 0
        %1299 = vmatprep.subr.bf16.mxu0 0
        %1300 = vmatpush1.bf16.msra.mxu0 0
        %1301 = vmatprep.subr.bf16.mxu0 0
        %1302 = vmatpush1.bf16.msra.mxu0 0
        %1303 = vmatprep.subr.bf16.mxu0 0
        %1304 = vmatpush1.bf16.msra.mxu0 0
        %1305 = vmatprep.subr.bf16.mxu0 0
        %1306 = vmatpush1.bf16.msra.mxu0 0
        %1307 = vmatprep.subr.bf16.mxu0 0
        %1308 = vmatpush1.bf16.msra.mxu0 0
        %1309 = vmatprep.subr.bf16.mxu0 0
        %1310 = vmatpush1.bf16.msra.mxu0 0
        %1311 = vmatprep.subr.bf16.mxu0 0
        %1312 = vmatpush1.bf16.msra.mxu0 0
        %1313 = vmatprep.subr.bf16.mxu0 0
        %1314 = vmatpush1.bf16.msra.mxu0 0
        %1315 = vmatprep.mubr.bf16.mxu0 0
        %1316 = vmatmul.mubr.bf16.gmra.mrb[0].mxu0 %v1247
        %v1317 = vpop.f32.mrb[0].mxu0
        %v1318 = vadd.f32 %v1229, %v1317
        %v1319 = vpop.f32.mrb[0].mxu0
        %v1320 = vpop.f32.mrb[0].mxu0
        %v1321 = vadd.f32 %v1229, %v1320
        %v1322 = vpop.f32.mrb[0].mxu0
        %1323 = vmatprep.mubr.bf16.mxu0 0
        %1324 = vmatmul.mubr.bf16.gmra.mrb[0].mxu0 %v1249
        %v1325 = vpop.f32.mrb[0].mxu0
        %v1326 = vadd.f32 %v1229, %v1325
        %v1327 = vpop.f32.mrb[0].mxu0
        %v1328 = vpop.f32.mrb[0].mxu0
        %v1329 = vadd.f32 %v1229, %v1328
        %v1330 = vpop.f32.mrb[0].mxu0
        %1331 = vmatprep.mubr.bf16.mxu0 0
        %1332 = vmatmul.mubr.bf16.gmra.mrb[0].mxu0 %v1251
        %v1333 = vpop.f32.mrb[0].mxu0
        %v1334 = vadd.f32 %v1229, %v1333
        %v1335 = vpop.f32.mrb[0].mxu0
        %v1336 = vpop.f32.mrb[0].mxu0
        %v1337 = vadd.f32 %v1229, %v1336
        %v1338 = vpop.f32.mrb[0].mxu0
        %1339 = vmatprep.mubr.bf16.mxu0 0
        %1340 = vmatmul.mubr.bf16.gmra.mrb[0].mxu0 %v1253
        %v1341 = vpop.f32.mrb[0].mxu0
        %v1342 = vadd.f32 %v1229, %v1341
        %v1343 = vpop.f32.mrb[0].mxu0
        %v1344 = vpop.f32.mrb[0].mxu0
        %v1345 = vadd.f32 %v1229, %v1344
        %v1346 = vpop.f32.mrb[0].mxu0
        %1347 = vmatprep.mubr.bf16.mxu0 0
        %1348 = vmatmul.mubr.bf16.gmra.mrb[0].mxu0 %v1255
        %v1349 = vpop.f32.mrb[0].mxu0
        %v1350 = vadd.f32 %v1229, %v1349
        %v1351 = vpop.f32.mrb[0].mxu0
        %v1352 = vpop.f32.mrb[0].mxu0
        %v1353 = vadd.f32 %v1229, %v1352
        %v1354 = vpop.f32.mrb[0].mxu0
        %1355 = vmatprep.mubr.bf16.mxu0 0
        %1356 = vmatmul.mubr.bf16.gmra.mrb[0].mxu0 %v1257
        %v1357 = vpop.f32.mrb[0].mxu0
        %v1358 = vadd.f32 %v1229, %v1357
        %v1359 = vpop.f32.mrb[0].mxu0
        %v1360 = vpop.f32.mrb[0].mxu0
        %v1361 = vadd.f32 %v1229, %v1360
        %v1362 = vpop.f32.mrb[0].mxu0
        %1363 = vmatprep.mubr.bf16.mxu0 0
        %1364 = vmatmul.mubr.bf16.gmra.mrb[0].mxu0 %v1259
        %v1365 = vpop.f32.mrb[0].mxu0
        %v1366 = vadd.f32 %v1229, %v1365
        %v1367 = vpop.f32.mrb[0].mxu0
        %v1368 = vpop.f32.mrb[0].mxu0
        %v1369 = vadd.f32 %v1229, %v1368
        %v1370 = vpop.f32.mrb[0].mxu0
        %1371 = vmatprep.mubr.bf16.mxu0 0
        %1372 = vmatmul.mubr.bf16.gmra.mrb[0].mxu0 %v1261
        %v1373 = vpop.f32.mrb[0].mxu0
        %v1374 = vadd.f32 %v1229, %v1373
        %v1375 = vpop.f32.mrb[0].mxu0
        %v1376 = vpop.f32.mrb[0].mxu0
        %v1377 = vadd.f32 %v1229, %v1376
        %v1378 = vpop.f32.mrb[0].mxu0
        %1379 = vmatprep.mubr.bf16.mxu0 0
        %1380 = vmatmul.mubr.bf16.gmra.mrb[0].mxu0 %v1263
        %v1381 = vpop.f32.mrb[0].mxu0
        %v1382 = vadd.f32 %v1229, %v1381
        %v1383 = vpop.f32.mrb[0].mxu0
        %v1384 = vpop.f32.mrb[0].mxu0
        %v1385 = vadd.f32 %v1229, %v1384
        %v1386 = vpop.f32.mrb[0].mxu0
        %1387 = vmatprep.mubr.bf16.mxu0 0
        %1388 = vmatmul.mubr.bf16.gmra.mrb[0].mxu0 %v1265
        %v1389 = vpop.f32.mrb[0].mxu0
        %v1390 = vadd.f32 %v1229, %v1389
        %v1391 = vpop.f32.mrb[0].mxu0
        %v1392 = vpop.f32.mrb[0].mxu0
        %v1393 = vadd.f32 %v1229, %v1392
        %v1394 = vpop.f32.mrb[0].mxu0
        %1395 = vmatprep.mubr.bf16.mxu0 0
        %1396 = vmatmul.mubr.bf16.gmra.mrb[0].mxu0 %v1267
        %v1397 = vpop.f32.mrb[0].mxu0
        %v1398 = vadd.f32 %v1229, %v1397
        %v1399 = vpop.f32.mrb[0].mxu0
        %v1400 = vpop.f32.mrb[0].mxu0
        %v1401 = vadd.f32 %v1229, %v1400
        %v1402 = vpop.f32.mrb[0].mxu0
        %1403 = vmatprep.mubr.bf16.mxu0 0
        %1404 = vmatmul.mubr.bf16.gmra.mrb[0].mxu0 %v1269
        %v1405 = vpop.f32.mrb[0].mxu0
        %v1406 = vadd.f32 %v1229, %v1405
        %v1407 = vpop.f32.mrb[0].mxu0
        %v1408 = vpop.f32.mrb[0].mxu0
        %v1409 = vadd.f32 %v1229, %v1408
        %v1410 = vpop.f32.mrb[0].mxu0
        %1411 = vmatprep.mubr.bf16.mxu0 0
        %1412 = vmatmul.mubr.bf16.gmra.mrb[0].mxu0 %v1271
        %v1413 = vpop.f32.mrb[0].mxu0
        %v1414 = vadd.f32 %v1229, %v1413
        %v1415 = vpop.f32.mrb[0].mxu0
        %v1416 = vpop.f32.mrb[0].mxu0
        %v1417 = vadd.f32 %v1229, %v1416
        %v1418 = vpop.f32.mrb[0].mxu0
        %1419 = vmatprep.mubr.bf16.mxu0 0
        %1420 = vmatmul.mubr.bf16.gmra.mrb[0].mxu0 %v1273
        %v1421 = vpop.f32.mrb[0].mxu0
        %v1422 = vadd.f32 %v1229, %v1421
        %v1423 = vpop.f32.mrb[0].mxu0
        %v1424 = vpop.f32.mrb[0].mxu0
        %v1425 = vadd.f32 %v1229, %v1424
        %v1426 = vpop.f32.mrb[0].mxu0
        %1427 = vmatprep.mubr.bf16.mxu0 0
        %1428 = vmatmul.mubr.bf16.gmra.mrb[0].mxu0 %v1275
        %v1429 = vpop.f32.mrb[0].mxu0
        %v1430 = vadd.f32 %v1229, %v1429
        %v1431 = vpop.f32.mrb[0].mxu0
        %v1432 = vpop.f32.mrb[0].mxu0
        %v1433 = vadd.f32 %v1229, %v1432
        %v1434 = vpop.f32.mrb[0].mxu0
        %1435 = vmatprep.mubr.bf16.mxu0 0
        %1436 = vmatmul.mubr.bf16.gmra.mrb[0].mxu0 %v1277
        %v1437 = vpop.f32.mrb[0].mxu0
        %v1438 = vadd.f32 %v1229, %v1437
        %v1439 = vpop.f32.mrb[0].mxu0
        %v1440 = vpop.f32.mrb[0].mxu0
        %v1441 = vadd.f32 %v1229, %v1440
        %v1442 = vpop.f32.mrb[0].mxu0
        %1443 = vdwg.mxu0
        %v1444 = vsub.f32 0.0, %v1318
        %v1445 = vsub.f32 0.0, %v1321
        %v1446 = vsub.f32 0.0, %v1326
        %v1447 = vsub.f32 0.0, %v1329
        %v1448 = vsub.f32 0.0, %v1334
        %v1449 = vsub.f32 0.0, %v1337
        %v1450 = vsub.f32 0.0, %v1342
        %v1451 = vsub.f32 0.0, %v1345
        %v1452 = vsub.f32 0.0, %v1350
        %v1453 = vsub.f32 0.0, %v1353
        %v1454 = vsub.f32 0.0, %v1358
        %v1455 = vsub.f32 0.0, %v1361
        %v1456 = vsub.f32 0.0, %v1366
        %v1457 = vsub.f32 0.0, %v1369
        %v1458 = vsub.f32 0.0, %v1374
        %v1459 = vsub.f32 0.0, %v1377
        %v1460 = vsub.f32 0.0, %v1382
        %v1461 = vsub.f32 0.0, %v1385
        %v1462 = vsub.f32 0.0, %v1390
        %v1463 = vsub.f32 0.0, %v1393
        %v1464 = vsub.f32 0.0, %v1398
        %v1465 = vsub.f32 0.0, %v1401
        %v1466 = vsub.f32 0.0, %v1406
        %v1467 = vsub.f32 0.0, %v1409
        %v1468 = vsub.f32 0.0, %v1414
        %v1469 = vsub.f32 0.0, %v1417
        %v1470 = vsub.f32 0.0, %v1422
        %v1471 = vsub.f32 0.0, %v1425
        %v1472 = vsub.f32 0.0, %v1430
        %v1473 = vsub.f32 0.0, %v1433
        %v1474 = vsub.f32 0.0, %v1438
        %v1475 = vsub.f32 0.0, %v1441
        %v1476 = vmul.f32 %v1444, 1.442695
        %v1477 = vpow.pop %v1476
        %v1478 = vmul.f32 %v1445, 1.442695
        %v1479 = vpow.pop %v1478
        %v1480 = vmul.f32 %v1446, 1.442695
        %v1481 = vpow.pop %v1480
        %v1482 = vmul.f32 %v1447, 1.442695
        %v1483 = vpow.pop %v1482
        %v1484 = vmul.f32 %v1448, 1.442695
        %v1485 = vpow.pop %v1484
        %v1486 = vmul.f32 %v1449, 1.442695
        %v1487 = vpow.pop %v1486
        %v1488 = vmul.f32 %v1450, 1.442695
        %v1489 = vpow.pop %v1488
        %v1490 = vmul.f32 %v1451, 1.442695
        %v1491 = vpow.pop %v1490
        %v1492 = vmul.f32 %v1452, 1.442695
        %v1493 = vpow.pop %v1492
        %v1494 = vmul.f32 %v1453, 1.442695
        %v1495 = vpow.pop %v1494
        %v1496 = vmul.f32 %v1454, 1.442695
        %v1497 = vpow.pop %v1496
        %v1498 = vmul.f32 %v1455, 1.442695
        %v1499 = vpow.pop %v1498
        %v1500 = vmul.f32 %v1456, 1.442695
        %v1501 = vpow.pop %v1500
        %v1502 = vmul.f32 %v1457, 1.442695
        %v1503 = vpow.pop %v1502
        %v1504 = vmul.f32 %v1458, 1.442695
        %v1505 = vpow.pop %v1504
        %v1506 = vmul.f32 %v1459, 1.442695
        %v1507 = vpow.pop %v1506
        %v1508 = vmul.f32 %v1460, 1.442695
        %v1509 = vpow.pop %v1508
        %v1510 = vmul.f32 %v1461, 1.442695
        %v1511 = vpow.pop %v1510
        %v1512 = vmul.f32 %v1462, 1.442695
        %v1513 = vpow.pop %v1512
        %v1514 = vmul.f32 %v1463, 1.442695
        %v1515 = vpow.pop %v1514
        %v1516 = vmul.f32 %v1464, 1.442695
        %v1517 = vpow.pop %v1516
        %v1518 = vmul.f32 %v1465, 1.442695
        %v1519 = vpow.pop %v1518
        %v1520 = vmul.f32 %v1466, 1.442695
        %v1521 = vpow.pop %v1520
        %v1522 = vmul.f32 %v1467, 1.442695
        %v1523 = vpow.pop %v1522
        %v1524 = vmul.f32 %v1468, 1.442695
        %v1525 = vpow.pop %v1524
        %v1526 = vmul.f32 %v1469, 1.442695
        %v1527 = vpow.pop %v1526
        %v1528 = vmul.f32 %v1470, 1.442695
        %v1529 = vpow.pop %v1528
        %v1530 = vmul.f32 %v1471, 1.442695
        %v1531 = vpow.pop %v1530
        %v1532 = vmul.f32 %v1472, 1.442695
        %v1533 = vpow.pop %v1532
        %v1534 = vmul.f32 %v1473, 1.442695
        %v1535 = vpow.pop %v1534
        %v1536 = vmul.f32 %v1474, 1.442695
        %v1537 = vpow.pop %v1536
        %v1538 = vmul.f32 %v1475, 1.442695
        %v1539 = vpow.pop %v1538
        %v1540 = vadd.f32 %v1477, 1.0
        %v1541 = vadd.f32 %v1479, 1.0
        %v1542 = vadd.f32 %v1481, 1.0
        %v1543 = vadd.f32 %v1483, 1.0
        %v1544 = vadd.f32 %v1485, 1.0
        %v1545 = vadd.f32 %v1487, 1.0
        %v1546 = vadd.f32 %v1489, 1.0
        %v1547 = vadd.f32 %v1491, 1.0
        %v1548 = vadd.f32 %v1493, 1.0
        %v1549 = vadd.f32 %v1495, 1.0
        %v1550 = vadd.f32 %v1497, 1.0
        %v1551 = vadd.f32 %v1499, 1.0
        %v1552 = vadd.f32 %v1501, 1.0
        %v1553 = vadd.f32 %v1503, 1.0
        %v1554 = vadd.f32 %v1505, 1.0
        %v1555 = vadd.f32 %v1507, 1.0
        %v1556 = vadd.f32 %v1509, 1.0
        %v1557 = vadd.f32 %v1511, 1.0
        %v1558 = vadd.f32 %v1513, 1.0
        %v1559 = vadd.f32 %v1515, 1.0
        %v1560 = vadd.f32 %v1517, 1.0
        %v1561 = vadd.f32 %v1519, 1.0
        %v1562 = vadd.f32 %v1521, 1.0
        %v1563 = vadd.f32 %v1523, 1.0
        %v1564 = vadd.f32 %v1525, 1.0
        %v1565 = vadd.f32 %v1527, 1.0
        %v1566 = vadd.f32 %v1529, 1.0
        %v1567 = vadd.f32 %v1531, 1.0
        %v1568 = vadd.f32 %v1533, 1.0
        %v1569 = vadd.f32 %v1535, 1.0
        %v1570 = vadd.f32 %v1537, 1.0
        %v1571 = vadd.f32 %v1539, 1.0
        %v1572 = vrcp.pop %v1540
        %v1573 = vrcp.pop %v1541
        %v1574 = vrcp.pop %v1542
        %v1575 = vrcp.pop %v1543
        %v1576 = vrcp.pop %v1544
        %v1577 = vrcp.pop %v1545
        %v1578 = vrcp.pop %v1546
        %v1579 = vrcp.pop %v1547
        %v1580 = vrcp.pop %v1548
        %v1581 = vrcp.pop %v1549
        %v1582 = vrcp.pop %v1550
        %v1583 = vrcp.pop %v1551
        %v1584 = vrcp.pop %v1552
        %v1585 = vrcp.pop %v1553
        %v1586 = vrcp.pop %v1554
        %v1587 = vrcp.pop %v1555
        %v1588 = vrcp.pop %v1556
        %v1589 = vrcp.pop %v1557
        %v1590 = vrcp.pop %v1558
        %v1591 = vrcp.pop %v1559
        %v1592 = vrcp.pop %v1560
        %v1593 = vrcp.pop %v1561
        %v1594 = vrcp.pop %v1562
        %v1595 = vrcp.pop %v1563
        %v1596 = vrcp.pop %v1564
        %v1597 = vrcp.pop %v1565
        %v1598 = vrcp.pop %v1566
        %v1599 = vrcp.pop %v1567
        %v1600 = vrcp.pop %v1568
        %v1601 = vrcp.pop %v1569
        %v1602 = vrcp.pop %v1570
        %v1603 = vrcp.pop %v1571
        %v1604 = vmul.f32 %v1318, %v1572
        %v1605 = vmul.f32 %v1321, %v1573
        %v1606 = vmul.f32 %v1326, %v1574
        %v1607 = vmul.f32 %v1329, %v1575
        %v1608 = vmul.f32 %v1334, %v1576
        %v1609 = vmul.f32 %v1337, %v1577
        %v1610 = vmul.f32 %v1342, %v1578
        %v1611 = vmul.f32 %v1345, %v1579
        %v1612 = vmul.f32 %v1350, %v1580
        %v1613 = vmul.f32 %v1353, %v1581
        %v1614 = vmul.f32 %v1358, %v1582
        %v1615 = vmul.f32 %v1361, %v1583
        %v1616 = vmul.f32 %v1366, %v1584
        %v1617 = vmul.f32 %v1369, %v1585
        %v1618 = vmul.f32 %v1374, %v1586
        %v1619 = vmul.f32 %v1377, %v1587
        %v1620 = vmul.f32 %v1382, %v1588
        %v1621 = vmul.f32 %v1385, %v1589
        %v1622 = vmul.f32 %v1390, %v1590
        %v1623 = vmul.f32 %v1393, %v1591
        %v1624 = vmul.f32 %v1398, %v1592
        %v1625 = vmul.f32 %v1401, %v1593
        %v1626 = vmul.f32 %v1406, %v1594
        %v1627 = vmul.f32 %v1409, %v1595
        %v1628 = vmul.f32 %v1414, %v1596
        %v1629 = vmul.f32 %v1417, %v1597
        %v1630 = vmul.f32 %v1422, %v1598
        %v1631 = vmul.f32 %v1425, %v1599
        %v1632 = vmul.f32 %v1430, %v1600
        %v1633 = vmul.f32 %v1433, %v1601
        %v1634 = vmul.f32 %v1438, %v1602
        %v1635 = vmul.f32 %v1441, %v1603
        %v1636 = vpack.c.bf16 %v1605, %v1604
        %v1637 = vpack.c.bf16 %v1607, %v1606
        %v1638 = vpack.c.bf16 %v1609, %v1608
        %v1639 = vpack.c.bf16 %v1611, %v1610
        %v1640 = vpack.c.bf16 %v1613, %v1612
        %v1641 = vpack.c.bf16 %v1615, %v1614
        %v1642 = vpack.c.bf16 %v1617, %v1616
        %v1643 = vpack.c.bf16 %v1619, %v1618
        %v1644 = vpack.c.bf16 %v1621, %v1620
        %v1645 = vpack.c.bf16 %v1623, %v1622
        %v1646 = vpack.c.bf16 %v1625, %v1624
        %v1647 = vpack.c.bf16 %v1627, %v1626
        %v1648 = vpack.c.bf16 %v1629, %v1628
        %v1649 = vpack.c.bf16 %v1631, %v1630
        %v1650 = vpack.c.bf16 %v1633, %v1632
        %v1651 = vpack.c.bf16 %v1635, %v1634
        %v1668 = vunpack.c.l.b16 %v1636
        %v1669 = vunpack.c.h.b16 %v1636
        %v1670 = vunpack.c.l.b16 %v1637
        %v1671 = vunpack.c.h.b16 %v1637
        %v1672 = vunpack.c.l.b16 %v1638
        %v1673 = vunpack.c.h.b16 %v1638
        %v1674 = vunpack.c.l.b16 %v1639
        %v1675 = vunpack.c.h.b16 %v1639
        %v1676 = vunpack.c.l.b16 %v1640
        %v1677 = vunpack.c.h.b16 %v1640
        %v1678 = vunpack.c.l.b16 %v1641
        %v1679 = vunpack.c.h.b16 %v1641
        %v1680 = vunpack.c.l.b16 %v1642
        %v1681 = vunpack.c.h.b16 %v1642
        %v1682 = vunpack.c.l.b16 %v1643
        %v1683 = vunpack.c.h.b16 %v1643
        %v1684 = vunpack.c.l.b16 %v1644
        %v1685 = vunpack.c.h.b16 %v1644
        %v1686 = vunpack.c.l.b16 %v1645
        %v1687 = vunpack.c.h.b16 %v1645
        %v1688 = vunpack.c.l.b16 %v1646
        %v1689 = vunpack.c.h.b16 %v1646
        %v1690 = vunpack.c.l.b16 %v1647
        %v1691 = vunpack.c.h.b16 %v1647
        %v1692 = vunpack.c.l.b16 %v1648
        %v1693 = vunpack.c.h.b16 %v1648
        %v1694 = vunpack.c.l.b16 %v1649
        %v1695 = vunpack.c.h.b16 %v1649
        %v1696 = vunpack.c.l.b16 %v1650
        %v1697 = vunpack.c.h.b16 %v1650
        %v1698 = vunpack.c.l.b16 %v1651
        %v1699 = vunpack.c.h.b16 %v1651
        %v1700 = vpack.c.b16 %v1668, %v1668
        %v1701 = vpack.c.b16 %v1669, %v1669
        %v1702 = vpack.c.b16 %v1670, %v1670
        %v1703 = vpack.c.b16 %v1671, %v1671
        %v1704 = vpack.c.b16 %v1672, %v1672
        %v1705 = vpack.c.b16 %v1673, %v1673
        %v1706 = vpack.c.b16 %v1674, %v1674
        %v1707 = vpack.c.b16 %v1675, %v1675
        %v1708 = vpack.c.b16 %v1676, %v1676
        %v1709 = vpack.c.b16 %v1677, %v1677
        %v1710 = vpack.c.b16 %v1678, %v1678
        %v1711 = vpack.c.b16 %v1679, %v1679
        %v1712 = vpack.c.b16 %v1680, %v1680
        %v1713 = vpack.c.b16 %v1681, %v1681
        %v1714 = vpack.c.b16 %v1682, %v1682
        %v1715 = vpack.c.b16 %v1683, %v1683
        %v1716 = vpack.c.b16 %v1684, %v1684
        %v1717 = vpack.c.b16 %v1685, %v1685
        %v1718 = vpack.c.b16 %v1686, %v1686
        %v1719 = vpack.c.b16 %v1687, %v1687
        %v1720 = vpack.c.b16 %v1688, %v1688
        %v1721 = vpack.c.b16 %v1689, %v1689
        %v1722 = vpack.c.b16 %v1690, %v1690
        %v1723 = vpack.c.b16 %v1691, %v1691
        %v1724 = vpack.c.b16 %v1692, %v1692
        %v1725 = vpack.c.b16 %v1693, %v1693
        %v1726 = vpack.c.b16 %v1694, %v1694
        %v1727 = vpack.c.b16 %v1695, %v1695
        %v1728 = vpack.c.b16 %v1696, %v1696
        %v1729 = vpack.c.b16 %v1697, %v1697
        %v1730 = vpack.c.b16 %v1698, %v1698
        %v1731 = vpack.c.b16 %v1699, %v1699
        %1764 = vst [vmem:[%s210] sm:$0xf] %v1700
        %1765 = vst [vmem:[%s210 + $0x4] sm:$0xf] %v1701
        %1766 = vst [vmem:[%s210 + $0x8] sm:$0xf] %v1702
        %1767 = vst [vmem:[%s210 + $0xc] sm:$0xf] %v1703
        %1768 = vst [vmem:[%s210 + $0x10] sm:$0xf] %v1704
        %1769 = vst [vmem:[%s210 + $0x14] sm:$0xf] %v1705
        %1770 = vst [vmem:[%s210 + $0x18] sm:$0xf] %v1706
        %1771 = vst [vmem:[%s210 + $0x1c] sm:$0xf] %v1707
        %1772 = vst [vmem:[%s210 + $0x20] sm:$0xf] %v1708
        %1773 = vst [vmem:[%s210 + $0x24] sm:$0xf] %v1709
        %1774 = vst [vmem:[%s210 + $0x28] sm:$0xf] %v1710
        %1775 = vst [vmem:[%s210 + $0x2c] sm:$0xf] %v1711
        %1776 = vst [vmem:[%s210 + $0x30] sm:$0xf] %v1712
        %1777 = vst [vmem:[%s210 + $0x34] sm:$0xf] %v1713
        %1778 = vst [vmem:[%s210 + $0x38] sm:$0xf] %v1714
        %1779 = vst [vmem:[%s210 + $0x3c] sm:$0xf] %v1715
        %1780 = vst [vmem:[%s210 + $0x40] sm:$0xf] %v1716
        %1781 = vst [vmem:[%s210 + $0x44] sm:$0xf] %v1717
        %1782 = vst [vmem:[%s210 + $0x48] sm:$0xf] %v1718
        %1783 = vst [vmem:[%s210 + $0x4c] sm:$0xf] %v1719
        %1784 = vst [vmem:[%s210 + $0x50] sm:$0xf] %v1720
        %1785 = vst [vmem:[%s210 + $0x54] sm:$0xf] %v1721
        %1786 = vst [vmem:[%s210 + $0x58] sm:$0xf] %v1722
        %1787 = vst [vmem:[%s210 + $0x5c] sm:$0xf] %v1723
        %1788 = vst [vmem:[%s210 + $0x60] sm:$0xf] %v1724
        %1789 = vst [vmem:[%s210 + $0x64] sm:$0xf] %v1725
        %1790 = vst [vmem:[%s210 + $0x68] sm:$0xf] %v1726
        %1791 = vst [vmem:[%s210 + $0x6c] sm:$0xf] %v1727
        %1792 = vst [vmem:[%s210 + $0x70] sm:$0xf] %v1728
        %1793 = vst [vmem:[%s210 + $0x74] sm:$0xf] %v1729
        %1794 = vst [vmem:[%s210 + $0x78] sm:$0xf] %v1730
        %1795 = vst [vmem:[%s210 + $0x7c] sm:$0xf] %v1731
        %s1796 = sand.u32 %s126, 1
        %s1797 = scalar_lea.sflag [#allocation3], %s1796
        %s1798 = sand.u32 %s126, 1
        %s1799 = smul.addr %s1798, 128
        %s1800 = scalar_lea.vmem [#allocation2], %s1799
        // Predicated region
        $region33: #{tpu_custom_call.1} parent=31 // pred_check
          %p1801 = pneg %p136
        $region34: #{tpu_custom_call.1} parent=31 // pred_check_branch
          %1803 = sbr.rel (%p1801) target = $region36
        $region35: #{tpu_custom_call.1} parent=31 // pred_region
          %s1804 = smul.u32 16, %s24
          %s1806 = ssub.s32 2048, 2048
          %1807 = vsyncadd %s1797, %s1806
          %s1808 = smul.addr %s1804, 2
          %s1809 = sadd.s32 %s23, %s1808
          %s1810 = smul.addr %s22, 32
          %s1811 = sadd.s32 %s1809, %s1810
          %s1812 = smul.addr %s1811, 64
          %s1813 = scalar_lea.hbm %s3, %s1812
          %s1814 = sshll.u32 %s1800, 4
          %s1815 = int_to_ptr.vmem [resolvable:$true] %s1814
          %1820 = dma.vmem_to_hbm [thread:$0]  %s1815, 2048, %s1813, %s1797, 64, 64, 4
        $region36: #{tpu_custom_call.1} parent=31 // pred_fallthru
          _
      $region32: #{tpu_custom_call.1} parent=5 // pred_fallthru
        _
      %p1821 = scmp.le.s32.totalorder 2, %s12
      // Predicated region
      $region37: #{tpu_custom_call.1} parent=5 // pred_check
        %p1822 = pneg %p1821
      $region38: #{tpu_custom_call.1} parent=5 // pred_check_branch
        %1824 = sbr.rel (%p1822) target = $region40
      $region39: #{tpu_custom_call.1} parent=5 // pred_region
        %s1825 = ssub.s32 %s12, 2
        // Predicated region
        $region41: #{tpu_custom_call.1} parent=39 // pred_check
          %p1826 = pneg %p142
        $region42: #{tpu_custom_call.1} parent=39 // pred_check_branch
          %1828 = sbr.rel (%p1826) target = $region44
        $region43: #{tpu_custom_call.1} parent=39 // pred_region
          %s1829 = sand.u32 %s127, 1
          %s1830 = scalar_lea.sflag [#allocation3], %s1829
          %s1831 = sand.u32 %s127, 1
          %s1832 = smul.addr %s1831, 128
          %s1833 = scalar_lea.vmem [#allocation2], %s1832
          %1834 = dma.done %s1830, 2048
        $region44: #{tpu_custom_call.1} parent=39 // pred_fallthru
          _
      $region40: #{tpu_custom_call.1} parent=5 // pred_fallthru
        _
    $region6: #{tpu_custom_call.1} parent=1 // loop_footer
      %s16 = sadd.s32 1, %s12
    $region7: #{tpu_custom_call.1} parent=1 // loop_footer_branch
      %11 = sbr.rel target = $region3
    $region8: #{tpu_custom_call.1} parent=1 // loop_exit
      _
    %1835 = vsyncpa [#allocation3], 1
    %s1836 = scalar_lea.sflag [#allocation3], 1
    %1837 = vsyncpa %s1836, 1

</llo_original>
